<compile_context>
chip_gen: v7x
topology: tpu7x:2x2x1
jax: 0.10.0
libtpu: 0.0.40
codegen_flags: <defaults>
</compile_context>

<pallas_src>
import functools

import jax
import jax.numpy as jnp
from jax import lax
from jax.experimental import pallas as pl
from jax.experimental.pallas import tpu as pltpu

EPS = 1e-5      # nn.BatchNorm2d default eps
LANE = 128      # TPU lane width


def _ceil_to(x, m):
    return ((x + m - 1) // m) * m


def _vmem_capacity_bytes():
    """Per-core VMEM capacity; conservative (v7x) fallback if query fails."""
    try:
        info = pltpu.get_tpu_info()
        cap = getattr(info, "vmem_capacity_bytes", None)
        if cap:
            return int(cap)
    except Exception:
        pass
    return 64 * 1024 * 1024


# ----------------------------------------------------------------------------
# Fused Pallas kernel: cv1 (3x3 conv + bias + SiLU) -> cv2 (3x3 conv + bias +
# SiLU) [+ residual], one row tile per grid step.
# ----------------------------------------------------------------------------
def _fused_kernel(xm_ref, xh_ref, w1_ref, b1_ref, w2_ref, b2_ref, o_ref,
                  *, TH, Wo, Wh, H, W, add):
    # xm_ref: (1, TH,  Wx, Cp1) bf16   main rows of zero-padded x
    # xh_ref: (1, 4,   Wx, Cp1) bf16   4-row bottom halo
    # w1_ref: (9*Cp1, Cpm) bf16        im2col weight slab of cv1 (kh-major rows)
    # b1_ref: (1, Cpm) f32
    # w2_ref: (9*Cpm, Cp2) bf16        im2col weight slab of cv2
    # b2_ref: (1, Cp2) f32
    # o_ref : (1, TH, Wo, Cp2) bf16
    t = pl.program_id(1)
    Cp1 = xm_ref.shape[3]
    Cpm = w1_ref.shape[1]
    Cp2 = o_ref.shape[3]

    # Full x tile with a 2-row halo on each side (rows) and 2-col pad (cols).
    # Single small row-concat (1/9 of the slab-copy traffic); the big im2col
    # slabs below are built per kernel-row to keep VMEM low.
    x3 = jnp.concatenate([xm_ref[0], xh_ref[0]], axis=0)      # (TH+4, Wx, Cp1)

    # ---------------- stage 1: h = SiLU(conv3x3(x, K1) + B1) ----------------
    # Computed on a 1-pixel halo region of (TH+2) x Wh so cv2 needs no HBM
    # trip.  Three accumulate matmuls (one per kernel row kh): each slab is
    # only (RH1*RW1, 3*Cp1) and the matching weight-row slice starts at a
    # 128-aligned sublane offset (free static slice).
    RH1, RW1 = TH + 2, Wh
    acc1 = None
    for kh in range(3):
        slab = jnp.concatenate(
            [x3[kh:kh + RH1, kw:kw + RW1, :] for kw in range(3)], axis=-1)
        part = jnp.dot(slab.reshape(RH1 * RW1, 3 * Cp1),
                       w1_ref[pl.ds(kh * 3 * Cp1, 3 * Cp1), :],
                       preferred_element_type=jnp.float32)
        acc1 = part if acc1 is None else acc1 + part
    h = acc1 + b1_ref[...]
    h = h * jax.nn.sigmoid(h)                                 # SiLU (EUP)
    h3 = h.reshape(RH1, RW1, Cpm)

    # Zero h outside the valid image: that is what cv2's 'same' zero padding
    # expects at the tile borders / image borders / width padding.
    row = lax.broadcasted_iota(jnp.int32, (RH1, RW1, 1), 0) + (t * TH - 1)
    col = lax.broadcasted_iota(jnp.int32, (RH1, RW1, 1), 1) - 1
    valid = (row >= 0) & (row < H) & (col >= 0) & (col < W)
    h3 = jnp.where(valid, h3, 0.0).astype(jnp.bfloat16)

    # ------------- stage 2: y = SiLU(conv3x3(h, K2) + B2) (+ x) -------------
    acc2 = None
    for kh in range(3):
        slab = jnp.concatenate(
            [h3[kh:kh + TH, kw:kw + Wo, :] for kw in range(3)], axis=-1)
        part = jnp.dot(slab.reshape(TH * Wo, 3 * Cpm),
                       w2_ref[pl.ds(kh * 3 * Cpm, 3 * Cpm), :],
                       preferred_element_type=jnp.float32)
        acc2 = part if acc2 is None else acc2 + part
    y = acc2 + b2_ref[...]
    y = y * jax.nn.sigmoid(y)
    if add:
        res = x3[2:2 + TH, 2:2 + Wo, :].reshape(TH * Wo, Cp1)
        y = y + res.astype(jnp.float32)
    o_ref[0] = y.reshape(TH, Wo, Cp2).astype(o_ref.dtype)     # bf16 writeback


def _pack_weight_slab(k_oihw, cin_p, cout_p):
    """(O, I, 3, 3) f32 -> (9*cin_p, cout_p) bf16 im2col weight slab."""
    cout, cin, kh, kw = k_oihw.shape
    kp = jnp.pad(k_oihw, ((0, cout_p - cout), (0, cin_p - cin), (0, 0), (0, 0)))
    # (O, I, kh, kw) -> (kh, kw, I, O) -> (kh*kw*I, O): kh-major rows, matching
    # the per-kh slab lane order (kw-major, then input channel).
    return jnp.transpose(kp, (2, 3, 1, 0)).reshape(kh * kw * cin_p,
                                                   cout_p).astype(jnp.bfloat16)


def _auto_tile_rows(H, Wx, Wo, Wh, Cp1, Cpm, Cp2, vmem_cap):
    """Derive TH from a per-row VMEM budget (generation-aware)."""
    budget = int(vmem_cap * 0.55)
    # Grid-invariant costs: double-buffered weight slabs + biases + 4-row halo.
    fixed = 2 * 2 * (9 * Cp1 * Cpm + 9 * Cpm * Cp2) + 2 * 4 * (Cpm + Cp2)
    fixed += 2 * 2 * 4 * Wx * Cp1
    per_row = (
        2 * 2 * Wx * Cp1        # input main block, double-buffered bf16
        + 2 * 2 * Wo * Cp2      # output block, double-buffered bf16
        + 2 * Wx * Cp1          # x3 row-concat copy (bf16)
        + 2 * Wh * Cpm          # h3 (bf16)
        + 2 * Wh * 3 * Cp1      # stage-1 per-kh slab (bf16)
        + 4 * Wh * Cpm          # stage-1 f32 accumulator
        + 2 * Wo * 3 * Cpm      # stage-2 per-kh slab (bf16)
        + 4 * Wo * Cp2          # stage-2 f32 accumulator
    )
    th = (budget - fixed) // max(per_row, 1)
    th = int(max(4, min(256, th)))
    th = max(4, (th // 4) * 4)                    # halo block is 4 rows
    return min(th, _ceil_to(H, 4))


def fused_bottleneck_nhwc(x_nhwc, k1, b1, k2, b2, add, tile_rows=None):
    """x + SiLU(conv3(SiLU(conv3(x,k1)+b1), k2)+b2), one pallas_call, NHWC."""
    N, H, W, C1 = x_nhwc.shape
    Cm, cin1, KH, KW = k1.shape
    C2 = k2.shape[0]
    assert (KH, KW) == (3, 3) and cin1 == C1 and k2.shape[1] == Cm
    if add:
        assert C1 == C2

    Cp1 = _ceil_to(C1, LANE)
    Cpm = _ceil_to(Cm, LANE)
    Cp2 = _ceil_to(C2, LANE)

    Wo = _ceil_to(W, 8)                  # output tile width  (8-aligned)
    Wh = Wo + 8                          # h-halo width       (8-aligned)
    Wx = Wh + 2                          # x tile width

    vmem_cap = _vmem_capacity_bytes()
    if tile_rows is None:
        tile_rows = _auto_tile_rows(H, Wx, Wo, Wh, Cp1, Cpm, Cp2, vmem_cap)
    TH = max(4, _ceil_to(tile_rows, 4))
    TH = min(TH, _ceil_to(H, 4))
    Ht = _ceil_to(H, TH)                 # tileable (padded) output height

    # Zero-pad rows/cols/channels; bf16 activations for the MXU.
    x = jnp.pad(x_nhwc, ((0, 0), (2, Ht - H + 2), (2, Wx - W - 2),
                         (0, Cp1 - C1)))
    x = x.astype(jnp.bfloat16)                                # (N, Ht+4, Wx, Cp1)

    w1s = _pack_weight_slab(k1, Cp1, Cpm)                     # (9*Cp1, Cpm)
    w2s = _pack_weight_slab(k2, Cpm, Cp2)                     # (9*Cpm, Cp2)
    b1p = jnp.pad(b1, (0, Cpm - Cm)).reshape(1, Cpm).astype(jnp.float32)
    b2p = jnp.pad(b2, (0, Cp2 - C2)).reshape(1, Cp2).astype(jnp.float32)

    kernel = functools.partial(_fused_kernel, TH=TH, Wo=Wo, Wh=Wh,
                               H=H, W=W, add=add)
    grid = (N, Ht // TH)

    flops = 2 * 9 * N * H * W * (C1 * Cm + Cm * C2)
    transcendentals = N * H * W * (Cm + C2)
    bytes_accessed = (x.size * 2 + N * Ht * Wo * Cp2 * 2
                      + (w1s.size + w2s.size) * 2 + (b1p.size + b2p.size) * 4)

    out = pl.pallas_call(
        kernel,
        out_shape=jax.ShapeDtypeStruct((N, Ht, Wo, Cp2), jnp.bfloat16),
        grid_spec=pltpu.PrefetchScalarGridSpec(
            num_scalar_prefetch=0,
            grid=grid,
            in_specs=[
                # main TH rows of the padded image
                pl.BlockSpec((1, TH, Wx, Cp1), lambda n, t: (n, t, 0, 0)),
                # 4-row bottom halo (second view of the same array)
                pl.BlockSpec((1, 4, Wx, Cp1),
                             lambda n, t: (n, (t + 1) * (TH // 4), 0, 0)),
                pl.BlockSpec((9 * Cp1, Cpm), lambda n, t: (0, 0)),
                pl.BlockSpec((1, Cpm), lambda n, t: (0, 0)),
                pl.BlockSpec((9 * Cpm, Cp2), lambda n, t: (0, 0)),
                pl.BlockSpec((1, Cp2), lambda n, t: (0, 0)),
            ],
            out_specs=pl.BlockSpec((1, TH, Wo, Cp2), lambda n, t: (n, t, 0, 0)),
        ),
        compiler_params=pltpu.CompilerParams(
            dimension_semantics=("parallel", "parallel"),
            vmem_limit_bytes=min(int(vmem_cap * 0.85), 112 * 1024 * 1024)),
        cost_estimate=pl.CostEstimate(flops=flops,
                                      transcendentals=transcendentals,
                                      bytes_accessed=bytes_accessed),
    )(x, x, w1s, b1p, w2s, b2p)

    # TODO(synk): in a fused network the padded NHWC output would be consumed
    # directly by the next layer; this slice only presents the exact result.
    return out[:, :H, :W, :C2]


def fused_bottleneck_call(x_nchw, k1, b1, k2, b2, add, tile_rows=None):
    """NCHW wrapper around the NHWC fused kernel (matches the PyTorch module).

    TODO(synk): when chaining layers keep activations in NHWC and call
    fused_bottleneck_nhwc directly to avoid these two extra HBM passes.
    """
    x = jnp.transpose(x_nchw, (0, 2, 3, 1))
    out = fused_bottleneck_nhwc(x, k1, b1, k2, b2, add, tile_rows=tile_rows)
    return jnp.transpose(out, (0, 3, 1, 2))


# ----------------------------------------------------------------------------
# DiverseBranchBlock parameter init + exact branch fusion glue (plain JAX on
# the tiny weight tensors -- mirrors transI..transVI of the PyTorch module).
# ----------------------------------------------------------------------------
def _init_bn(key, n):
    k1, k2, k3, k4 = jax.random.split(key, 4)
    return dict(
        gamma=jax.random.uniform(k1, (n,), jnp.float32, 0.5, 1.5),
        beta=jax.random.normal(k2, (n,), jnp.float32) * 0.1,
        mean=jax.random.normal(k3, (n,), jnp.float32) * 0.1,
        var=jax.random.uniform(k4, (n,), jnp.float32, 0.5, 1.5),
    )


def init_dbb_params(key, c_in, c_out, K=3):
    """Shapes follow DiverseBranchBlock(c_in, c_out, K, stride=1, groups=1)."""
    ks = jax.random.split(key, 10)
    return dict(
        w_origin=jax.random.normal(ks[0], (c_out, c_in, K, K), jnp.float32) * 0.1,
        bn_origin=_init_bn(ks[1], c_out),
        w_1x1=jax.random.normal(ks[2], (c_out, c_in, 1, 1), jnp.float32) * 0.1,
        bn_1x1=_init_bn(ks[3], c_out),
        w_avg_conv=jax.random.normal(ks[4], (c_out, c_in, 1, 1), jnp.float32) * 0.1,
        bn_avg_conv=_init_bn(ks[5], c_out),           # BNAndPadLayer BN
        bn_avg=_init_bn(ks[6], c_out),                # avgbn
        bn1_kxk=_init_bn(ks[7], c_in),                # idconv1 weight==0 -> identity
        w_kxk2=jax.random.normal(ks[8], (c_out, c_in, K, K), jnp.float32) * 0.1,
        bn2_kxk=_init_bn(ks[9], c_out),
    )


def _fuse_bn(kernel, bn):                              # transI_fusebn
    std = jnp.sqrt(bn['var'] + EPS)
    t = bn['gamma'] / std
    return kernel * t[:, None, None, None], bn['beta'] - bn['mean'] * t


def _trans_iii(k1, b1, k2, b2):                        # transIII_1x1_kxk, g=1
    k = jnp.einsum('omhw,mi->oihw', k2, k1[:, :, 0, 0])
    b_hat = jnp.einsum('omhw,m->o', k2, b1)
    return k, b_hat + b2


def dbb_equivalent_kernel_bias(p, c_in, c_out, K=3):
    pad = K // 2
    # origin branch
    k_origin, b_origin = _fuse_bn(p['w_origin'], p['bn_origin'])
    # 1x1 branch (groups < out_channels)
    k_1x1, b_1x1 = _fuse_bn(p['w_1x1'], p['bn_1x1'])
    k_1x1 = jnp.pad(k_1x1, ((0, 0), (0, 0), (pad, pad), (pad, pad)))  # transVI
    # 1x1 -> kxk branch (IdentityBasedConv1x1 with zero weight -> identity 1x1)
    ident = jnp.eye(c_in, dtype=jnp.float32).reshape(c_in, c_in, 1, 1)
    k1, b1 = _fuse_bn(ident, p['bn1_kxk'])
    k2, b2 = _fuse_bn(p['w_kxk2'], p['bn2_kxk'])
    k_kxk, b_kxk = _trans_iii(k1, b1, k2, b2)
    # avg branch: 1x1 conv + BN(+pad) + avgpool(as conv) + BN   (transV_avg)
    k_avg = jnp.zeros((c_out, c_out, K, K), jnp.float32).at[
        jnp.arange(c_out), jnp.arange(c_out)].set(1.0 / (K * K))
    k2a, b2a = _fuse_bn(k_avg, p['bn_avg'])
    k1a, b1a = _fuse_bn(p['w_avg_conv'], p['bn_avg_conv'])
    k_avgm, b_avgm = _trans_iii(k1a, b1a, k2a, b2a)
    # transII_addbranch
    return (k_origin + k_1x1 + k_kxk + k_avgm,
            b_origin + b_1x1 + b_kxk + b_avgm)


# ----------------------------------------------------------------------------
# Bottleneck_DBB forward.
# ----------------------------------------------------------------------------
def bottleneck_dbb_forward(x_nchw, p_cv1, p_cv2, c1, c2, shortcut=True, e=0.5,
                           tile_rows=None):
    c_ = int(c2 * e)
    add = shortcut and (c1 == c2)
    K1, B1 = dbb_equivalent_kernel_bias(p_cv1, c1, c_)
    K2, B2 = dbb_equivalent_kernel_bias(p_cv2, c_, c2)
    return fused_bottleneck_call(x_nchw, K1, B1, K2, B2, add,
                                 tile_rows=tile_rows)


if __name__ == "__main__":
    key = jax.random.PRNGKey(0)
    c1 = c2 = 4
    N, H, W = 2, 16, 16
    e = 0.5
    c_ = int(c2 * e)
    kx, kp1, kp2 = jax.random.split(key, 3)

    x_nchw = jax.random.normal(kx, (N, c1, H, W), jnp.float32)
    p_cv1 = init_dbb_params(kp1, c1, c_)
    p_cv2 = init_dbb_params(kp2, c_, c2)

    # tile_rows=8 -> 2 row tiles per image, exercising the halo/mask path.
    out = bottleneck_dbb_forward(x_nchw, p_cv1, p_cv2, c1, c2, shortcut=True,
                                 e=e, tile_rows=8)
    out = jax.block_until_ready(out)
    assert out.shape == (N, c2, H, W)

    # Pure-JAX reference at matched precision (bf16 matmul feeds, f32 accum,
    # bf16 intermediate, bf16 residual, bf16 output) to validate the fused
    # Pallas path.
    K1, B1 = dbb_equivalent_kernel_bias(p_cv1, c1, c_)
    K2, B2 = dbb_equivalent_kernel_bias(p_cv2, c_, c2)

    def ref_conv_silu(xn, w, b):
        y = lax.conv_general_dilated(
            xn.astype(jnp.bfloat16), w.astype(jnp.bfloat16), (1, 1),
            ((1, 1), (1, 1)), dimension_numbers=('NCHW', 'OIHW', 'NCHW'),
            preferred_element_type=jnp.float32)
        y = y + b[None, :, None, None]
        return y * jax.nn.sigmoid(y)

    xb = x_nchw.astype(jnp.bfloat16).astype(jnp.float32)
    h_ref = ref_conv_silu(x_nchw, K1, B1).astype(jnp.bfloat16).astype(jnp.float32)
    out_ref = (ref_conv_silu(h_ref, K2, B2) + xb).astype(jnp.bfloat16)
    out_ref = out_ref.astype(jnp.float32)

    assert jnp.allclose(out.astype(jnp.float32), out_ref,
                        atol=3e-2, rtol=3e-2), "Pallas/ref mismatch"

    print("KERNEL_OK")
</pallas_src>

<mosaic_0001>
module attributes {stable_mosaic.version = 11 : i64} {
  func.func @_fused_kernel(%arg0: i32, %arg1: i32, %arg2: memref<1x8x26x128xbf16, #tpu.memory_space<vmem>>, %arg3: memref<1x4x26x128xbf16, #tpu.memory_space<vmem>>, %arg4: memref<1152x128xbf16, #tpu.memory_space<vmem>>, %arg5: memref<1x128xf32, #tpu.memory_space<vmem>>, %arg6: memref<1152x128xbf16, #tpu.memory_space<vmem>>, %arg7: memref<1x128xf32, #tpu.memory_space<vmem>>, %arg8: memref<1x8x16x128xbf16, #tpu.memory_space<vmem>>) attributes {dimension_semantics = [#tpu.dimension_semantics<parallel>, #tpu.dimension_semantics<parallel>], iteration_bounds = array<i64: 2, 2>, scalar_prefetch = 0 : i64, scratch_operands = 0 : i64, tpu.core_type = #tpu.core_type<tc>, window_params = [{transform_indices = @transform_0, window_bounds = array<i64: 1, 8, 26, 128>}, {transform_indices = @transform_1, window_bounds = array<i64: 1, 4, 26, 128>}, {pipeline_mode = #tpu.pipeline_mode<synchronous>, transform_indices = @transform_2, window_bounds = array<i64: 1152, 128>}, {pipeline_mode = #tpu.pipeline_mode<synchronous>, transform_indices = @transform_3, window_bounds = array<i64: 1, 128>}, {pipeline_mode = #tpu.pipeline_mode<synchronous>, transform_indices = @transform_4, window_bounds = array<i64: 1152, 128>}, {pipeline_mode = #tpu.pipeline_mode<synchronous>, transform_indices = @transform_5, window_bounds = array<i64: 1, 128>}, {transform_indices = @transform_6, window_bounds = array<i64: 1, 8, 16, 128>}]} {
    %c0 = arith.constant 0 : index
    %c0_0 = arith.constant 0 : index
    %c0_1 = arith.constant 0 : index
    %c0_2 = arith.constant 0 : index
    %0 = vector.load %arg2[%c0, %c0_0, %c0_1, %c0_2] : memref<1x8x26x128xbf16, #tpu.memory_space<vmem>>, vector<1x8x26x128xbf16>
    %1 = vector.shape_cast %0 : vector<1x8x26x128xbf16> to vector<8x26x128xbf16>
    %c0_3 = arith.constant 0 : index
    %c0_4 = arith.constant 0 : index
    %c0_5 = arith.constant 0 : index
    %c0_6 = arith.constant 0 : index
    %2 = vector.load %arg3[%c0_3, %c0_4, %c0_5, %c0_6] : memref<1x4x26x128xbf16, #tpu.memory_space<vmem>>, vector<1x4x26x128xbf16>
    %3 = vector.shape_cast %2 : vector<1x4x26x128xbf16> to vector<4x26x128xbf16>
    %4 = tpu.concatenate %1, %3 in 0 : vector<8x26x128xbf16>, vector<4x26x128xbf16> -> vector<12x26x128xbf16>
    %5 = vector.extract_strided_slice %4 {offsets = [0, 0, 0], sizes = [10, 24, 128], strides = [1, 1, 1]} : vector<12x26x128xbf16> to vector<10x24x128xbf16>
    %6 = vector.extract_strided_slice %4 {offsets = [0, 1, 0], sizes = [10, 24, 128], strides = [1, 1, 1]} : vector<12x26x128xbf16> to vector<10x24x128xbf16>
    %7 = vector.extract_strided_slice %4 {offsets = [0, 2, 0], sizes = [10, 24, 128], strides = [1, 1, 1]} : vector<12x26x128xbf16> to vector<10x24x128xbf16>
    %8 = tpu.concatenate %5, %6, %7 in 2 : vector<10x24x128xbf16>, vector<10x24x128xbf16>, vector<10x24x128xbf16> -> vector<10x24x384xbf16>
    %9 = vector.shape_cast %8 : vector<10x24x384xbf16> to vector<240x384xbf16>
    %c0_7 = arith.constant 0 : index
    %c0_8 = arith.constant 0 : index
    %10 = vector.load %arg4[%c0_7, %c0_8] : memref<1152x128xbf16, #tpu.memory_space<vmem>>, vector<384x128xbf16>
    %cst = arith.constant dense<0.000000e+00> : vector<240x128xf32>
    %11 = tpu.matmul %9, %10, %cst {dimension_numbers = #tpu.dot_dimension_numbers<[1], [0], [0], [1], [0, 0, 1, 1], [], []>} : vector<240x384xbf16>, vector<384x128xbf16>, vector<240x128xf32> -> vector<240x128xf32>
    %12 = vector.extract_strided_slice %4 {offsets = [1, 0, 0], sizes = [10, 24, 128], strides = [1, 1, 1]} : vector<12x26x128xbf16> to vector<10x24x128xbf16>
    %13 = vector.extract_strided_slice %4 {offsets = [1, 1, 0], sizes = [10, 24, 128], strides = [1, 1, 1]} : vector<12x26x128xbf16> to vector<10x24x128xbf16>
    %14 = vector.extract_strided_slice %4 {offsets = [1, 2, 0], sizes = [10, 24, 128], strides = [1, 1, 1]} : vector<12x26x128xbf16> to vector<10x24x128xbf16>
    %15 = tpu.concatenate %12, %13, %14 in 2 : vector<10x24x128xbf16>, vector<10x24x128xbf16>, vector<10x24x128xbf16> -> vector<10x24x384xbf16>
    %16 = vector.shape_cast %15 : vector<10x24x384xbf16> to vector<240x384xbf16>
    %c384 = arith.constant 384 : index
    %c0_9 = arith.constant 0 : index
    %17 = vector.load %arg4[%c384, %c0_9] : memref<1152x128xbf16, #tpu.memory_space<vmem>>, vector<384x128xbf16>
    %cst_10 = arith.constant dense<0.000000e+00> : vector<240x128xf32>
    %18 = tpu.matmul %16, %17, %cst_10 {dimension_numbers = #tpu.dot_dimension_numbers<[1], [0], [0], [1], [0, 0, 1, 1], [], []>} : vector<240x384xbf16>, vector<384x128xbf16>, vector<240x128xf32> -> vector<240x128xf32>
    %19 = arith.addf %11, %18 : vector<240x128xf32>
    %20 = vector.extract_strided_slice %4 {offsets = [2, 0, 0], sizes = [10, 24, 128], strides = [1, 1, 1]} : vector<12x26x128xbf16> to vector<10x24x128xbf16>
    %21 = vector.extract_strided_slice %4 {offsets = [2, 1, 0], sizes = [10, 24, 128], strides = [1, 1, 1]} : vector<12x26x128xbf16> to vector<10x24x128xbf16>
    %22 = vector.extract_strided_slice %4 {offsets = [2, 2, 0], sizes = [10, 24, 128], strides = [1, 1, 1]} : vector<12x26x128xbf16> to vector<10x24x128xbf16>
    %23 = tpu.concatenate %20, %21, %22 in 2 : vector<10x24x128xbf16>, vector<10x24x128xbf16>, vector<10x24x128xbf16> -> vector<10x24x384xbf16>
    %24 = vector.shape_cast %23 : vector<10x24x384xbf16> to vector<240x384xbf16>
    %c768 = arith.constant 768 : index
    %c0_11 = arith.constant 0 : index
    %25 = vector.load %arg4[%c768, %c0_11] : memref<1152x128xbf16, #tpu.memory_space<vmem>>, vector<384x128xbf16>
    %cst_12 = arith.constant dense<0.000000e+00> : vector<240x128xf32>
    %26 = tpu.matmul %24, %25, %cst_12 {dimension_numbers = #tpu.dot_dimension_numbers<[1], [0], [0], [1], [0, 0, 1, 1], [], []>} : vector<240x384xbf16>, vector<384x128xbf16>, vector<240x128xf32> -> vector<240x128xf32>
    %27 = arith.addf %19, %26 : vector<240x128xf32>
    %c0_13 = arith.constant 0 : index
    %c0_14 = arith.constant 0 : index
    %28 = vector.load %arg5[%c0_13, %c0_14] : memref<1x128xf32, #tpu.memory_space<vmem>>, vector<1x128xf32>
    %29 = vector.broadcast %28 : vector<1x128xf32> to vector<240x128xf32>
    %30 = arith.addf %27, %29 : vector<240x128xf32>
    %31 = arith.negf %30 : vector<240x128xf32>
    %32 = math.exp %31 : vector<240x128xf32>
    %cst_15 = arith.constant 1.000000e+00 : f32
    %33 = vector.broadcast %cst_15 : f32 to vector<240x128xf32>
    %34 = arith.addf %33, %32 : vector<240x128xf32>
    %35 = arith.divf %33, %34 : vector<240x128xf32>
    %36 = arith.mulf %30, %35 : vector<240x128xf32>
    %37 = vector.shape_cast %36 : vector<240x128xf32> to vector<10x24x128xf32>
    %38 = tpu.iota {dimensions = array<i32: 0>} : vector<10x24x1xi32>
    %c8_i32 = arith.constant 8 : i32
    %39 = arith.muli %arg1, %c8_i32 : i32
    %c1_i32 = arith.constant 1 : i32
    %40 = arith.subi %39, %c1_i32 : i32
    %41 = vector.broadcast %40 : i32 to vector<10x24x1xi32>
    %42 = arith.addi %38, %41 : vector<10x24x1xi32>
    %43 = tpu.iota {dimensions = array<i32: 1>} : vector<10x24x1xi32>
    %c1_i32_16 = arith.constant 1 : i32
    %44 = vector.broadcast %c1_i32_16 : i32 to vector<10x24x1xi32>
    %45 = arith.subi %43, %44 : vector<10x24x1xi32>
    %c0_i32 = arith.constant 0 : i32
    %46 = vector.broadcast %c0_i32 : i32 to vector<10x24x1xi32>
    %47 = arith.cmpi sge, %42, %46 : vector<10x24x1xi32>
    %c16_i32 = arith.constant 16 : i32
    %48 = vector.broadcast %c16_i32 : i32 to vector<10x24x1xi32>
    %49 = arith.cmpi slt, %42, %48 : vector<10x24x1xi32>
    %50 = arith.andi %47, %49 : vector<10x24x1xi1>
    %c0_i32_17 = arith.constant 0 : i32
    %51 = vector.broadcast %c0_i32_17 : i32 to vector<10x24x1xi32>
    %52 = arith.cmpi sge, %45, %51 : vector<10x24x1xi32>
    %53 = arith.andi %50, %52 : vector<10x24x1xi1>
    %c16_i32_18 = arith.constant 16 : i32
    %54 = vector.broadcast %c16_i32_18 : i32 to vector<10x24x1xi32>
    %55 = arith.cmpi slt, %45, %54 : vector<10x24x1xi32>
    %56 = arith.andi %53, %55 : vector<10x24x1xi1>
    %cst_19 = arith.constant 0.000000e+00 : f32
    %57 = vector.shape_cast %56 : vector<10x24x1xi1> to vector<10x24x1xi1>
    %58 = vector.broadcast %57 : vector<10x24x1xi1> to vector<10x24x128xi1>
    %59 = vector.broadcast %cst_19 : f32 to vector<10x24x128xf32>
    %60 = arith.select %58, %37, %59 : vector<10x24x128xi1>, vector<10x24x128xf32>
    %61 = arith.truncf %60 : vector<10x24x128xf32> to vector<10x24x128xbf16>
    %62 = vector.extract_strided_slice %61 {offsets = [0, 0, 0], sizes = [8, 16, 128], strides = [1, 1, 1]} : vector<10x24x128xbf16> to vector<8x16x128xbf16>
    %63 = vector.extract_strided_slice %61 {offsets = [0, 1, 0], sizes = [8, 16, 128], strides = [1, 1, 1]} : vector<10x24x128xbf16> to vector<8x16x128xbf16>
    %64 = vector.extract_strided_slice %61 {offsets = [0, 2, 0], sizes = [8, 16, 128], strides = [1, 1, 1]} : vector<10x24x128xbf16> to vector<8x16x128xbf16>
    %65 = tpu.concatenate %62, %63, %64 in 2 : vector<8x16x128xbf16>, vector<8x16x128xbf16>, vector<8x16x128xbf16> -> vector<8x16x384xbf16>
    %66 = vector.shape_cast %65 : vector<8x16x384xbf16> to vector<128x384xbf16>
    %c0_20 = arith.constant 0 : index
    %c0_21 = arith.constant 0 : index
    %67 = vector.load %arg6[%c0_20, %c0_21] : memref<1152x128xbf16, #tpu.memory_space<vmem>>, vector<384x128xbf16>
    %cst_22 = arith.constant dense<0.000000e+00> : vector<128x128xf32>
    %68 = tpu.matmul %66, %67, %cst_22 {dimension_numbers = #tpu.dot_dimension_numbers<[1], [0], [0], [1], [0, 0, 1, 1], [], []>} : vector<128x384xbf16>, vector<384x128xbf16>, vector<128x128xf32> -> vector<128x128xf32>
    %69 = vector.extract_strided_slice %61 {offsets = [1, 0, 0], sizes = [8, 16, 128], strides = [1, 1, 1]} : vector<10x24x128xbf16> to vector<8x16x128xbf16>
    %70 = vector.extract_strided_slice %61 {offsets = [1, 1, 0], sizes = [8, 16, 128], strides = [1, 1, 1]} : vector<10x24x128xbf16> to vector<8x16x128xbf16>
    %71 = vector.extract_strided_slice %61 {offsets = [1, 2, 0], sizes = [8, 16, 128], strides = [1, 1, 1]} : vector<10x24x128xbf16> to vector<8x16x128xbf16>
    %72 = tpu.concatenate %69, %70, %71 in 2 : vector<8x16x128xbf16>, vector<8x16x128xbf16>, vector<8x16x128xbf16> -> vector<8x16x384xbf16>
    %73 = vector.shape_cast %72 : vector<8x16x384xbf16> to vector<128x384xbf16>
    %c384_23 = arith.constant 384 : index
    %c0_24 = arith.constant 0 : index
    %74 = vector.load %arg6[%c384_23, %c0_24] : memref<1152x128xbf16, #tpu.memory_space<vmem>>, vector<384x128xbf16>
    %cst_25 = arith.constant dense<0.000000e+00> : vector<128x128xf32>
    %75 = tpu.matmul %73, %74, %cst_25 {dimension_numbers = #tpu.dot_dimension_numbers<[1], [0], [0], [1], [0, 0, 1, 1], [], []>} : vector<128x384xbf16>, vector<384x128xbf16>, vector<128x128xf32> -> vector<128x128xf32>
    %76 = arith.addf %68, %75 : vector<128x128xf32>
    %77 = vector.extract_strided_slice %61 {offsets = [2, 0, 0], sizes = [8, 16, 128], strides = [1, 1, 1]} : vector<10x24x128xbf16> to vector<8x16x128xbf16>
    %78 = vector.extract_strided_slice %61 {offsets = [2, 1, 0], sizes = [8, 16, 128], strides = [1, 1, 1]} : vector<10x24x128xbf16> to vector<8x16x128xbf16>
    %79 = vector.extract_strided_slice %61 {offsets = [2, 2, 0], sizes = [8, 16, 128], strides = [1, 1, 1]} : vector<10x24x128xbf16> to vector<8x16x128xbf16>
    %80 = tpu.concatenate %77, %78, %79 in 2 : vector<8x16x128xbf16>, vector<8x16x128xbf16>, vector<8x16x128xbf16> -> vector<8x16x384xbf16>
    %81 = vector.shape_cast %80 : vector<8x16x384xbf16> to vector<128x384xbf16>
    %c768_26 = arith.constant 768 : index
    %c0_27 = arith.constant 0 : index
    %82 = vector.load %arg6[%c768_26, %c0_27] : memref<1152x128xbf16, #tpu.memory_space<vmem>>, vector<384x128xbf16>
    %cst_28 = arith.constant dense<0.000000e+00> : vector<128x128xf32>
    %83 = tpu.matmul %81, %82, %cst_28 {dimension_numbers = #tpu.dot_dimension_numbers<[1], [0], [0], [1], [0, 0, 1, 1], [], []>} : vector<128x384xbf16>, vector<384x128xbf16>, vector<128x128xf32> -> vector<128x128xf32>
    %84 = arith.addf %76, %83 : vector<128x128xf32>
    %c0_29 = arith.constant 0 : index
    %c0_30 = arith.constant 0 : index
    %85 = vector.load %arg7[%c0_29, %c0_30] : memref<1x128xf32, #tpu.memory_space<vmem>>, vector<1x128xf32>
    %86 = vector.broadcast %85 : vector<1x128xf32> to vector<128x128xf32>
    %87 = arith.addf %84, %86 : vector<128x128xf32>
    %88 = arith.negf %87 : vector<128x128xf32>
    %89 = math.exp %88 : vector<128x128xf32>
    %cst_31 = arith.constant 1.000000e+00 : f32
    %90 = vector.broadcast %cst_31 : f32 to vector<128x128xf32>
    %91 = arith.addf %90, %89 : vector<128x128xf32>
    %92 = arith.divf %90, %91 : vector<128x128xf32>
    %93 = arith.mulf %87, %92 : vector<128x128xf32>
    %94 = vector.extract_strided_slice %4 {offsets = [2, 2, 0], sizes = [8, 16, 128], strides = [1, 1, 1]} : vector<12x26x128xbf16> to vector<8x16x128xbf16>
    %95 = vector.shape_cast %94 : vector<8x16x128xbf16> to vector<128x128xbf16>
    %96 = arith.extf %95 : vector<128x128xbf16> to vector<128x128xf32>
    %97 = arith.addf %93, %96 : vector<128x128xf32>
    %98 = vector.shape_cast %97 : vector<128x128xf32> to vector<8x16x128xf32>
    %99 = arith.truncf %98 : vector<8x16x128xf32> to vector<8x16x128xbf16>
    %c0_32 = arith.constant 0 : index
    %c0_33 = arith.constant 0 : index
    %c0_34 = arith.constant 0 : index
    %c0_35 = arith.constant 0 : index
    %100 = vector.load %arg8[%c0_32, %c0_33, %c0_34, %c0_35] : memref<1x8x16x128xbf16, #tpu.memory_space<vmem>>, vector<1x8x16x128xbf16>
    %101 = vector.shape_cast %100 : vector<1x8x16x128xbf16> to vector<8x16x128xbf16>
    %102 = vector.shape_cast %99 : vector<8x16x128xbf16> to vector<1x8x16x128xbf16>
    tpu.vector_store %arg8[%c0_32, %c0_33, %c0_34, %c0_35], %102 {strides = array<i32>} : memref<1x8x16x128xbf16, #tpu.memory_space<vmem>>, vector<1x8x16x128xbf16>,
    return
  }
  func.func @transform_0(%arg0: i32, %arg1: i32) -> (i32, i32, i32, i32) {
    %c0_i32 = arith.constant 0 : i32
    %c0_i32_0 = arith.constant 0 : i32
    %c0_i32_1 = arith.constant 0 : i32
    return %arg0, %arg1, %c0_i32, %c0_i32_0 : i32, i32, i32, i32
  }
  func.func @transform_1(%arg0: i32, %arg1: i32) -> (i32, i32, i32, i32) {
    %c1_i32 = arith.constant 1 : i32
    %0 = arith.addi %arg1, %c1_i32 : i32
    %c2_i32 = arith.constant 2 : i32
    %1 = arith.muli %0, %c2_i32 : i32
    %c0_i32 = arith.constant 0 : i32
    %c0_i32_0 = arith.constant 0 : i32
    %c0_i32_1 = arith.constant 0 : i32
    return %arg0, %1, %c0_i32, %c0_i32_0 : i32, i32, i32, i32
  }
  func.func @transform_2(%arg0: i32, %arg1: i32) -> (i32, i32) {
    %c0_i32 = arith.constant 0 : i32
    %c0_i32_0 = arith.constant 0 : i32
    %c0_i32_1 = arith.constant 0 : i32
    return %c0_i32, %c0_i32_0 : i32, i32
  }
  func.func @transform_3(%arg0: i32, %arg1: i32) -> (i32, i32) {
    %c0_i32 = arith.constant 0 : i32
    %c0_i32_0 = arith.constant 0 : i32
    %c0_i32_1 = arith.constant 0 : i32
    return %c0_i32, %c0_i32_0 : i32, i32
  }
  func.func @transform_4(%arg0: i32, %arg1: i32) -> (i32, i32) {
    %c0_i32 = arith.constant 0 : i32
    %c0_i32_0 = arith.constant 0 : i32
    %c0_i32_1 = arith.constant 0 : i32
    return %c0_i32, %c0_i32_0 : i32, i32
  }
  func.func @transform_5(%arg0: i32, %arg1: i32) -> (i32, i32) {
    %c0_i32 = arith.constant 0 : i32
    %c0_i32_0 = arith.constant 0 : i32
    %c0_i32_1 = arith.constant 0 : i32
    return %c0_i32, %c0_i32_0 : i32, i32
  }
  func.func @transform_6(%arg0: i32, %arg1: i32) -> (i32, i32, i32, i32) {
    %c0_i32 = arith.constant 0 : i32
    %c0_i32_0 = arith.constant 0 : i32
    %c0_i32_1 = arith.constant 0 : i32
    return %arg0, %arg1, %c0_i32, %c0_i32_0 : i32, i32, i32, i32
  }
}

</mosaic_0001>

<llo_original>
// kernel: tpu_custom_call.1
$region0: #{tpu_custom_call.1}
  #allocation0 [shape = 'u32[]', space=smem, size = 0x4, offset = 0x4, fixed_abs, tag = 'smem constant byte address 0x4 - core index']
  #allocation1 [shape = 'u32[144,128]{1,0:T(1,128)}', space=vmem, size = 0x12000, scoped, tag = 'internal scratch']
  %s0 = inlined_call_operand.vmem [shape: bf16[2,20,26,128], index: 0, kind: input, shape index: {}]
  %s1 = inlined_call_operand.vmem [shape: bf16[2,20,26,128], index: 1, kind: input, shape index: {}]
  %s2 = inlined_call_operand.vmem [shape: bf16[1152,128], index: 2, kind: input, shape index: {}]
  %s3 = inlined_call_operand.vmem [shape: f32[1,128], index: 3, kind: input, shape index: {}]
  %s4 = inlined_call_operand.vmem [shape: bf16[1152,128], index: 4, kind: input, shape index: {}]
  %s5 = inlined_call_operand.vmem [shape: f32[1,128], index: 5, kind: input, shape index: {}]
  %s6 = inlined_call_operand.hbm [shape: bf16[2,16,16,128], index: 6, kind: output, shape index: {}]
  %s7 = sld [smem:[#allocation0]]
  $region57: #{tpu_custom_call.1} parent=0
    _
  %s9 = ssub.s32 1, %s7
  %s10 = scalar_select 0, %s9, %s7
  $region1: #{tpu_custom_call.1} parent=0
    #allocation2 [shape = 'u8[65536]{0}', space=vmem, size = 0x10000, scoped, tag = 'output window, operand 0']
    #allocation3 [shape = 's32[2]{0}', space=sflag, size = 0x8, scoped, tag = 'scoped memory for tpu_custom_call.1']
    %11 = vsyncpa [#allocation3], 0
    %s12 = scalar_lea.sflag [#allocation3], 1
    %13 = vsyncpa %s12, 0
    loop: start=0, step=1, limit=6
    $region2: #{tpu_custom_call.1} parent=1 // loop_pre_header
      _
    $region3: #{tpu_custom_call.1} parent=1 // loop_header
      %s15 = sphi 0, %s19
      %p16 = scmp.ge.s32.totalorder %s15, 6
      %s22 = sphi 0, %s34
      %s23 = sphi 0, %s30
      %s24 = sphi 0, %s22
      %s25 = sphi 0, %s23
      %s26 = sphi 0, %s24
      %s27 = sphi 0, %s25
      %s39 = sphi 0, %s41
      %s42 = sphi 0, %s39
      %s43 = sphi 0, %s42
      %s59 = sphi 0, %s43
      %s71 = sphi 0, %s73
      %s74 = sphi 0, %s71
      %s75 = sphi 0, %s74
      %s91 = sphi 0, %s75
      %s95 = sphi 0, %s95
      %s97 = sphi 0, %s95
      %s98 = sphi 0, %s97
      %s112 = sphi 0, %s98
      %s116 = sphi 0, %s116
      %s118 = sphi 0, %s116
      %s119 = sphi 0, %s118
      %s133 = sphi 0, %s119
      %s137 = sphi 0, %s137
      %s139 = sphi 0, %s137
      %s140 = sphi 0, %s139
      %s154 = sphi 0, %s140
      %s158 = sphi 0, %s158
      %s160 = sphi 0, %s158
      %s161 = sphi 0, %s160
      %s175 = sphi 0, %s161
      %s183 = sphi 0, %s185
      %s186 = sphi 0, %s183
      %s187 = sphi 0, %s186
      %s203 = sphi 0, %s187
    $region4: #{tpu_custom_call.1} parent=1 // loop_header_branch
      %18 = sbr.rel (%p16) target = $region8
    $region5: #{tpu_custom_call.1} parent=1 // loop_body
      %s20 = ssub.s32 %s15, 1
      %s21 = ssub.s32 %s15, 2
      %s28 = sadd.s32 1, %s23
      %p29 = scmp.ge.s32.totalorder %s28, 2
      %s30 = scalar_select %p29, 0, %s28
      %s31 = sadd.s32 1, %s22
      %s32 = scalar_select %p29, %s31, %s22
      %p33 = scmp.ge.s32.totalorder %s32, 2
      %s34 = scalar_select %p33, 0, %s32
      %s35 = ssub.s32 %s22, %s34
      %s36 = ssub.s32 %s23, %s30
      %s37 = sor.u32 %s35, %s36
      %p38 = scmp.eq.s32.totalorder %s37, 0
      %s40 = sadd.s32 %s39, 1
      %s41 = scalar_select %p38, %s39, %s40
      %p44 = pneg %p38
      %p45 = scmp.eq.s32.totalorder %s15, 3
      %p46 = por %p44, %p45
      %p47 = scmp.ne.s32.totalorder %s39, %s42
      %p48 = scmp.eq.s32.totalorder %s15, 0
      %p49 = por %p47, %p48
      %p50 = scmp.ne.s32.totalorder %s39, %s42
      %p51 = scmp.eq.s32.totalorder %s20, 3
      %p52 = por %p50, %p51
      %p53 = scmp.ne.s32.totalorder %s42, %s43
      %p54 = scmp.eq.s32.totalorder %s20, 0
      %p55 = por %p53, %p54
      %p56 = scmp.ne.s32.totalorder %s42, %s43
      %p57 = scmp.eq.s32.totalorder %s21, 3
      %p58 = por %p56, %p57
      %p60 = scmp.ne.s32.totalorder %s43, %s59
      %p61 = scmp.eq.s32.totalorder %s21, 0
      %p62 = por %p60, %p61
      %s63 = sadd.s32 %s23, 1
      %s64 = smul.u32 %s63, 2
      %s65 = sadd.s32 %s30, 1
      %s66 = smul.u32 %s65, 2
      %s67 = ssub.s32 %s22, %s34
      %s68 = ssub.s32 %s64, %s66
      %s69 = sor.u32 %s67, %s68
      %p70 = scmp.eq.s32.totalorder %s69, 0
      %s72 = sadd.s32 %s71, 1
      %s73 = scalar_select %p70, %s71, %s72
      %p76 = pneg %p70
      %p77 = scmp.eq.s32.totalorder %s15, 3
      %p78 = por %p76, %p77
      %p79 = scmp.ne.s32.totalorder %s71, %s74
      %p80 = scmp.eq.s32.totalorder %s15, 0
      %p81 = por %p79, %p80
      %p82 = scmp.ne.s32.totalorder %s71, %s74
      %p83 = scmp.eq.s32.totalorder %s20, 3
      %p84 = por %p82, %p83
      %p85 = scmp.ne.s32.totalorder %s74, %s75
      %p86 = scmp.eq.s32.totalorder %s20, 0
      %p87 = por %p85, %p86
      %p88 = scmp.ne.s32.totalorder %s74, %s75
      %p89 = scmp.eq.s32.totalorder %s21, 3
      %p90 = por %p88, %p89
      %p92 = scmp.ne.s32.totalorder %s75, %s91
      %p93 = scmp.eq.s32.totalorder %s21, 0
      %p94 = por %p92, %p93
      %s96 = sadd.s32 %s95, 1
      %p99 = scmp.eq.s32.totalorder %s15, 3
      %p100 = scmp.ne.s32.totalorder %s95, %s97
      %p101 = scmp.eq.s32.totalorder %s15, 0
      %p102 = por %p100, %p101
      %p103 = scmp.ne.s32.totalorder %s95, %s97
      %p104 = scmp.eq.s32.totalorder %s20, 3
      %p105 = por %p103, %p104
      %p106 = scmp.ne.s32.totalorder %s97, %s98
      %p107 = scmp.eq.s32.totalorder %s20, 0
      %p108 = por %p106, %p107
      %p109 = scmp.ne.s32.totalorder %s97, %s98
      %p110 = scmp.eq.s32.totalorder %s21, 3
      %p111 = por %p109, %p110
      %p113 = scmp.ne.s32.totalorder %s98, %s112
      %p114 = scmp.eq.s32.totalorder %s21, 0
      %p115 = por %p113, %p114
      %s117 = sadd.s32 %s116, 1
      %p120 = scmp.eq.s32.totalorder %s15, 3
      %p121 = scmp.ne.s32.totalorder %s116, %s118
      %p122 = scmp.eq.s32.totalorder %s15, 0
      %p123 = por %p121, %p122
      %p124 = scmp.ne.s32.totalorder %s116, %s118
      %p125 = scmp.eq.s32.totalorder %s20, 3
      %p126 = por %p124, %p125
      %p127 = scmp.ne.s32.totalorder %s118, %s119
      %p128 = scmp.eq.s32.totalorder %s20, 0
      %p129 = por %p127, %p128
      %p130 = scmp.ne.s32.totalorder %s118, %s119
      %p131 = scmp.eq.s32.totalorder %s21, 3
      %p132 = por %p130, %p131
      %p134 = scmp.ne.s32.totalorder %s119, %s133
      %p135 = scmp.eq.s32.totalorder %s21, 0
      %p136 = por %p134, %p135
      %s138 = sadd.s32 %s137, 1
      %p141 = scmp.eq.s32.totalorder %s15, 3
      %p142 = scmp.ne.s32.totalorder %s137, %s139
      %p143 = scmp.eq.s32.totalorder %s15, 0
      %p144 = por %p142, %p143
      %p145 = scmp.ne.s32.totalorder %s137, %s139
      %p146 = scmp.eq.s32.totalorder %s20, 3
      %p147 = por %p145, %p146
      %p148 = scmp.ne.s32.totalorder %s139, %s140
      %p149 = scmp.eq.s32.totalorder %s20, 0
      %p150 = por %p148, %p149
      %p151 = scmp.ne.s32.totalorder %s139, %s140
      %p152 = scmp.eq.s32.totalorder %s21, 3
      %p153 = por %p151, %p152
      %p155 = scmp.ne.s32.totalorder %s140, %s154
      %p156 = scmp.eq.s32.totalorder %s21, 0
      %p157 = por %p155, %p156
      %s159 = sadd.s32 %s158, 1
      %p162 = scmp.eq.s32.totalorder %s15, 3
      %p163 = scmp.ne.s32.totalorder %s158, %s160
      %p164 = scmp.eq.s32.totalorder %s15, 0
      %p165 = por %p163, %p164
      %p166 = scmp.ne.s32.totalorder %s158, %s160
      %p167 = scmp.eq.s32.totalorder %s20, 3
      %p168 = por %p166, %p167
      %p169 = scmp.ne.s32.totalorder %s160, %s161
      %p170 = scmp.eq.s32.totalorder %s20, 0
      %p171 = por %p169, %p170
      %p172 = scmp.ne.s32.totalorder %s160, %s161
      %p173 = scmp.eq.s32.totalorder %s21, 3
      %p174 = por %p172, %p173
      %p176 = scmp.ne.s32.totalorder %s161, %s175
      %p177 = scmp.eq.s32.totalorder %s21, 0
      %p178 = por %p176, %p177
      %s179 = ssub.s32 %s22, %s34
      %s180 = ssub.s32 %s23, %s30
      %s181 = sor.u32 %s179, %s180
      %p182 = scmp.eq.s32.totalorder %s181, 0
      %s184 = sadd.s32 %s183, 1
      %s185 = scalar_select %p182, %s183, %s184
      %p188 = pneg %p182
      %p189 = scmp.eq.s32.totalorder %s15, 3
      %p190 = por %p188, %p189
      %p191 = scmp.ne.s32.totalorder %s183, %s186
      %p192 = scmp.eq.s32.totalorder %s15, 0
      %p193 = por %p191, %p192
      %p194 = scmp.ne.s32.totalorder %s183, %s186
      %p195 = scmp.eq.s32.totalorder %s20, 3
      %p196 = por %p194, %p195
      %p197 = scmp.ne.s32.totalorder %s186, %s187
      %p198 = scmp.eq.s32.totalorder %s20, 0
      %p199 = por %p197, %p198
      %p200 = scmp.ne.s32.totalorder %s186, %s187
      %p201 = scmp.eq.s32.totalorder %s21, 3
      %p202 = por %p200, %p201
      %p204 = scmp.ne.s32.totalorder %s187, %s203
      %p205 = scmp.eq.s32.totalorder %s21, 0
      %p206 = por %p204, %p205
      %p207 = scmp.le.s32.totalorder 1, %s15
      %p208 = scmp.lt.s32.totalorder %s15, 5
      %p209 = pnand %p207, %p208
      %p210 = pneg %p209
      // Predicated region
      $region9: #{tpu_custom_call.1} parent=5 // pred_check
        _
      $region10: #{tpu_custom_call.1} parent=5 // pred_check_branch
        %212 = sbr.rel (%p209) target = $region12
      $region11: #{tpu_custom_call.1} parent=5 // pred_region
        %s213 = ssub.s32 %s15, 1
        // Predicated region
        $region13: #{tpu_custom_call.1} parent=11 // pred_check
          %p214 = pneg %p108
        $region14: #{tpu_custom_call.1} parent=11 // pred_check_branch
          %216 = sbr.rel (%p214) target = $region16
        $region15: #{tpu_custom_call.1} parent=11 // pred_region
          _
        $region16: #{tpu_custom_call.1} parent=11 // pred_fallthru
          _
        // Predicated region
        $region17: #{tpu_custom_call.1} parent=11 // pred_check
          %p217 = pneg %p129
        $region18: #{tpu_custom_call.1} parent=11 // pred_check_branch
          %219 = sbr.rel (%p217) target = $region20
        $region19: #{tpu_custom_call.1} parent=11 // pred_region
          _
        $region20: #{tpu_custom_call.1} parent=11 // pred_fallthru
          _
        // Predicated region
        $region21: #{tpu_custom_call.1} parent=11 // pred_check
          %p220 = pneg %p150
        $region22: #{tpu_custom_call.1} parent=11 // pred_check_branch
          %222 = sbr.rel (%p220) target = $region24
        $region23: #{tpu_custom_call.1} parent=11 // pred_region
          _
        $region24: #{tpu_custom_call.1} parent=11 // pred_fallthru
          _
        // Predicated region
        $region25: #{tpu_custom_call.1} parent=11 // pred_check
          %p223 = pneg %p171
        $region26: #{tpu_custom_call.1} parent=11 // pred_check_branch
          %225 = sbr.rel (%p223) target = $region28
        $region27: #{tpu_custom_call.1} parent=11 // pred_region
          _
        $region28: #{tpu_custom_call.1} parent=11 // pred_fallthru
          _
      $region12: #{tpu_custom_call.1} parent=5 // pred_fallthru
        _
      %p226 = scmp.lt.s32.totalorder %s15, 4
      // Predicated region
      $region29: #{tpu_custom_call.1} parent=5 // pred_check
        %p227 = pneg %p226
      $region30: #{tpu_custom_call.1} parent=5 // pred_check_branch
        %229 = sbr.rel (%p227) target = $region32
      $region31: #{tpu_custom_call.1} parent=5 // pred_region
        // Predicated region
        $region33: #{tpu_custom_call.1} parent=31 // pred_check
          %p230 = pneg %p49
        $region34: #{tpu_custom_call.1} parent=31 // pred_check_branch
          %232 = sbr.rel (%p230) target = $region36
        $region35: #{tpu_custom_call.1} parent=31 // pred_region
          %s233 = smul.u32 8, %s23
          %s234 = ssub.s32 20, %s233
          %p235 = scmp.lt.s32.totalorder %s234, 8
          %s236 = scalar_select %p235, %s234, 8
          %s237 = smul.u32 64, %s236
          %s238 = smul.u32 %s237, 4
          %p239 = scmp.lt.s32.totalorder %s22, 1
          %s240 = scalar_select %p239, %s22, 1
          %p241 = scmp.lt.s32.totalorder %s233, 19
          %s242 = scalar_select %p241, %s233, 19
          %s243 = smul.addr %s242, 4
          %s244 = smul.addr %s240, 80
          %s245 = sadd.s32 %s243, %s244
          %s246 = smul.addr %s245, 4
          %s247 = scalar_lea.vmem %s0, %s246
          %s248 = smul.u32 8, %s23
          %s249 = ssub.s32 20, %s248
          %p250 = scmp.lt.s32.totalorder %s249, 8
          %s251 = scalar_select %p250, %s249, 8
          %s252 = smul.u32 64, %s251
          %s253 = smul.u32 %s252, 4
        $region36: #{tpu_custom_call.1} parent=31 // pred_fallthru
          _
        // Predicated region
        $region37: #{tpu_custom_call.1} parent=31 // pred_check
          %p254 = pneg %p81
        $region38: #{tpu_custom_call.1} parent=31 // pred_check_branch
          %256 = sbr.rel (%p254) target = $region40
        $region39: #{tpu_custom_call.1} parent=31 // pred_region
          %s257 = sadd.s32 %s23, 1
          %s258 = smul.u32 %s257, 2
          %s259 = smul.u32 4, %s258
          %p260 = scmp.lt.s32.totalorder %s22, 1
          %s261 = scalar_select %p260, %s22, 1
          %p262 = scmp.lt.s32.totalorder %s259, 19
          %s263 = scalar_select %p262, %s259, 19
          %s264 = smul.addr %s263, 4
          %s265 = smul.addr %s261, 80
          %s266 = sadd.s32 %s264, %s265
          %s267 = smul.addr %s266, 4
          %s268 = scalar_lea.vmem %s1, %s267
          %s269 = sadd.s32 %s23, 1
          %s270 = smul.u32 %s269, 2
          %s271 = smul.u32 4, %s270
        $region40: #{tpu_custom_call.1} parent=31 // pred_fallthru
          _
      $region32: #{tpu_custom_call.1} parent=5 // pred_fallthru
        _
      %p272 = scmp.le.s32.totalorder 1, %s15
      %p273 = scmp.lt.s32.totalorder %s15, 5
      %p274 = pnand %p272, %p273
      %p275 = pneg %p274
      // Predicated region
      $region41: #{tpu_custom_call.1} parent=5 // pred_check
        _
      $region42: #{tpu_custom_call.1} parent=5 // pred_check_branch
        %277 = sbr.rel (%p274) target = $region44
      $region43: #{tpu_custom_call.1} parent=5 // pred_region
        %s278 = ssub.s32 %s15, 1
        %s279 = smul.u32 8, %s25
        %s280 = ssub.s32 20, %s279
        %p281 = scmp.lt.s32.totalorder %s280, 8
        %s282 = scalar_select %p281, %s280, 8
        %s283 = smul.u32 64, %s282
        %s284 = smul.u32 %s283, 4
        %p285 = scmp.lt.s32.totalorder %s24, 1
        %s286 = scalar_select %p285, %s24, 1
        %p287 = scmp.lt.s32.totalorder %s279, 19
        %s288 = scalar_select %p287, %s279, 19
        %s289 = smul.addr %s288, 4
        %s290 = smul.addr %s286, 80
        %s291 = sadd.s32 %s289, %s290
        %s292 = smul.addr %s291, 4
        %s293 = scalar_lea.vmem %s0, %s292
        %p294 = pneg %p55
        %p295 = pneg %p52
        %s296 = sadd.s32 %s25, 1
        %s297 = smul.u32 %s296, 2
        %s298 = smul.u32 4, %s297
        %p299 = scmp.lt.s32.totalorder %s24, 1
        %s300 = scalar_select %p299, %s24, 1
        %p301 = scmp.lt.s32.totalorder %s298, 19
        %s302 = scalar_select %p301, %s298, 19
        %s303 = smul.addr %s302, 4
        %s304 = smul.addr %s300, 80
        %s305 = sadd.s32 %s303, %s304
        %s306 = smul.addr %s305, 4
        %s307 = scalar_lea.vmem %s1, %s306
        %p308 = pneg %p87
        %p309 = pneg %p84
        %p310 = pneg %p108
        %p311 = pneg %p105
        %p312 = pneg %p129
        %p313 = pneg %p126
        %p314 = pneg %p150
        %p315 = pneg %p147
        %p316 = pneg %p171
        %p317 = pneg %p168
        %p318 = pneg %p199
        %p319 = pneg %p196
        %s320 = sand.u32 %s186, 1
        %s321 = scalar_lea.sflag [#allocation3], %s320
        %s322 = sand.u32 %s186, 1
        %s323 = smul.addr %s322, 64
        %s324 = scalar_lea.vmem [#allocation2], %s323
        %s325 = smul.u32 8, %s25
        %s326 = ssub.s32 20, %s325
        %p327 = scmp.lt.s32.totalorder %s326, 8
        %s328 = scalar_select %p327, %s326, 8
        %s329 = smul.u32 64, %s328
        %s330 = smul.u32 %s329, 4
        %p331 = scmp.lt.s32.totalorder %s24, 1
        %s332 = scalar_select %p331, %s24, 1
        %p333 = scmp.lt.s32.totalorder %s325, 19
        %s334 = scalar_select %p333, %s325, 19
        %s335 = smul.addr %s334, 4
        %s336 = smul.addr %s332, 80
        %s337 = sadd.s32 %s335, %s336
        %s338 = smul.addr %s337, 4
        %s339 = scalar_lea.vmem %s0, %s338
        %s340 = smul.u32 8, %s25
        %s341 = ssub.s32 20, %s340
        %p342 = scmp.lt.s32.totalorder %s341, 8
        %s343 = scalar_select %p342, %s341, 8
        %s344 = smul.u32 64, %s343
        %s345 = smul.u32 %s344, 4
        %s346 = sadd.s32 %s25, 1
        %s347 = smul.u32 %s346, 2
        %s348 = smul.u32 4, %s347
        %p349 = scmp.lt.s32.totalorder %s24, 1
        %s350 = scalar_select %p349, %s24, 1
        %p351 = scmp.lt.s32.totalorder %s348, 19
        %s352 = scalar_select %p351, %s348, 19
        %s353 = smul.addr %s352, 4
        %s354 = smul.addr %s350, 80
        %s355 = sadd.s32 %s353, %s354
        %s356 = smul.addr %s355, 4
        %s357 = scalar_lea.vmem %s1, %s356
        %s358 = sadd.s32 %s25, 1
        %s359 = smul.u32 %s358, 2
        %s360 = smul.u32 4, %s359
        %s361 = smul.u32 8, %s25
        %v363 = vld [vmem:[%s339] sm:$0xf]
        %v364 = vld [vmem:[%s339 + $0x4] sm:$0xf]
        %v365 = vld [vmem:[%s339 + $0x8] sm:$0xf]
        %v366 = vld [vmem:[%s339 + $0xc] sm:$0x1]
        %v367 = vld [vmem:[%s339 + $0x10] sm:$0xf]
        %v368 = vld [vmem:[%s339 + $0x14] sm:$0xf]
        %v369 = vld [vmem:[%s339 + $0x18] sm:$0xf]
        %v370 = vld [vmem:[%s339 + $0x1c] sm:$0x1]
        %v371 = vld [vmem:[%s339 + $0x20] sm:$0xf]
        %v372 = vld [vmem:[%s339 + $0x24] sm:$0xf]
        %v373 = vld [vmem:[%s339 + $0x28] sm:$0xf]
        %v374 = vld [vmem:[%s339 + $0x2c] sm:$0x1]
        %v375 = vld [vmem:[%s339 + $0x30] sm:$0xf]
        %v376 = vld [vmem:[%s339 + $0x34] sm:$0xf]
        %v377 = vld [vmem:[%s339 + $0x38] sm:$0xf]
        %v378 = vld [vmem:[%s339 + $0x3c] sm:$0x1]
        %v379 = vld [vmem:[%s339 + $0x40] sm:$0xf]
        %v380 = vld [vmem:[%s339 + $0x44] sm:$0xf]
        %v381 = vld [vmem:[%s339 + $0x48] sm:$0xf]
        %v382 = vld [vmem:[%s339 + $0x4c] sm:$0x1]
        %v383 = vld [vmem:[%s339 + $0x50] sm:$0xf]
        %v384 = vld [vmem:[%s339 + $0x54] sm:$0xf]
        %v385 = vld [vmem:[%s339 + $0x58] sm:$0xf]
        %v386 = vld [vmem:[%s339 + $0x5c] sm:$0x1]
        %v387 = vld [vmem:[%s339 + $0x60] sm:$0xf]
        %v388 = vld [vmem:[%s339 + $0x64] sm:$0xf]
        %v389 = vld [vmem:[%s339 + $0x68] sm:$0xf]
        %v390 = vld [vmem:[%s339 + $0x6c] sm:$0x1]
        %v391 = vld [vmem:[%s339 + $0x70] sm:$0xf]
        %v392 = vld [vmem:[%s339 + $0x74] sm:$0xf]
        %v393 = vld [vmem:[%s339 + $0x78] sm:$0xf]
        %v394 = vld [vmem:[%s339 + $0x7c] sm:$0x1]
        %v395 = vld [vmem:[%s357] sm:$0xf]
        %v396 = vld [vmem:[%s357 + $0x4] sm:$0xf]
        %v397 = vld [vmem:[%s357 + $0x8] sm:$0xf]
        %v398 = vld [vmem:[%s357 + $0xc] sm:$0x1]
        %v399 = vld [vmem:[%s357 + $0x10] sm:$0xf]
        %v400 = vld [vmem:[%s357 + $0x14] sm:$0xf]
        %v401 = vld [vmem:[%s357 + $0x18] sm:$0xf]
        %v402 = vld [vmem:[%s357 + $0x1c] sm:$0x1]
        %v403 = vld [vmem:[%s357 + $0x20] sm:$0xf]
        %v404 = vld [vmem:[%s357 + $0x24] sm:$0xf]
        %v405 = vld [vmem:[%s357 + $0x28] sm:$0xf]
        %v406 = vld [vmem:[%s357 + $0x2c] sm:$0x1]
        %v407 = vld [vmem:[%s357 + $0x30] sm:$0xf]
        %v408 = vld [vmem:[%s357 + $0x34] sm:$0xf]
        %v409 = vld [vmem:[%s357 + $0x38] sm:$0xf]
        %v410 = vld [vmem:[%s357 + $0x3c] sm:$0x1]
        %v441 = vunpack.c.l.b16 %v363
        %v442 = vunpack.c.l.b16 %v364
        %v443 = vunpack.c.l.b16 %v365
        %v444 = vunpack.c.l.b16 %v367
        %v445 = vunpack.c.l.b16 %v368
        %v446 = vunpack.c.l.b16 %v369
        %v447 = vunpack.c.l.b16 %v371
        %v448 = vunpack.c.l.b16 %v372
        %v449 = vunpack.c.l.b16 %v373
        %v450 = vunpack.c.l.b16 %v375
        %v451 = vunpack.c.l.b16 %v376
        %v452 = vunpack.c.l.b16 %v377
        %v453 = vunpack.c.l.b16 %v379
        %v454 = vunpack.c.l.b16 %v380
        %v455 = vunpack.c.l.b16 %v381
        %v456 = vunpack.c.l.b16 %v383
        %v457 = vunpack.c.l.b16 %v384
        %v458 = vunpack.c.l.b16 %v385
        %v459 = vunpack.c.l.b16 %v387
        %v460 = vunpack.c.l.b16 %v388
        %v461 = vunpack.c.l.b16 %v389
        %v462 = vunpack.c.l.b16 %v391
        %v463 = vunpack.c.l.b16 %v392
        %v464 = vunpack.c.l.b16 %v393
        %v465 = vunpack.c.l.b16 %v395
        %v466 = vunpack.c.l.b16 %v396
        %v467 = vunpack.c.l.b16 %v397
        %v468 = vunpack.c.l.b16 %v399
        %v469 = vunpack.c.l.b16 %v400
        %v470 = vunpack.c.l.b16 %v401
        %v481 = vunpack.c.l.b16 %v366
        %v482 = vunpack.c.l.b16 %v370
        %v483 = vunpack.c.l.b16 %v374
        %v484 = vunpack.c.l.b16 %v378
        %v485 = vunpack.c.l.b16 %v382
        %v486 = vunpack.c.l.b16 %v386
        %v487 = vunpack.c.l.b16 %v390
        %v488 = vunpack.c.l.b16 %v394
        %v489 = vunpack.c.l.b16 %v398
        %v490 = vunpack.c.l.b16 %v402
        %v491 = vpack.c.b16 %v442, %v441
        %v492 = vpack.c.b16 %v481, %v443
        %v493 = vpack.c.b16 %v445, %v444
        %v494 = vpack.c.b16 %v482, %v446
        %v495 = vpack.c.b16 %v448, %v447
        %v496 = vpack.c.b16 %v483, %v449
        %v497 = vpack.c.b16 %v451, %v450
        %v498 = vpack.c.b16 %v484, %v452
        %v499 = vpack.c.b16 %v454, %v453
        %v500 = vpack.c.b16 %v485, %v455
        %v501 = vpack.c.b16 %v457, %v456
        %v502 = vpack.c.b16 %v486, %v458
        %v503 = vpack.c.b16 %v460, %v459
        %v504 = vpack.c.b16 %v487, %v461
        %v505 = vpack.c.b16 %v463, %v462
        %v506 = vpack.c.b16 %v488, %v464
        %v507 = vpack.c.b16 %v466, %v465
        %v508 = vpack.c.b16 %v489, %v467
        %v509 = vpack.c.b16 %v469, %v468
        %v510 = vpack.c.b16 %v490, %v470
        %vm511 = vsmask.f32 7424
        %v513 = vshrl.u32 %v491, 16
        %v515 = vshll.u32 %v491, 16
        %v517 = vrot.slane %v515, 1
        %v518 = vor.u32 %v513, %v517
        %v520 = vshll.u32 %v492, 16
        %v522 = vrot.slane %v520, 1
        %v523 = vsel %vm511, %v518, %v522
        %v524 = vshrl.u32 %v492, 16
        %v526 = vor.u32 %v524, %v522
        %v528 = vshrl.u32 %v493, 16
        %v530 = vshll.u32 %v493, 16
        %v532 = vrot.slane %v530, 1
        %v533 = vor.u32 %v528, %v532
        %v535 = vshll.u32 %v494, 16
        %v537 = vrot.slane %v535, 1
        %v538 = vsel %vm511, %v533, %v537
        %v539 = vshrl.u32 %v494, 16
        %v541 = vor.u32 %v539, %v537
        %v543 = vshrl.u32 %v495, 16
        %v545 = vshll.u32 %v495, 16
        %v547 = vrot.slane %v545, 1
        %v548 = vor.u32 %v543, %v547
        %v550 = vshll.u32 %v496, 16
        %v552 = vrot.slane %v550, 1
        %v553 = vsel %vm511, %v548, %v552
        %v554 = vshrl.u32 %v496, 16
        %v556 = vor.u32 %v554, %v552
        %v558 = vshrl.u32 %v497, 16
        %v560 = vshll.u32 %v497, 16
        %v562 = vrot.slane %v560, 1
        %v563 = vor.u32 %v558, %v562
        %v565 = vshll.u32 %v498, 16
        %v567 = vrot.slane %v565, 1
        %v568 = vsel %vm511, %v563, %v567
        %v569 = vshrl.u32 %v498, 16
        %v571 = vor.u32 %v569, %v567
        %v573 = vshrl.u32 %v499, 16
        %v575 = vshll.u32 %v499, 16
        %v577 = vrot.slane %v575, 1
        %v578 = vor.u32 %v573, %v577
        %v580 = vshll.u32 %v500, 16
        %v582 = vrot.slane %v580, 1
        %v583 = vsel %vm511, %v578, %v582
        %v584 = vshrl.u32 %v500, 16
        %v586 = vor.u32 %v584, %v582
        %v588 = vshrl.u32 %v501, 16
        %v590 = vshll.u32 %v501, 16
        %v592 = vrot.slane %v590, 1
        %v593 = vor.u32 %v588, %v592
        %v595 = vshll.u32 %v502, 16
        %v597 = vrot.slane %v595, 1
        %v598 = vsel %vm511, %v593, %v597
        %v599 = vshrl.u32 %v502, 16
        %v601 = vor.u32 %v599, %v597
        %v603 = vshrl.u32 %v503, 16
        %v605 = vshll.u32 %v503, 16
        %v607 = vrot.slane %v605, 1
        %v608 = vor.u32 %v603, %v607
        %v610 = vshll.u32 %v504, 16
        %v612 = vrot.slane %v610, 1
        %v613 = vsel %vm511, %v608, %v612
        %v614 = vshrl.u32 %v504, 16
        %v616 = vor.u32 %v614, %v612
        %v618 = vshrl.u32 %v505, 16
        %v620 = vshll.u32 %v505, 16
        %v622 = vrot.slane %v620, 1
        %v623 = vor.u32 %v618, %v622
        %v625 = vshll.u32 %v506, 16
        %v627 = vrot.slane %v625, 1
        %v628 = vsel %vm511, %v623, %v627
        %v629 = vshrl.u32 %v506, 16
        %v631 = vor.u32 %v629, %v627
        %v633 = vshrl.u32 %v507, 16
        %v635 = vshll.u32 %v507, 16
        %v637 = vrot.slane %v635, 1
        %v638 = vor.u32 %v633, %v637
        %v640 = vshll.u32 %v508, 16
        %v642 = vrot.slane %v640, 1
        %v643 = vsel %vm511, %v638, %v642
        %v644 = vshrl.u32 %v508, 16
        %v646 = vor.u32 %v644, %v642
        %v648 = vshrl.u32 %v509, 16
        %v650 = vshll.u32 %v509, 16
        %v652 = vrot.slane %v650, 1
        %v653 = vor.u32 %v648, %v652
        %v655 = vshll.u32 %v510, 16
        %v657 = vrot.slane %v655, 1
        %v658 = vsel %vm511, %v653, %v657
        %v659 = vshrl.u32 %v510, 16
        %v661 = vor.u32 %v659, %v657
        %vm662 = vcmask 1046528
        %v663 = vrot.slane %v491, 1
        %v664 = vrot.slane %v492, 1
        %v665 = vsel %vm662, %v663, %v664
        %v666 = vrot.slane %v493, 1
        %v667 = vrot.slane %v494, 1
        %v668 = vsel %vm662, %v666, %v667
        %v669 = vrot.slane %v495, 1
        %v670 = vrot.slane %v496, 1
        %v671 = vsel %vm662, %v669, %v670
        %v672 = vrot.slane %v497, 1
        %v673 = vrot.slane %v498, 1
        %v674 = vsel %vm662, %v672, %v673
        %v675 = vrot.slane %v499, 1
        %v676 = vrot.slane %v500, 1
        %v677 = vsel %vm662, %v675, %v676
        %v678 = vrot.slane %v501, 1
        %v679 = vrot.slane %v502, 1
        %v680 = vsel %vm662, %v678, %v679
        %v681 = vrot.slane %v503, 1
        %v682 = vrot.slane %v504, 1
        %v683 = vsel %vm662, %v681, %v682
        %v684 = vrot.slane %v505, 1
        %v685 = vrot.slane %v506, 1
        %v686 = vsel %vm662, %v684, %v685
        %v687 = vrot.slane %v507, 1
        %v688 = vrot.slane %v508, 1
        %v689 = vsel %vm662, %v687, %v688
        %v690 = vrot.slane %v509, 1
        %v691 = vrot.slane %v510, 1
        %v692 = vsel %vm662, %v690, %v691
        %v693 = vunpack.c.l.b16 %v523
        %v694 = vunpack.c.l.b16 %v665
        %v695 = vunpack.c.h.b16 %v523
        %v696 = vunpack.c.h.b16 %v665
        %v697 = vunpack.c.l.b16 %v526
        %v698 = vunpack.c.l.b16 %v664
        %v699 = vunpack.c.l.b16 %v538
        %v700 = vunpack.c.l.b16 %v668
        %v701 = vunpack.c.h.b16 %v538
        %v702 = vunpack.c.h.b16 %v668
        %v703 = vunpack.c.l.b16 %v541
        %v704 = vunpack.c.l.b16 %v667
        %v705 = vunpack.c.l.b16 %v553
        %v706 = vunpack.c.l.b16 %v671
        %v707 = vunpack.c.h.b16 %v553
        %v708 = vunpack.c.h.b16 %v671
        %v709 = vunpack.c.l.b16 %v556
        %v710 = vunpack.c.l.b16 %v670
        %v711 = vunpack.c.l.b16 %v568
        %v712 = vunpack.c.l.b16 %v674
        %v713 = vunpack.c.h.b16 %v568
        %v714 = vunpack.c.h.b16 %v674
        %v715 = vunpack.c.l.b16 %v571
        %v716 = vunpack.c.l.b16 %v673
        %v717 = vunpack.c.l.b16 %v583
        %v718 = vunpack.c.l.b16 %v677
        %v719 = vunpack.c.h.b16 %v583
        %v720 = vunpack.c.h.b16 %v677
        %v721 = vunpack.c.l.b16 %v586
        %v722 = vunpack.c.l.b16 %v676
        %v723 = vunpack.c.l.b16 %v598
        %v724 = vunpack.c.l.b16 %v680
        %v725 = vunpack.c.h.b16 %v598
        %v726 = vunpack.c.h.b16 %v680
        %v727 = vunpack.c.l.b16 %v601
        %v728 = vunpack.c.l.b16 %v679
        %v729 = vunpack.c.l.b16 %v613
        %v730 = vunpack.c.l.b16 %v683
        %v731 = vunpack.c.h.b16 %v613
        %v732 = vunpack.c.h.b16 %v683
        %v733 = vunpack.c.l.b16 %v616
        %v734 = vunpack.c.l.b16 %v682
        %v735 = vunpack.c.l.b16 %v628
        %v736 = vunpack.c.l.b16 %v686
        %v737 = vunpack.c.h.b16 %v628
        %v738 = vunpack.c.h.b16 %v686
        %v739 = vunpack.c.l.b16 %v631
        %v740 = vunpack.c.l.b16 %v685
        %v741 = vunpack.c.l.b16 %v643
        %v742 = vunpack.c.l.b16 %v689
        %v743 = vunpack.c.h.b16 %v643
        %v744 = vunpack.c.h.b16 %v689
        %v745 = vunpack.c.l.b16 %v646
        %v746 = vunpack.c.l.b16 %v688
        %v747 = vunpack.c.l.b16 %v658
        %v748 = vunpack.c.l.b16 %v692
        %v749 = vunpack.c.h.b16 %v658
        %v750 = vunpack.c.h.b16 %v692
        %v751 = vunpack.c.l.b16 %v661
        %v752 = vunpack.c.l.b16 %v691
        %v753 = vld [vmem:[%s2] sm:$0xf]
        %v754 = vld [vmem:[%s2 + $0x4] sm:$0xf]
        %v755 = vld [vmem:[%s2 + $0x8] sm:$0xf]
        %v756 = vld [vmem:[%s2 + $0xc] sm:$0xf]
        %v757 = vld [vmem:[%s2 + $0x10] sm:$0xf]
        %v758 = vld [vmem:[%s2 + $0x14] sm:$0xf]
        %v759 = vld [vmem:[%s2 + $0x18] sm:$0xf]
        %v760 = vld [vmem:[%s2 + $0x1c] sm:$0xf]
        %v761 = vld [vmem:[%s2 + $0x20] sm:$0xf]
        %v762 = vld [vmem:[%s2 + $0x24] sm:$0xf]
        %v763 = vld [vmem:[%s2 + $0x28] sm:$0xf]
        %v764 = vld [vmem:[%s2 + $0x2c] sm:$0xf]
        %v765 = vld [vmem:[%s2 + $0x30] sm:$0xf]
        %v766 = vld [vmem:[%s2 + $0x34] sm:$0xf]
        %v767 = vld [vmem:[%s2 + $0x38] sm:$0xf]
        %v768 = vld [vmem:[%s2 + $0x3c] sm:$0xf]
        %v769 = vld [vmem:[%s2 + $0x40] sm:$0xf]
        %v770 = vld [vmem:[%s2 + $0x44] sm:$0xf]
        %v771 = vld [vmem:[%s2 + $0x48] sm:$0xf]
        %v772 = vld [vmem:[%s2 + $0x4c] sm:$0xf]
        %v773 = vld [vmem:[%s2 + $0x50] sm:$0xf]
        %v774 = vld [vmem:[%s2 + $0x54] sm:$0xf]
        %v775 = vld [vmem:[%s2 + $0x58] sm:$0xf]
        %v776 = vld [vmem:[%s2 + $0x5c] sm:$0xf]
        %v777 = vld [vmem:[%s2 + $0x60] sm:$0xf]
        %v778 = vld [vmem:[%s2 + $0x64] sm:$0xf]
        %v779 = vld [vmem:[%s2 + $0x68] sm:$0xf]
        %v780 = vld [vmem:[%s2 + $0x6c] sm:$0xf]
        %v781 = vld [vmem:[%s2 + $0x70] sm:$0xf]
        %v782 = vld [vmem:[%s2 + $0x74] sm:$0xf]
        %v783 = vld [vmem:[%s2 + $0x78] sm:$0xf]
        %v784 = vld [vmem:[%s2 + $0x7c] sm:$0xf]
        %v785 = vld [vmem:[%s2 + $0x80] sm:$0xf]
        %v786 = vld [vmem:[%s2 + $0x84] sm:$0xf]
        %v787 = vld [vmem:[%s2 + $0x88] sm:$0xf]
        %v788 = vld [vmem:[%s2 + $0x8c] sm:$0xf]
        %v789 = vld [vmem:[%s2 + $0x90] sm:$0xf]
        %v790 = vld [vmem:[%s2 + $0x94] sm:$0xf]
        %v791 = vld [vmem:[%s2 + $0x98] sm:$0xf]
        %v792 = vld [vmem:[%s2 + $0x9c] sm:$0xf]
        %v793 = vld [vmem:[%s2 + $0xa0] sm:$0xf]
        %v794 = vld [vmem:[%s2 + $0xa4] sm:$0xf]
        %v795 = vld [vmem:[%s2 + $0xa8] sm:$0xf]
        %v796 = vld [vmem:[%s2 + $0xac] sm:$0xf]
        %v797 = vld [vmem:[%s2 + $0xb0] sm:$0xf]
        %v798 = vld [vmem:[%s2 + $0xb4] sm:$0xf]
        %v799 = vld [vmem:[%s2 + $0xb8] sm:$0xf]
        %v800 = vld [vmem:[%s2 + $0xbc] sm:$0xf]
        %v804 = vunpack.c.l.b16 %v403
        %v805 = vunpack.c.l.b16 %v404
        %v806 = vunpack.c.l.b16 %v405
        %v808 = vunpack.c.l.b16 %v406
        %v809 = vpack.c.b16 %v805, %v804
        %v810 = vpack.c.b16 %v808, %v806
        %v812 = vshrl.u32 %v809, 16
        %v814 = vshll.u32 %v809, 16
        %v816 = vrot.slane %v814, 1
        %v817 = vor.u32 %v812, %v816
        %v819 = vshll.u32 %v810, 16
        %v821 = vrot.slane %v819, 1
        %v822 = vsel %vm511, %v817, %v821
        %v823 = vshrl.u32 %v810, 16
        %v825 = vor.u32 %v823, %v821
        %v826 = vrot.slane %v809, 1
        %v827 = vrot.slane %v810, 1
        %v828 = vsel %vm662, %v826, %v827
        %v829 = vunpack.c.l.b16 %v822
        %v830 = vunpack.c.l.b16 %v828
        %v831 = vunpack.c.h.b16 %v822
        %v832 = vunpack.c.h.b16 %v828
        %v833 = vunpack.c.l.b16 %v825
        %v834 = vunpack.c.l.b16 %v827
        %v835 = vld [vmem:[%s2 + $0xc0] sm:$0xf]
        %v836 = vld [vmem:[%s2 + $0xc4] sm:$0xf]
        %v837 = vld [vmem:[%s2 + $0xc8] sm:$0xf]
        %v838 = vld [vmem:[%s2 + $0xcc] sm:$0xf]
        %v839 = vld [vmem:[%s2 + $0xd0] sm:$0xf]
        %v840 = vld [vmem:[%s2 + $0xd4] sm:$0xf]
        %v841 = vld [vmem:[%s2 + $0xd8] sm:$0xf]
        %v842 = vld [vmem:[%s2 + $0xdc] sm:$0xf]
        %v843 = vld [vmem:[%s2 + $0xe0] sm:$0xf]
        %v844 = vld [vmem:[%s2 + $0xe4] sm:$0xf]
        %v845 = vld [vmem:[%s2 + $0xe8] sm:$0xf]
        %v846 = vld [vmem:[%s2 + $0xec] sm:$0xf]
        %v847 = vld [vmem:[%s2 + $0xf0] sm:$0xf]
        %v848 = vld [vmem:[%s2 + $0xf4] sm:$0xf]
        %v849 = vld [vmem:[%s2 + $0xf8] sm:$0xf]
        %v850 = vld [vmem:[%s2 + $0xfc] sm:$0xf]
        %v851 = vld [vmem:[%s2 + $0x100] sm:$0xf]
        %v852 = vld [vmem:[%s2 + $0x104] sm:$0xf]
        %v853 = vld [vmem:[%s2 + $0x108] sm:$0xf]
        %v854 = vld [vmem:[%s2 + $0x10c] sm:$0xf]
        %v855 = vld [vmem:[%s2 + $0x110] sm:$0xf]
        %v856 = vld [vmem:[%s2 + $0x114] sm:$0xf]
        %v857 = vld [vmem:[%s2 + $0x118] sm:$0xf]
        %v858 = vld [vmem:[%s2 + $0x11c] sm:$0xf]
        %v859 = vld [vmem:[%s2 + $0x120] sm:$0xf]
        %v860 = vld [vmem:[%s2 + $0x124] sm:$0xf]
        %v861 = vld [vmem:[%s2 + $0x128] sm:$0xf]
        %v862 = vld [vmem:[%s2 + $0x12c] sm:$0xf]
        %v863 = vld [vmem:[%s2 + $0x130] sm:$0xf]
        %v864 = vld [vmem:[%s2 + $0x134] sm:$0xf]
        %v865 = vld [vmem:[%s2 + $0x138] sm:$0xf]
        %v866 = vld [vmem:[%s2 + $0x13c] sm:$0xf]
        %v867 = vld [vmem:[%s2 + $0x140] sm:$0xf]
        %v868 = vld [vmem:[%s2 + $0x144] sm:$0xf]
        %v869 = vld [vmem:[%s2 + $0x148] sm:$0xf]
        %v870 = vld [vmem:[%s2 + $0x14c] sm:$0xf]
        %v871 = vld [vmem:[%s2 + $0x150] sm:$0xf]
        %v872 = vld [vmem:[%s2 + $0x154] sm:$0xf]
        %v873 = vld [vmem:[%s2 + $0x158] sm:$0xf]
        %v874 = vld [vmem:[%s2 + $0x15c] sm:$0xf]
        %v875 = vld [vmem:[%s2 + $0x160] sm:$0xf]
        %v876 = vld [vmem:[%s2 + $0x164] sm:$0xf]
        %v877 = vld [vmem:[%s2 + $0x168] sm:$0xf]
        %v878 = vld [vmem:[%s2 + $0x16c] sm:$0xf]
        %v879 = vld [vmem:[%s2 + $0x170] sm:$0xf]
        %v880 = vld [vmem:[%s2 + $0x174] sm:$0xf]
        %v881 = vld [vmem:[%s2 + $0x178] sm:$0xf]
        %v882 = vld [vmem:[%s2 + $0x17c] sm:$0xf]
        %v883 = vpack.c.b16 %v701, %v699
        %v884 = vpack.c.b16 %v702, %v700
        %v885 = vpack.c.b16 %v447, %v446
        %v886 = vpack.c.b16 %v705, %v703
        %v887 = vpack.c.b16 %v706, %v704
        %v888 = vpack.c.b16 %v449, %v448
        %v889 = vpack.c.b16 %v709, %v707
        %v890 = vpack.c.b16 %v710, %v708
        %v891 = vpack.c.b16 %v713, %v711
        %v892 = vpack.c.b16 %v714, %v712
        %v893 = vpack.c.b16 %v453, %v452
        %v894 = vpack.c.b16 %v717, %v715
        %v895 = vpack.c.b16 %v718, %v716
        %v896 = vpack.c.b16 %v455, %v454
        %v897 = vpack.c.b16 %v721, %v719
        %v898 = vpack.c.b16 %v722, %v720
        %v899 = vpack.c.b16 %v725, %v723
        %v900 = vpack.c.b16 %v726, %v724
        %v901 = vpack.c.b16 %v459, %v458
        %v902 = vpack.c.b16 %v729, %v727
        %v903 = vpack.c.b16 %v730, %v728
        %v904 = vpack.c.b16 %v461, %v460
        %v905 = vpack.c.b16 %v733, %v731
        %v906 = vpack.c.b16 %v734, %v732
        %v907 = vpack.c.b16 %v737, %v735
        %v908 = vpack.c.b16 %v738, %v736
        %v909 = vpack.c.b16 %v465, %v464
        %v910 = vpack.c.b16 %v741, %v739
        %v911 = vpack.c.b16 %v742, %v740
        %v912 = vpack.c.b16 %v467, %v466
        %v913 = vpack.c.b16 %v745, %v743
        %v914 = vpack.c.b16 %v746, %v744
        %v915 = vpack.c.b16 %v749, %v747
        %v916 = vpack.c.b16 %v750, %v748
        %v917 = vpack.c.b16 %v804, %v470
        %v918 = vpack.c.b16 %v829, %v751
        %v919 = vpack.c.b16 %v830, %v752
        %v920 = vpack.c.b16 %v806, %v805
        %v921 = vpack.c.b16 %v833, %v831
        %v922 = vpack.c.b16 %v834, %v832
        %v1016 = vunpack.c.l.b16 %v835
        %v1017 = vunpack.c.l.b16 %v836
        %v1018 = vunpack.c.l.b16 %v837
        %v1019 = vunpack.c.l.b16 %v838
        %v1020 = vunpack.c.l.b16 %v839
        %v1021 = vunpack.c.l.b16 %v840
        %v1022 = vunpack.c.l.b16 %v841
        %v1023 = vunpack.c.l.b16 %v842
        %v1024 = vunpack.c.l.b16 %v843
        %v1025 = vunpack.c.l.b16 %v844
        %v1026 = vunpack.c.l.b16 %v845
        %v1027 = vunpack.c.l.b16 %v846
        %v1028 = vunpack.c.l.b16 %v847
        %v1029 = vunpack.c.l.b16 %v848
        %v1030 = vunpack.c.l.b16 %v849
        %v1031 = vunpack.c.l.b16 %v850
        %v1032 = vunpack.c.l.b16 %v851
        %v1033 = vunpack.c.l.b16 %v852
        %v1034 = vunpack.c.l.b16 %v853
        %v1035 = vunpack.c.l.b16 %v854
        %v1036 = vunpack.c.l.b16 %v855
        %v1037 = vunpack.c.l.b16 %v856
        %v1038 = vunpack.c.l.b16 %v857
        %v1039 = vunpack.c.l.b16 %v858
        %v1040 = vunpack.c.l.b16 %v859
        %v1041 = vunpack.c.l.b16 %v860
        %v1042 = vunpack.c.l.b16 %v861
        %v1043 = vunpack.c.l.b16 %v862
        %v1044 = vunpack.c.l.b16 %v863
        %v1045 = vunpack.c.l.b16 %v864
        %v1046 = vunpack.c.l.b16 %v865
        %v1047 = vunpack.c.l.b16 %v866
        %v1048 = vunpack.c.l.b16 %v867
        %v1049 = vunpack.c.l.b16 %v868
        %v1050 = vunpack.c.l.b16 %v869
        %v1051 = vunpack.c.l.b16 %v870
        %v1052 = vunpack.c.l.b16 %v871
        %v1053 = vunpack.c.l.b16 %v872
        %v1054 = vunpack.c.l.b16 %v873
        %v1055 = vunpack.c.l.b16 %v874
        %v1056 = vunpack.c.l.b16 %v875
        %v1057 = vunpack.c.l.b16 %v876
        %v1058 = vunpack.c.l.b16 %v877
        %v1059 = vunpack.c.l.b16 %v878
        %v1060 = vunpack.c.l.b16 %v879
        %v1061 = vunpack.c.l.b16 %v880
        %v1062 = vunpack.c.l.b16 %v881
        %v1063 = vunpack.c.l.b16 %v882
        %v1064 = vpack.c.b16 %v1017, %v1016
        %v1065 = vpack.c.b16 %v1019, %v1018
        %v1066 = vpack.c.b16 %v1021, %v1020
        %v1067 = vpack.c.b16 %v1023, %v1022
        %v1068 = vpack.c.b16 %v1025, %v1024
        %v1069 = vpack.c.b16 %v1027, %v1026
        %v1070 = vpack.c.b16 %v1029, %v1028
        %v1071 = vpack.c.b16 %v1031, %v1030
        %v1072 = vpack.c.b16 %v1033, %v1032
        %v1073 = vpack.c.b16 %v1035, %v1034
        %v1074 = vpack.c.b16 %v1037, %v1036
        %v1075 = vpack.c.b16 %v1039, %v1038
        %v1076 = vpack.c.b16 %v1041, %v1040
        %v1077 = vpack.c.b16 %v1043, %v1042
        %v1078 = vpack.c.b16 %v1045, %v1044
        %v1079 = vpack.c.b16 %v1047, %v1046
        %v1080 = vpack.c.b16 %v1049, %v1048
        %v1081 = vpack.c.b16 %v1051, %v1050
        %v1082 = vpack.c.b16 %v1053, %v1052
        %v1083 = vpack.c.b16 %v1055, %v1054
        %v1084 = vpack.c.b16 %v1057, %v1056
        %v1085 = vpack.c.b16 %v1059, %v1058
        %v1086 = vpack.c.b16 %v1061, %v1060
        %v1087 = vpack.c.b16 %v1063, %v1062
        %1112 = vmatprep.subr.bf16.mxu0 0
        %1113 = vmatpush1.bf16.msra.mxu0 %v1064
        %1114 = vmatprep.subr.bf16.mxu0 0
        %1115 = vmatpush1.bf16.msra.mxu0 %v1065
        %1116 = vmatprep.subr.bf16.mxu0 0
        %1117 = vmatpush1.bf16.msra.mxu0 %v1066
        %1118 = vmatprep.subr.bf16.mxu0 0
        %1119 = vmatpush1.bf16.msra.mxu0 %v1067
        %1120 = vmatprep.subr.bf16.mxu0 0
        %1121 = vmatpush1.bf16.msra.mxu0 %v1068
        %1122 = vmatprep.subr.bf16.mxu0 0
        %1123 = vmatpush1.bf16.msra.mxu0 %v1069
        %1124 = vmatprep.subr.bf16.mxu0 0
        %1125 = vmatpush1.bf16.msra.mxu0 %v1070
        %1126 = vmatprep.subr.bf16.mxu0 0
        %1127 = vmatpush1.bf16.msra.mxu0 %v1071
        %1128 = vmatprep.subr.bf16.mxu0 0
        %1129 = vmatpush1.bf16.msra.mxu0 %v1072
        %1130 = vmatprep.subr.bf16.mxu0 0
        %1131 = vmatpush1.bf16.msra.mxu0 %v1073
        %1132 = vmatprep.subr.bf16.mxu0 0
        %1133 = vmatpush1.bf16.msra.mxu0 %v1074
        %1134 = vmatprep.subr.bf16.mxu0 0
        %1135 = vmatpush1.bf16.msra.mxu0 %v1075
        %1136 = vmatprep.subr.bf16.mxu0 0
        %1137 = vmatpush1.bf16.msra.mxu0 %v1076
        %1138 = vmatprep.subr.bf16.mxu0 0
        %1139 = vmatpush1.bf16.msra.mxu0 %v1077
        %1140 = vmatprep.subr.bf16.mxu0 0
        %1141 = vmatpush1.bf16.msra.mxu0 %v1078
        %1142 = vmatprep.subr.bf16.mxu0 0
        %1143 = vmatpush1.bf16.msra.mxu0 %v1079
        %1144 = vmatprep.mubr.bf16.mxu0 %v883
        %1145 = vmatmul.mubr.bf16.gmra.mrb[0].mxu0 %v493
        %v1146 = vpop.f32.mrb[0].mxu0
        %v1147 = vadd.f32 0.0, %v1146
        %v1148 = vpop.f32.mrb[0].mxu0
        %v1149 = vpop.f32.mrb[0].mxu0
        %v1150 = vadd.f32 0.0, %v1149
        %v1151 = vpop.f32.mrb[0].mxu0
        %1152 = vmatprep.mubr.bf16.mxu0 %v886
        %1153 = vmatmul.mubr.bf16.gmra.mrb[0].mxu0 %v885
        %v1154 = vpop.f32.mrb[0].mxu0
        %v1155 = vadd.f32 0.0, %v1154
        %v1156 = vpop.f32.mrb[0].mxu0
        %v1157 = vpop.f32.mrb[0].mxu0
        %v1158 = vadd.f32 0.0, %v1157
        %v1159 = vpop.f32.mrb[0].mxu0
        %1160 = vmatprep.mubr.bf16.mxu0 %v889
        %1161 = vmatmul.mubr.bf16.gmra.mrb[0].mxu0 %v888
        %v1162 = vpop.f32.mrb[0].mxu0
        %v1163 = vadd.f32 0.0, %v1162
        %v1164 = vpop.f32.mrb[0].mxu0
        %v1165 = vpop.f32.mrb[0].mxu0
        %v1166 = vadd.f32 0.0, %v1165
        %v1167 = vpop.f32.mrb[0].mxu0
        %1168 = vmatprep.mubr.bf16.mxu0 %v891
        %1169 = vmatmul.mubr.bf16.gmra.mrb[0].mxu0 %v497
        %v1170 = vpop.f32.mrb[0].mxu0
        %v1171 = vadd.f32 0.0, %v1170
        %v1172 = vpop.f32.mrb[0].mxu0
        %v1173 = vpop.f32.mrb[0].mxu0
        %v1174 = vadd.f32 0.0, %v1173
        %v1175 = vpop.f32.mrb[0].mxu0
        %1176 = vmatprep.mubr.bf16.mxu0 %v894
        %1177 = vmatmul.mubr.bf16.gmra.mrb[0].mxu0 %v893
        %v1178 = vpop.f32.mrb[0].mxu0
        %v1179 = vadd.f32 0.0, %v1178
        %v1180 = vpop.f32.mrb[0].mxu0
        %v1181 = vpop.f32.mrb[0].mxu0
        %v1182 = vadd.f32 0.0, %v1181
        %v1183 = vpop.f32.mrb[0].mxu0
        %1184 = vmatprep.mubr.bf16.mxu0 %v897
        %1185 = vmatmul.mubr.bf16.gmra.mrb[0].mxu0 %v896
        %v1186 = vpop.f32.mrb[0].mxu0
        %v1187 = vadd.f32 0.0, %v1186
        %v1188 = vpop.f32.mrb[0].mxu0
        %v1189 = vpop.f32.mrb[0].mxu0
        %v1190 = vadd.f32 0.0, %v1189
        %v1191 = vpop.f32.mrb[0].mxu0
        %1192 = vmatprep.mubr.bf16.mxu0 %v899
        %1193 = vmatmul.mubr.bf16.gmra.mrb[0].mxu0 %v501
        %v1194 = vpop.f32.mrb[0].mxu0
        %v1195 = vadd.f32 0.0, %v1194
        %v1196 = vpop.f32.mrb[0].mxu0
        %v1197 = vpop.f32.mrb[0].mxu0
        %v1198 = vadd.f32 0.0, %v1197
        %v1199 = vpop.f32.mrb[0].mxu0
        %1200 = vmatprep.mubr.bf16.mxu0 %v902
        %1201 = vmatmul.mubr.bf16.gmra.mrb[0].mxu0 %v901
        %v1202 = vpop.f32.mrb[0].mxu0
        %v1203 = vadd.f32 0.0, %v1202
        %v1204 = vpop.f32.mrb[0].mxu0
        %v1205 = vpop.f32.mrb[0].mxu0
        %v1206 = vadd.f32 0.0, %v1205
        %v1207 = vpop.f32.mrb[0].mxu0
        %1208 = vmatprep.mubr.bf16.mxu0 %v905
        %1209 = vmatmul.mubr.bf16.gmra.mrb[0].mxu0 %v904
        %v1210 = vpop.f32.mrb[0].mxu0
        %v1211 = vadd.f32 0.0, %v1210
        %v1212 = vpop.f32.mrb[0].mxu0
        %v1213 = vpop.f32.mrb[0].mxu0
        %v1214 = vadd.f32 0.0, %v1213
        %v1215 = vpop.f32.mrb[0].mxu0
        %1216 = vmatprep.mubr.bf16.mxu0 %v907
        %1217 = vmatmul.mubr.bf16.gmra.mrb[0].mxu0 %v505
        %v1218 = vpop.f32.mrb[0].mxu0
        %v1219 = vadd.f32 0.0, %v1218
        %v1220 = vpop.f32.mrb[0].mxu0
        %v1221 = vpop.f32.mrb[0].mxu0
        %v1222 = vadd.f32 0.0, %v1221
        %v1223 = vpop.f32.mrb[0].mxu0
        %1224 = vmatprep.mubr.bf16.mxu0 %v910
        %1225 = vmatmul.mubr.bf16.gmra.mrb[0].mxu0 %v909
        %v1226 = vpop.f32.mrb[0].mxu0
        %v1227 = vadd.f32 0.0, %v1226
        %v1228 = vpop.f32.mrb[0].mxu0
        %v1229 = vpop.f32.mrb[0].mxu0
        %v1230 = vadd.f32 0.0, %v1229
        %v1231 = vpop.f32.mrb[0].mxu0
        %1232 = vmatprep.mubr.bf16.mxu0 %v913
        %1233 = vmatmul.mubr.bf16.gmra.mrb[0].mxu0 %v912
        %v1234 = vpop.f32.mrb[0].mxu0
        %v1235 = vadd.f32 0.0, %v1234
        %v1236 = vpop.f32.mrb[0].mxu0
        %v1237 = vpop.f32.mrb[0].mxu0
        %v1238 = vadd.f32 0.0, %v1237
        %v1239 = vpop.f32.mrb[0].mxu0
        %1240 = vmatprep.mubr.bf16.mxu0 %v915
        %1241 = vmatmul.mubr.bf16.gmra.mrb[0].mxu0 %v509
        %v1242 = vpop.f32.mrb[0].mxu0
        %v1243 = vadd.f32 0.0, %v1242
        %v1244 = vpop.f32.mrb[0].mxu0
        %v1245 = vpop.f32.mrb[0].mxu0
        %v1246 = vadd.f32 0.0, %v1245
        %v1247 = vpop.f32.mrb[0].mxu0
        %1248 = vmatprep.mubr.bf16.mxu0 %v918
        %1249 = vmatmul.mubr.bf16.gmra.mrb[0].mxu0 %v917
        %v1250 = vpop.f32.mrb[0].mxu0
        %v1251 = vadd.f32 0.0, %v1250
        %v1252 = vpop.f32.mrb[0].mxu0
        %v1253 = vpop.f32.mrb[0].mxu0
        %v1254 = vadd.f32 0.0, %v1253
        %v1255 = vpop.f32.mrb[0].mxu0
        %1256 = vmatprep.mubr.bf16.mxu0 %v921
        %1257 = vmatmul.mubr.bf16.gmra.mrb[0].mxu0 %v920
        %v1258 = vpop.f32.mrb[0].mxu0
        %v1259 = vadd.f32 0.0, %v1258
        %v1260 = vpop.f32.mrb[0].mxu0
        %v1261 = vpop.f32.mrb[0].mxu0
        %v1262 = vadd.f32 0.0, %v1261
        %v1263 = vpop.f32.mrb[0].mxu0
        %1264 = vdwg.mxu0
        %1265 = vmatprep.subr.bf16.mxu0 0
        %1266 = vmatpush1.bf16.msra.mxu0 %v1080
        %1267 = vmatprep.subr.bf16.mxu0 0
        %1268 = vmatpush1.bf16.msra.mxu0 %v1081
        %1269 = vmatprep.subr.bf16.mxu0 0
        %1270 = vmatpush1.bf16.msra.mxu0 %v1082
        %1271 = vmatprep.subr.bf16.mxu0 0
        %1272 = vmatpush1.bf16.msra.mxu0 %v1083
        %1273 = vmatprep.subr.bf16.mxu0 0
        %1274 = vmatpush1.bf16.msra.mxu0 %v1084
        %1275 = vmatprep.subr.bf16.mxu0 0
        %1276 = vmatpush1.bf16.msra.mxu0 %v1085
        %1277 = vmatprep.subr.bf16.mxu0 0
        %1278 = vmatpush1.bf16.msra.mxu0 %v1086
        %1279 = vmatprep.subr.bf16.mxu0 0
        %1280 = vmatpush1.bf16.msra.mxu0 %v1087
        %1281 = vmatprep.subr.bf16.mxu0 0
        %1282 = vmatpush1.bf16.msra.mxu0 0
        %1283 = vmatprep.subr.bf16.mxu0 0
        %1284 = vmatpush1.bf16.msra.mxu0 0
        %1285 = vmatprep.subr.bf16.mxu0 0
        %1286 = vmatpush1.bf16.msra.mxu0 0
        %1287 = vmatprep.subr.bf16.mxu0 0
        %1288 = vmatpush1.bf16.msra.mxu0 0
        %1289 = vmatprep.subr.bf16.mxu0 0
        %1290 = vmatpush1.bf16.msra.mxu0 0
        %1291 = vmatprep.subr.bf16.mxu0 0
        %1292 = vmatpush1.bf16.msra.mxu0 0
        %1293 = vmatprep.subr.bf16.mxu0 0
        %1294 = vmatpush1.bf16.msra.mxu0 0
        %1295 = vmatprep.subr.bf16.mxu0 0
        %1296 = vmatpush1.bf16.msra.mxu0 0
        %1297 = vmatprep.mubr.bf16.mxu0 0
        %1298 = vmatmul.mubr.bf16.gmra.mrb[0].mxu0 %v884
        %v1299 = vpop.f32.mrb[0].mxu0
        %v1300 = vadd.f32 %v1147, %v1299
        %v1301 = vpop.f32.mrb[0].mxu0
        %v1302 = vpop.f32.mrb[0].mxu0
        %v1303 = vadd.f32 %v1150, %v1302
        %v1304 = vpop.f32.mrb[0].mxu0
        %1305 = vmatprep.mubr.bf16.mxu0 0
        %1306 = vmatmul.mubr.bf16.gmra.mrb[0].mxu0 %v887
        %v1307 = vpop.f32.mrb[0].mxu0
        %v1308 = vadd.f32 %v1155, %v1307
        %v1309 = vpop.f32.mrb[0].mxu0
        %v1310 = vpop.f32.mrb[0].mxu0
        %v1311 = vadd.f32 %v1158, %v1310
        %v1312 = vpop.f32.mrb[0].mxu0
        %1313 = vmatprep.mubr.bf16.mxu0 0
        %1314 = vmatmul.mubr.bf16.gmra.mrb[0].mxu0 %v890
        %v1315 = vpop.f32.mrb[0].mxu0
        %v1316 = vadd.f32 %v1163, %v1315
        %v1317 = vpop.f32.mrb[0].mxu0
        %v1318 = vpop.f32.mrb[0].mxu0
        %v1319 = vadd.f32 %v1166, %v1318
        %v1320 = vpop.f32.mrb[0].mxu0
        %1321 = vmatprep.mubr.bf16.mxu0 0
        %1322 = vmatmul.mubr.bf16.gmra.mrb[0].mxu0 %v892
        %v1323 = vpop.f32.mrb[0].mxu0
        %v1324 = vadd.f32 %v1171, %v1323
        %v1325 = vpop.f32.mrb[0].mxu0
        %v1326 = vpop.f32.mrb[0].mxu0
        %v1327 = vadd.f32 %v1174, %v1326
        %v1328 = vpop.f32.mrb[0].mxu0
        %1329 = vmatprep.mubr.bf16.mxu0 0
        %1330 = vmatmul.mubr.bf16.gmra.mrb[0].mxu0 %v895
        %v1331 = vpop.f32.mrb[0].mxu0
        %v1332 = vadd.f32 %v1179, %v1331
        %v1333 = vpop.f32.mrb[0].mxu0
        %v1334 = vpop.f32.mrb[0].mxu0
        %v1335 = vadd.f32 %v1182, %v1334
        %v1336 = vpop.f32.mrb[0].mxu0
        %1337 = vmatprep.mubr.bf16.mxu0 0
        %1338 = vmatmul.mubr.bf16.gmra.mrb[0].mxu0 %v898
        %v1339 = vpop.f32.mrb[0].mxu0
        %v1340 = vadd.f32 %v1187, %v1339
        %v1341 = vpop.f32.mrb[0].mxu0
        %v1342 = vpop.f32.mrb[0].mxu0
        %v1343 = vadd.f32 %v1190, %v1342
        %v1344 = vpop.f32.mrb[0].mxu0
        %1345 = vmatprep.mubr.bf16.mxu0 0
        %1346 = vmatmul.mubr.bf16.gmra.mrb[0].mxu0 %v900
        %v1347 = vpop.f32.mrb[0].mxu0
        %v1348 = vadd.f32 %v1195, %v1347
        %v1349 = vpop.f32.mrb[0].mxu0
        %v1350 = vpop.f32.mrb[0].mxu0
        %v1351 = vadd.f32 %v1198, %v1350
        %v1352 = vpop.f32.mrb[0].mxu0
        %1353 = vmatprep.mubr.bf16.mxu0 0
        %1354 = vmatmul.mubr.bf16.gmra.mrb[0].mxu0 %v903
        %v1355 = vpop.f32.mrb[0].mxu0
        %v1356 = vadd.f32 %v1203, %v1355
        %v1357 = vpop.f32.mrb[0].mxu0
        %v1358 = vpop.f32.mrb[0].mxu0
        %v1359 = vadd.f32 %v1206, %v1358
        %v1360 = vpop.f32.mrb[0].mxu0
        %1361 = vmatprep.mubr.bf16.mxu0 0
        %1362 = vmatmul.mubr.bf16.gmra.mrb[0].mxu0 %v906
        %v1363 = vpop.f32.mrb[0].mxu0
        %v1364 = vadd.f32 %v1211, %v1363
        %v1365 = vpop.f32.mrb[0].mxu0
        %v1366 = vpop.f32.mrb[0].mxu0
        %v1367 = vadd.f32 %v1214, %v1366
        %v1368 = vpop.f32.mrb[0].mxu0
        %1369 = vmatprep.mubr.bf16.mxu0 0
        %1370 = vmatmul.mubr.bf16.gmra.mrb[0].mxu0 %v908
        %v1371 = vpop.f32.mrb[0].mxu0
        %v1372 = vadd.f32 %v1219, %v1371
        %v1373 = vpop.f32.mrb[0].mxu0
        %v1374 = vpop.f32.mrb[0].mxu0
        %v1375 = vadd.f32 %v1222, %v1374
        %v1376 = vpop.f32.mrb[0].mxu0
        %1377 = vmatprep.mubr.bf16.mxu0 0
        %1378 = vmatmul.mubr.bf16.gmra.mrb[0].mxu0 %v911
        %v1379 = vpop.f32.mrb[0].mxu0
        %v1380 = vadd.f32 %v1227, %v1379
        %v1381 = vpop.f32.mrb[0].mxu0
        %v1382 = vpop.f32.mrb[0].mxu0
        %v1383 = vadd.f32 %v1230, %v1382
        %v1384 = vpop.f32.mrb[0].mxu0
        %1385 = vmatprep.mubr.bf16.mxu0 0
        %1386 = vmatmul.mubr.bf16.gmra.mrb[0].mxu0 %v914
        %v1387 = vpop.f32.mrb[0].mxu0
        %v1388 = vadd.f32 %v1235, %v1387
        %v1389 = vpop.f32.mrb[0].mxu0
        %v1390 = vpop.f32.mrb[0].mxu0
        %v1391 = vadd.f32 %v1238, %v1390
        %v1392 = vpop.f32.mrb[0].mxu0
        %1393 = vmatprep.mubr.bf16.mxu0 0
        %1394 = vmatmul.mubr.bf16.gmra.mrb[0].mxu0 %v916
        %v1395 = vpop.f32.mrb[0].mxu0
        %v1396 = vadd.f32 %v1243, %v1395
        %v1397 = vpop.f32.mrb[0].mxu0
        %v1398 = vpop.f32.mrb[0].mxu0
        %v1399 = vadd.f32 %v1246, %v1398
        %v1400 = vpop.f32.mrb[0].mxu0
        %1401 = vmatprep.mubr.bf16.mxu0 0
        %1402 = vmatmul.mubr.bf16.gmra.mrb[0].mxu0 %v919
        %v1403 = vpop.f32.mrb[0].mxu0
        %v1404 = vadd.f32 %v1251, %v1403
        %v1405 = vpop.f32.mrb[0].mxu0
        %v1406 = vpop.f32.mrb[0].mxu0
        %v1407 = vadd.f32 %v1254, %v1406
        %v1408 = vpop.f32.mrb[0].mxu0
        %1409 = vmatprep.mubr.bf16.mxu0 0
        %1410 = vmatmul.mubr.bf16.gmra.mrb[0].mxu0 %v922
        %v1411 = vpop.f32.mrb[0].mxu0
        %v1412 = vadd.f32 %v1259, %v1411
        %v1413 = vpop.f32.mrb[0].mxu0
        %v1414 = vpop.f32.mrb[0].mxu0
        %v1415 = vadd.f32 %v1262, %v1414
        %v1416 = vpop.f32.mrb[0].mxu0
        %1417 = vdwg.mxu0
        %v1418 = vpack.c.b16 %v695, %v693
        %v1419 = vpack.c.b16 %v696, %v694
        %v1420 = vpack.c.b16 %v444, %v443
        %v1421 = vpack.c.b16 %v699, %v697
        %v1422 = vpack.c.b16 %v700, %v698
        %v1423 = vpack.c.b16 %v446, %v445
        %v1424 = vpack.c.b16 %v703, %v701
        %v1425 = vpack.c.b16 %v704, %v702
        %v1426 = vpack.c.b16 %v707, %v705
        %v1427 = vpack.c.b16 %v708, %v706
        %v1428 = vpack.c.b16 %v450, %v449
        %v1429 = vpack.c.b16 %v711, %v709
        %v1430 = vpack.c.b16 %v712, %v710
        %v1431 = vpack.c.b16 %v452, %v451
        %v1432 = vpack.c.b16 %v715, %v713
        %v1433 = vpack.c.b16 %v716, %v714
        %v1434 = vpack.c.b16 %v719, %v717
        %v1435 = vpack.c.b16 %v720, %v718
        %v1436 = vpack.c.b16 %v456, %v455
        %v1437 = vpack.c.b16 %v723, %v721
        %v1438 = vpack.c.b16 %v724, %v722
        %v1439 = vpack.c.b16 %v458, %v457
        %v1440 = vpack.c.b16 %v727, %v725
        %v1441 = vpack.c.b16 %v728, %v726
        %v1442 = vpack.c.b16 %v731, %v729
        %v1443 = vpack.c.b16 %v732, %v730
        %v1444 = vpack.c.b16 %v462, %v461
        %v1445 = vpack.c.b16 %v735, %v733
        %v1446 = vpack.c.b16 %v736, %v734
        %v1447 = vpack.c.b16 %v464, %v463
        %v1448 = vpack.c.b16 %v739, %v737
        %v1449 = vpack.c.b16 %v740, %v738
        %v1450 = vpack.c.b16 %v743, %v741
        %v1451 = vpack.c.b16 %v744, %v742
        %v1452 = vpack.c.b16 %v468, %v467
        %v1453 = vpack.c.b16 %v747, %v745
        %v1454 = vpack.c.b16 %v748, %v746
        %v1455 = vpack.c.b16 %v470, %v469
        %v1456 = vpack.c.b16 %v751, %v749
        %v1457 = vpack.c.b16 %v752, %v750
        %v1551 = vunpack.c.l.b16 %v753
        %v1552 = vunpack.c.l.b16 %v754
        %v1553 = vunpack.c.l.b16 %v755
        %v1554 = vunpack.c.l.b16 %v756
        %v1555 = vunpack.c.l.b16 %v757
        %v1556 = vunpack.c.l.b16 %v758
        %v1557 = vunpack.c.l.b16 %v759
        %v1558 = vunpack.c.l.b16 %v760
        %v1559 = vunpack.c.l.b16 %v761
        %v1560 = vunpack.c.l.b16 %v762
        %v1561 = vunpack.c.l.b16 %v763
        %v1562 = vunpack.c.l.b16 %v764
        %v1563 = vunpack.c.l.b16 %v765
        %v1564 = vunpack.c.l.b16 %v766
        %v1565 = vunpack.c.l.b16 %v767
        %v1566 = vunpack.c.l.b16 %v768
        %v1567 = vunpack.c.l.b16 %v769
        %v1568 = vunpack.c.l.b16 %v770
        %v1569 = vunpack.c.l.b16 %v771
        %v1570 = vunpack.c.l.b16 %v772
        %v1571 = vunpack.c.l.b16 %v773
        %v1572 = vunpack.c.l.b16 %v774
        %v1573 = vunpack.c.l.b16 %v775
        %v1574 = vunpack.c.l.b16 %v776
        %v1575 = vunpack.c.l.b16 %v777
        %v1576 = vunpack.c.l.b16 %v778
        %v1577 = vunpack.c.l.b16 %v779
        %v1578 = vunpack.c.l.b16 %v780
        %v1579 = vunpack.c.l.b16 %v781
        %v1580 = vunpack.c.l.b16 %v782
        %v1581 = vunpack.c.l.b16 %v783
        %v1582 = vunpack.c.l.b16 %v784
        %v1583 = vunpack.c.l.b16 %v785
        %v1584 = vunpack.c.l.b16 %v786
        %v1585 = vunpack.c.l.b16 %v787
        %v1586 = vunpack.c.l.b16 %v788
        %v1587 = vunpack.c.l.b16 %v789
        %v1588 = vunpack.c.l.b16 %v790
        %v1589 = vunpack.c.l.b16 %v791
        %v1590 = vunpack.c.l.b16 %v792
        %v1591 = vunpack.c.l.b16 %v793
        %v1592 = vunpack.c.l.b16 %v794
        %v1593 = vunpack.c.l.b16 %v795
        %v1594 = vunpack.c.l.b16 %v796
        %v1595 = vunpack.c.l.b16 %v797
        %v1596 = vunpack.c.l.b16 %v798
        %v1597 = vunpack.c.l.b16 %v799
        %v1598 = vunpack.c.l.b16 %v800
        %v1599 = vpack.c.b16 %v1552, %v1551
        %v1600 = vpack.c.b16 %v1554, %v1553
        %v1601 = vpack.c.b16 %v1556, %v1555
        %v1602 = vpack.c.b16 %v1558, %v1557
        %v1603 = vpack.c.b16 %v1560, %v1559
        %v1604 = vpack.c.b16 %v1562, %v1561
        %v1605 = vpack.c.b16 %v1564, %v1563
        %v1606 = vpack.c.b16 %v1566, %v1565
        %v1607 = vpack.c.b16 %v1568, %v1567
        %v1608 = vpack.c.b16 %v1570, %v1569
        %v1609 = vpack.c.b16 %v1572, %v1571
        %v1610 = vpack.c.b16 %v1574, %v1573
        %v1611 = vpack.c.b16 %v1576, %v1575
        %v1612 = vpack.c.b16 %v1578, %v1577
        %v1613 = vpack.c.b16 %v1580, %v1579
        %v1614 = vpack.c.b16 %v1582, %v1581
        %v1615 = vpack.c.b16 %v1584, %v1583
        %v1616 = vpack.c.b16 %v1586, %v1585
        %v1617 = vpack.c.b16 %v1588, %v1587
        %v1618 = vpack.c.b16 %v1590, %v1589
        %v1619 = vpack.c.b16 %v1592, %v1591
        %v1620 = vpack.c.b16 %v1594, %v1593
        %v1621 = vpack.c.b16 %v1596, %v1595
        %v1622 = vpack.c.b16 %v1598, %v1597
        %1647 = vmatprep.subr.bf16.mxu0 0
        %1648 = vmatpush1.bf16.msra.mxu0 %v1599
        %1649 = vmatprep.subr.bf16.mxu0 0
        %1650 = vmatpush1.bf16.msra.mxu0 %v1600
        %1651 = vmatprep.subr.bf16.mxu0 0
        %1652 = vmatpush1.bf16.msra.mxu0 %v1601
        %1653 = vmatprep.subr.bf16.mxu0 0
        %1654 = vmatpush1.bf16.msra.mxu0 %v1602
        %1655 = vmatprep.subr.bf16.mxu0 0
        %1656 = vmatpush1.bf16.msra.mxu0 %v1603
        %1657 = vmatprep.subr.bf16.mxu0 0
        %1658 = vmatpush1.bf16.msra.mxu0 %v1604
        %1659 = vmatprep.subr.bf16.mxu0 0
        %1660 = vmatpush1.bf16.msra.mxu0 %v1605
        %1661 = vmatprep.subr.bf16.mxu0 0
        %1662 = vmatpush1.bf16.msra.mxu0 %v1606
        %1663 = vmatprep.subr.bf16.mxu0 0
        %1664 = vmatpush1.bf16.msra.mxu0 %v1607
        %1665 = vmatprep.subr.bf16.mxu0 0
        %1666 = vmatpush1.bf16.msra.mxu0 %v1608
        %1667 = vmatprep.subr.bf16.mxu0 0
        %1668 = vmatpush1.bf16.msra.mxu0 %v1609
        %1669 = vmatprep.subr.bf16.mxu0 0
        %1670 = vmatpush1.bf16.msra.mxu0 %v1610
        %1671 = vmatprep.subr.bf16.mxu0 0
        %1672 = vmatpush1.bf16.msra.mxu0 %v1611
        %1673 = vmatprep.subr.bf16.mxu0 0
        %1674 = vmatpush1.bf16.msra.mxu0 %v1612
        %1675 = vmatprep.subr.bf16.mxu0 0
        %1676 = vmatpush1.bf16.msra.mxu0 %v1613
        %1677 = vmatprep.subr.bf16.mxu0 0
        %1678 = vmatpush1.bf16.msra.mxu0 %v1614
        %1679 = vmatprep.mubr.bf16.mxu0 %v1418
        %1680 = vmatmul.mubr.bf16.gmra.mrb[0].mxu0 %v491
        %v1681 = vpop.f32.mrb[0].mxu0
        %v1682 = vadd.f32 %v1300, %v1681
        %v1683 = vpop.f32.mrb[0].mxu0
        %v1684 = vpop.f32.mrb[0].mxu0
        %v1685 = vadd.f32 %v1303, %v1684
        %v1686 = vpop.f32.mrb[0].mxu0
        %1687 = vmatprep.mubr.bf16.mxu0 %v1421
        %1688 = vmatmul.mubr.bf16.gmra.mrb[0].mxu0 %v1420
        %v1689 = vpop.f32.mrb[0].mxu0
        %v1690 = vadd.f32 %v1308, %v1689
        %v1691 = vpop.f32.mrb[0].mxu0
        %v1692 = vpop.f32.mrb[0].mxu0
        %v1693 = vadd.f32 %v1311, %v1692
        %v1694 = vpop.f32.mrb[0].mxu0
        %1695 = vmatprep.mubr.bf16.mxu0 %v1424
        %1696 = vmatmul.mubr.bf16.gmra.mrb[0].mxu0 %v1423
        %v1697 = vpop.f32.mrb[0].mxu0
        %v1698 = vadd.f32 %v1316, %v1697
        %v1699 = vpop.f32.mrb[0].mxu0
        %v1700 = vpop.f32.mrb[0].mxu0
        %v1701 = vadd.f32 %v1319, %v1700
        %v1702 = vpop.f32.mrb[0].mxu0
        %1703 = vmatprep.mubr.bf16.mxu0 %v1426
        %1704 = vmatmul.mubr.bf16.gmra.mrb[0].mxu0 %v495
        %v1705 = vpop.f32.mrb[0].mxu0
        %v1706 = vadd.f32 %v1324, %v1705
        %v1707 = vpop.f32.mrb[0].mxu0
        %v1708 = vpop.f32.mrb[0].mxu0
        %v1709 = vadd.f32 %v1327, %v1708
        %v1710 = vpop.f32.mrb[0].mxu0
        %1711 = vmatprep.mubr.bf16.mxu0 %v1429
        %1712 = vmatmul.mubr.bf16.gmra.mrb[0].mxu0 %v1428
        %v1713 = vpop.f32.mrb[0].mxu0
        %v1714 = vadd.f32 %v1332, %v1713
        %v1715 = vpop.f32.mrb[0].mxu0
        %v1716 = vpop.f32.mrb[0].mxu0
        %v1717 = vadd.f32 %v1335, %v1716
        %v1718 = vpop.f32.mrb[0].mxu0
        %1719 = vmatprep.mubr.bf16.mxu0 %v1432
        %1720 = vmatmul.mubr.bf16.gmra.mrb[0].mxu0 %v1431
        %v1721 = vpop.f32.mrb[0].mxu0
        %v1722 = vadd.f32 %v1340, %v1721
        %v1723 = vpop.f32.mrb[0].mxu0
        %v1724 = vpop.f32.mrb[0].mxu0
        %v1725 = vadd.f32 %v1343, %v1724
        %v1726 = vpop.f32.mrb[0].mxu0
        %1727 = vmatprep.mubr.bf16.mxu0 %v1434
        %1728 = vmatmul.mubr.bf16.gmra.mrb[0].mxu0 %v499
        %v1729 = vpop.f32.mrb[0].mxu0
        %v1730 = vadd.f32 %v1348, %v1729
        %v1731 = vpop.f32.mrb[0].mxu0
        %v1732 = vpop.f32.mrb[0].mxu0
        %v1733 = vadd.f32 %v1351, %v1732
        %v1734 = vpop.f32.mrb[0].mxu0
        %1735 = vmatprep.mubr.bf16.mxu0 %v1437
        %1736 = vmatmul.mubr.bf16.gmra.mrb[0].mxu0 %v1436
        %v1737 = vpop.f32.mrb[0].mxu0
        %v1738 = vadd.f32 %v1356, %v1737
        %v1739 = vpop.f32.mrb[0].mxu0
        %v1740 = vpop.f32.mrb[0].mxu0
        %v1741 = vadd.f32 %v1359, %v1740
        %v1742 = vpop.f32.mrb[0].mxu0
        %1743 = vmatprep.mubr.bf16.mxu0 %v1440
        %1744 = vmatmul.mubr.bf16.gmra.mrb[0].mxu0 %v1439
        %v1745 = vpop.f32.mrb[0].mxu0
        %v1746 = vadd.f32 %v1364, %v1745
        %v1747 = vpop.f32.mrb[0].mxu0
        %v1748 = vpop.f32.mrb[0].mxu0
        %v1749 = vadd.f32 %v1367, %v1748
        %v1750 = vpop.f32.mrb[0].mxu0
        %1751 = vmatprep.mubr.bf16.mxu0 %v1442
        %1752 = vmatmul.mubr.bf16.gmra.mrb[0].mxu0 %v503
        %v1753 = vpop.f32.mrb[0].mxu0
        %v1754 = vadd.f32 %v1372, %v1753
        %v1755 = vpop.f32.mrb[0].mxu0
        %v1756 = vpop.f32.mrb[0].mxu0
        %v1757 = vadd.f32 %v1375, %v1756
        %v1758 = vpop.f32.mrb[0].mxu0
        %1759 = vmatprep.mubr.bf16.mxu0 %v1445
        %1760 = vmatmul.mubr.bf16.gmra.mrb[0].mxu0 %v1444
        %v1761 = vpop.f32.mrb[0].mxu0
        %v1762 = vadd.f32 %v1380, %v1761
        %v1763 = vpop.f32.mrb[0].mxu0
        %v1764 = vpop.f32.mrb[0].mxu0
        %v1765 = vadd.f32 %v1383, %v1764
        %v1766 = vpop.f32.mrb[0].mxu0
        %1767 = vmatprep.mubr.bf16.mxu0 %v1448
        %1768 = vmatmul.mubr.bf16.gmra.mrb[0].mxu0 %v1447
        %v1769 = vpop.f32.mrb[0].mxu0
        %v1770 = vadd.f32 %v1388, %v1769
        %v1771 = vpop.f32.mrb[0].mxu0
        %v1772 = vpop.f32.mrb[0].mxu0
        %v1773 = vadd.f32 %v1391, %v1772
        %v1774 = vpop.f32.mrb[0].mxu0
        %1775 = vmatprep.mubr.bf16.mxu0 %v1450
        %1776 = vmatmul.mubr.bf16.gmra.mrb[0].mxu0 %v507
        %v1777 = vpop.f32.mrb[0].mxu0
        %v1778 = vadd.f32 %v1396, %v1777
        %v1779 = vpop.f32.mrb[0].mxu0
        %v1780 = vpop.f32.mrb[0].mxu0
        %v1781 = vadd.f32 %v1399, %v1780
        %v1782 = vpop.f32.mrb[0].mxu0
        %1783 = vmatprep.mubr.bf16.mxu0 %v1453
        %1784 = vmatmul.mubr.bf16.gmra.mrb[0].mxu0 %v1452
        %v1785 = vpop.f32.mrb[0].mxu0
        %v1786 = vadd.f32 %v1404, %v1785
        %v1787 = vpop.f32.mrb[0].mxu0
        %v1788 = vpop.f32.mrb[0].mxu0
        %v1789 = vadd.f32 %v1407, %v1788
        %v1790 = vpop.f32.mrb[0].mxu0
        %1791 = vmatprep.mubr.bf16.mxu0 %v1456
        %1792 = vmatmul.mubr.bf16.gmra.mrb[0].mxu0 %v1455
        %v1793 = vpop.f32.mrb[0].mxu0
        %v1794 = vadd.f32 %v1412, %v1793
        %v1795 = vpop.f32.mrb[0].mxu0
        %v1796 = vpop.f32.mrb[0].mxu0
        %v1797 = vadd.f32 %v1415, %v1796
        %v1798 = vpop.f32.mrb[0].mxu0
        %1799 = vdwg.mxu0
        %1800 = vmatprep.subr.bf16.mxu0 0
        %1801 = vmatpush1.bf16.msra.mxu0 %v1615
        %1802 = vmatprep.subr.bf16.mxu0 0
        %1803 = vmatpush1.bf16.msra.mxu0 %v1616
        %1804 = vmatprep.subr.bf16.mxu0 0
        %1805 = vmatpush1.bf16.msra.mxu0 %v1617
        %1806 = vmatprep.subr.bf16.mxu0 0
        %1807 = vmatpush1.bf16.msra.mxu0 %v1618
        %1808 = vmatprep.subr.bf16.mxu0 0
        %1809 = vmatpush1.bf16.msra.mxu0 %v1619
        %1810 = vmatprep.subr.bf16.mxu0 0
        %1811 = vmatpush1.bf16.msra.mxu0 %v1620
        %1812 = vmatprep.subr.bf16.mxu0 0
        %1813 = vmatpush1.bf16.msra.mxu0 %v1621
        %1814 = vmatprep.subr.bf16.mxu0 0
        %1815 = vmatpush1.bf16.msra.mxu0 %v1622
        %1816 = vmatprep.subr.bf16.mxu0 0
        %1817 = vmatpush1.bf16.msra.mxu0 0
        %1818 = vmatprep.subr.bf16.mxu0 0
        %1819 = vmatpush1.bf16.msra.mxu0 0
        %1820 = vmatprep.subr.bf16.mxu0 0
        %1821 = vmatpush1.bf16.msra.mxu0 0
        %1822 = vmatprep.subr.bf16.mxu0 0
        %1823 = vmatpush1.bf16.msra.mxu0 0
        %1824 = vmatprep.subr.bf16.mxu0 0
        %1825 = vmatpush1.bf16.msra.mxu0 0
        %1826 = vmatprep.subr.bf16.mxu0 0
        %1827 = vmatpush1.bf16.msra.mxu0 0
        %1828 = vmatprep.subr.bf16.mxu0 0
        %1829 = vmatpush1.bf16.msra.mxu0 0
        %1830 = vmatprep.subr.bf16.mxu0 0
        %1831 = vmatpush1.bf16.msra.mxu0 0
        %1832 = vmatprep.mubr.bf16.mxu0 0
        %1833 = vmatmul.mubr.bf16.gmra.mrb[0].mxu0 %v1419
        %v1834 = vpop.f32.mrb[0].mxu0
        %v1835 = vadd.f32 %v1682, %v1834
        %v1836 = vpop.f32.mrb[0].mxu0
        %v1837 = vpop.f32.mrb[0].mxu0
        %v1838 = vadd.f32 %v1685, %v1837
        %v1839 = vpop.f32.mrb[0].mxu0
        %1840 = vmatprep.mubr.bf16.mxu0 0
        %1841 = vmatmul.mubr.bf16.gmra.mrb[0].mxu0 %v1422
        %v1842 = vpop.f32.mrb[0].mxu0
        %v1843 = vadd.f32 %v1690, %v1842
        %v1844 = vpop.f32.mrb[0].mxu0
        %v1845 = vpop.f32.mrb[0].mxu0
        %v1846 = vadd.f32 %v1693, %v1845
        %v1847 = vpop.f32.mrb[0].mxu0
        %1848 = vmatprep.mubr.bf16.mxu0 0
        %1849 = vmatmul.mubr.bf16.gmra.mrb[0].mxu0 %v1425
        %v1850 = vpop.f32.mrb[0].mxu0
        %v1851 = vadd.f32 %v1698, %v1850
        %v1852 = vpop.f32.mrb[0].mxu0
        %v1853 = vpop.f32.mrb[0].mxu0
        %v1854 = vadd.f32 %v1701, %v1853
        %v1855 = vpop.f32.mrb[0].mxu0
        %1856 = vmatprep.mubr.bf16.mxu0 0
        %1857 = vmatmul.mubr.bf16.gmra.mrb[0].mxu0 %v1427
        %v1858 = vpop.f32.mrb[0].mxu0
        %v1859 = vadd.f32 %v1706, %v1858
        %v1860 = vpop.f32.mrb[0].mxu0
        %v1861 = vpop.f32.mrb[0].mxu0
        %v1862 = vadd.f32 %v1709, %v1861
        %v1863 = vpop.f32.mrb[0].mxu0
        %1864 = vmatprep.mubr.bf16.mxu0 0
        %1865 = vmatmul.mubr.bf16.gmra.mrb[0].mxu0 %v1430
        %v1866 = vpop.f32.mrb[0].mxu0
        %v1867 = vadd.f32 %v1714, %v1866
        %v1868 = vpop.f32.mrb[0].mxu0
        %v1869 = vpop.f32.mrb[0].mxu0
        %v1870 = vadd.f32 %v1717, %v1869
        %v1871 = vpop.f32.mrb[0].mxu0
        %1872 = vmatprep.mubr.bf16.mxu0 0
        %1873 = vmatmul.mubr.bf16.gmra.mrb[0].mxu0 %v1433
        %v1874 = vpop.f32.mrb[0].mxu0
        %v1875 = vadd.f32 %v1722, %v1874
        %v1876 = vpop.f32.mrb[0].mxu0
        %v1877 = vpop.f32.mrb[0].mxu0
        %v1878 = vadd.f32 %v1725, %v1877
        %v1879 = vpop.f32.mrb[0].mxu0
        %1880 = vmatprep.mubr.bf16.mxu0 0
        %1881 = vmatmul.mubr.bf16.gmra.mrb[0].mxu0 %v1435
        %v1882 = vpop.f32.mrb[0].mxu0
        %v1883 = vadd.f32 %v1730, %v1882
        %v1884 = vpop.f32.mrb[0].mxu0
        %v1885 = vpop.f32.mrb[0].mxu0
        %v1886 = vadd.f32 %v1733, %v1885
        %v1887 = vpop.f32.mrb[0].mxu0
        %1888 = vmatprep.mubr.bf16.mxu0 0
        %1889 = vmatmul.mubr.bf16.gmra.mrb[0].mxu0 %v1438
        %v1890 = vpop.f32.mrb[0].mxu0
        %v1891 = vadd.f32 %v1738, %v1890
        %v1892 = vpop.f32.mrb[0].mxu0
        %v1893 = vpop.f32.mrb[0].mxu0
        %v1894 = vadd.f32 %v1741, %v1893
        %v1895 = vpop.f32.mrb[0].mxu0
        %1896 = vmatprep.mubr.bf16.mxu0 0
        %1897 = vmatmul.mubr.bf16.gmra.mrb[0].mxu0 %v1441
        %v1898 = vpop.f32.mrb[0].mxu0
        %v1899 = vadd.f32 %v1746, %v1898
        %v1900 = vpop.f32.mrb[0].mxu0
        %v1901 = vpop.f32.mrb[0].mxu0
        %v1902 = vadd.f32 %v1749, %v1901
        %v1903 = vpop.f32.mrb[0].mxu0
        %1904 = vmatprep.mubr.bf16.mxu0 0
        %1905 = vmatmul.mubr.bf16.gmra.mrb[0].mxu0 %v1443
        %v1906 = vpop.f32.mrb[0].mxu0
        %v1907 = vadd.f32 %v1754, %v1906
        %v1908 = vpop.f32.mrb[0].mxu0
        %v1909 = vpop.f32.mrb[0].mxu0
        %v1910 = vadd.f32 %v1757, %v1909
        %v1911 = vpop.f32.mrb[0].mxu0
        %1912 = vmatprep.mubr.bf16.mxu0 0
        %1913 = vmatmul.mubr.bf16.gmra.mrb[0].mxu0 %v1446
        %v1914 = vpop.f32.mrb[0].mxu0
        %v1915 = vadd.f32 %v1762, %v1914
        %v1916 = vpop.f32.mrb[0].mxu0
        %v1917 = vpop.f32.mrb[0].mxu0
        %v1918 = vadd.f32 %v1765, %v1917
        %v1919 = vpop.f32.mrb[0].mxu0
        %1920 = vmatprep.mubr.bf16.mxu0 0
        %1921 = vmatmul.mubr.bf16.gmra.mrb[0].mxu0 %v1449
        %v1922 = vpop.f32.mrb[0].mxu0
        %v1923 = vadd.f32 %v1770, %v1922
        %v1924 = vpop.f32.mrb[0].mxu0
        %v1925 = vpop.f32.mrb[0].mxu0
        %v1926 = vadd.f32 %v1773, %v1925
        %v1927 = vpop.f32.mrb[0].mxu0
        %1928 = vmatprep.mubr.bf16.mxu0 0
        %1929 = vmatmul.mubr.bf16.gmra.mrb[0].mxu0 %v1451
        %v1930 = vpop.f32.mrb[0].mxu0
        %v1931 = vadd.f32 %v1778, %v1930
        %v1932 = vpop.f32.mrb[0].mxu0
        %v1933 = vpop.f32.mrb[0].mxu0
        %v1934 = vadd.f32 %v1781, %v1933
        %v1935 = vpop.f32.mrb[0].mxu0
        %1936 = vmatprep.mubr.bf16.mxu0 0
        %1937 = vmatmul.mubr.bf16.gmra.mrb[0].mxu0 %v1454
        %v1938 = vpop.f32.mrb[0].mxu0
        %v1939 = vadd.f32 %v1786, %v1938
        %v1940 = vpop.f32.mrb[0].mxu0
        %v1941 = vpop.f32.mrb[0].mxu0
        %v1942 = vadd.f32 %v1789, %v1941
        %v1943 = vpop.f32.mrb[0].mxu0
        %1944 = vmatprep.mubr.bf16.mxu0 0
        %1945 = vmatmul.mubr.bf16.gmra.mrb[0].mxu0 %v1457
        %v1946 = vpop.f32.mrb[0].mxu0
        %v1947 = vadd.f32 %v1794, %v1946
        %v1948 = vpop.f32.mrb[0].mxu0
        %v1949 = vpop.f32.mrb[0].mxu0
        %v1950 = vadd.f32 %v1797, %v1949
        %v1951 = vpop.f32.mrb[0].mxu0
        %1952 = vdwg.mxu0
        %v1956 = vunpack.c.l.b16 %v407
        %v1957 = vunpack.c.l.b16 %v408
        %v1958 = vunpack.c.l.b16 %v409
        %v1960 = vunpack.c.l.b16 %v410
        %v1961 = vpack.c.b16 %v1957, %v1956
        %v1962 = vpack.c.b16 %v1960, %v1958
        %v1964 = vshrl.u32 %v1961, 16
        %v1966 = vshll.u32 %v1961, 16
        %v1968 = vrot.slane %v1966, 1
        %v1969 = vor.u32 %v1964, %v1968
        %v1971 = vshll.u32 %v1962, 16
        %v1973 = vrot.slane %v1971, 1
        %v1974 = vsel %vm511, %v1969, %v1973
        %v1975 = vshrl.u32 %v1962, 16
        %v1977 = vor.u32 %v1975, %v1973
        %v1978 = vrot.slane %v1961, 1
        %v1979 = vrot.slane %v1962, 1
        %v1980 = vsel %vm662, %v1978, %v1979
        %v1981 = vunpack.c.l.b16 %v1974
        %v1982 = vunpack.c.l.b16 %v1980
        %v1983 = vunpack.c.h.b16 %v1974
        %v1984 = vunpack.c.h.b16 %v1980
        %v1985 = vunpack.c.l.b16 %v1977
        %v1986 = vunpack.c.l.b16 %v1979
        %v1987 = vld [vmem:[%s2 + $0x180] sm:$0xf]
        %v1988 = vld [vmem:[%s2 + $0x184] sm:$0xf]
        %v1989 = vld [vmem:[%s2 + $0x188] sm:$0xf]
        %v1990 = vld [vmem:[%s2 + $0x18c] sm:$0xf]
        %v1991 = vld [vmem:[%s2 + $0x190] sm:$0xf]
        %v1992 = vld [vmem:[%s2 + $0x194] sm:$0xf]
        %v1993 = vld [vmem:[%s2 + $0x198] sm:$0xf]
        %v1994 = vld [vmem:[%s2 + $0x19c] sm:$0xf]
        %v1995 = vld [vmem:[%s2 + $0x1a0] sm:$0xf]
        %v1996 = vld [vmem:[%s2 + $0x1a4] sm:$0xf]
        %v1997 = vld [vmem:[%s2 + $0x1a8] sm:$0xf]
        %v1998 = vld [vmem:[%s2 + $0x1ac] sm:$0xf]
        %v1999 = vld [vmem:[%s2 + $0x1b0] sm:$0xf]
        %v2000 = vld [vmem:[%s2 + $0x1b4] sm:$0xf]
        %v2001 = vld [vmem:[%s2 + $0x1b8] sm:$0xf]
        %v2002 = vld [vmem:[%s2 + $0x1bc] sm:$0xf]
        %v2003 = vld [vmem:[%s2 + $0x1c0] sm:$0xf]
        %v2004 = vld [vmem:[%s2 + $0x1c4] sm:$0xf]
        %v2005 = vld [vmem:[%s2 + $0x1c8] sm:$0xf]
        %v2006 = vld [vmem:[%s2 + $0x1cc] sm:$0xf]
        %v2007 = vld [vmem:[%s2 + $0x1d0] sm:$0xf]
        %v2008 = vld [vmem:[%s2 + $0x1d4] sm:$0xf]
        %v2009 = vld [vmem:[%s2 + $0x1d8] sm:$0xf]
        %v2010 = vld [vmem:[%s2 + $0x1dc] sm:$0xf]
        %v2011 = vld [vmem:[%s2 + $0x1e0] sm:$0xf]
        %v2012 = vld [vmem:[%s2 + $0x1e4] sm:$0xf]
        %v2013 = vld [vmem:[%s2 + $0x1e8] sm:$0xf]
        %v2014 = vld [vmem:[%s2 + $0x1ec] sm:$0xf]
        %v2015 = vld [vmem:[%s2 + $0x1f0] sm:$0xf]
        %v2016 = vld [vmem:[%s2 + $0x1f4] sm:$0xf]
        %v2017 = vld [vmem:[%s2 + $0x1f8] sm:$0xf]
        %v2018 = vld [vmem:[%s2 + $0x1fc] sm:$0xf]
        %v2019 = vld [vmem:[%s2 + $0x200] sm:$0xf]
        %v2020 = vld [vmem:[%s2 + $0x204] sm:$0xf]
        %v2021 = vld [vmem:[%s2 + $0x208] sm:$0xf]
        %v2022 = vld [vmem:[%s2 + $0x20c] sm:$0xf]
        %v2023 = vld [vmem:[%s2 + $0x210] sm:$0xf]
        %v2024 = vld [vmem:[%s2 + $0x214] sm:$0xf]
        %v2025 = vld [vmem:[%s2 + $0x218] sm:$0xf]
        %v2026 = vld [vmem:[%s2 + $0x21c] sm:$0xf]
        %v2027 = vld [vmem:[%s2 + $0x220] sm:$0xf]
        %v2028 = vld [vmem:[%s2 + $0x224] sm:$0xf]
        %v2029 = vld [vmem:[%s2 + $0x228] sm:$0xf]
        %v2030 = vld [vmem:[%s2 + $0x22c] sm:$0xf]
        %v2031 = vld [vmem:[%s2 + $0x230] sm:$0xf]
        %v2032 = vld [vmem:[%s2 + $0x234] sm:$0xf]
        %v2033 = vld [vmem:[%s2 + $0x238] sm:$0xf]
        %v2034 = vld [vmem:[%s2 + $0x23c] sm:$0xf]
        %v2035 = vpack.c.b16 %v831, %v829
        %v2036 = vpack.c.b16 %v832, %v830
        %v2037 = vpack.c.b16 %v1956, %v806
        %v2038 = vpack.c.b16 %v1981, %v833
        %v2039 = vpack.c.b16 %v1982, %v834
        %v2040 = vpack.c.b16 %v1958, %v1957
        %v2041 = vpack.c.b16 %v1985, %v1983
        %v2042 = vpack.c.b16 %v1986, %v1984
        %v2100 = vunpack.c.l.b16 %v1987
        %v2101 = vunpack.c.l.b16 %v1988
        %v2102 = vunpack.c.l.b16 %v1989
        %v2103 = vunpack.c.l.b16 %v1990
        %v2104 = vunpack.c.l.b16 %v1991
        %v2105 = vunpack.c.l.b16 %v1992
        %v2106 = vunpack.c.l.b16 %v1993
        %v2107 = vunpack.c.l.b16 %v1994
        %v2108 = vunpack.c.l.b16 %v1995
        %v2109 = vunpack.c.l.b16 %v1996
        %v2110 = vunpack.c.l.b16 %v1997
        %v2111 = vunpack.c.l.b16 %v1998
        %v2112 = vunpack.c.l.b16 %v1999
        %v2113 = vunpack.c.l.b16 %v2000
        %v2114 = vunpack.c.l.b16 %v2001
        %v2115 = vunpack.c.l.b16 %v2002
        %v2116 = vunpack.c.l.b16 %v2003
        %v2117 = vunpack.c.l.b16 %v2004
        %v2118 = vunpack.c.l.b16 %v2005
        %v2119 = vunpack.c.l.b16 %v2006
        %v2120 = vunpack.c.l.b16 %v2007
        %v2121 = vunpack.c.l.b16 %v2008
        %v2122 = vunpack.c.l.b16 %v2009
        %v2123 = vunpack.c.l.b16 %v2010
        %v2124 = vunpack.c.l.b16 %v2011
        %v2125 = vunpack.c.l.b16 %v2012
        %v2126 = vunpack.c.l.b16 %v2013
        %v2127 = vunpack.c.l.b16 %v2014
        %v2128 = vunpack.c.l.b16 %v2015
        %v2129 = vunpack.c.l.b16 %v2016
        %v2130 = vunpack.c.l.b16 %v2017
        %v2131 = vunpack.c.l.b16 %v2018
        %v2132 = vunpack.c.l.b16 %v2019
        %v2133 = vunpack.c.l.b16 %v2020
        %v2134 = vunpack.c.l.b16 %v2021
        %v2135 = vunpack.c.l.b16 %v2022
        %v2136 = vunpack.c.l.b16 %v2023
        %v2137 = vunpack.c.l.b16 %v2024
        %v2138 = vunpack.c.l.b16 %v2025
        %v2139 = vunpack.c.l.b16 %v2026
        %v2140 = vunpack.c.l.b16 %v2027
        %v2141 = vunpack.c.l.b16 %v2028
        %v2142 = vunpack.c.l.b16 %v2029
        %v2143 = vunpack.c.l.b16 %v2030
        %v2144 = vunpack.c.l.b16 %v2031
        %v2145 = vunpack.c.l.b16 %v2032
        %v2146 = vunpack.c.l.b16 %v2033
        %v2147 = vunpack.c.l.b16 %v2034
        %v2148 = vpack.c.b16 %v2101, %v2100
        %v2149 = vpack.c.b16 %v2103, %v2102
        %v2150 = vpack.c.b16 %v2105, %v2104
        %v2151 = vpack.c.b16 %v2107, %v2106
        %v2152 = vpack.c.b16 %v2109, %v2108
        %v2153 = vpack.c.b16 %v2111, %v2110
        %v2154 = vpack.c.b16 %v2113, %v2112
        %v2155 = vpack.c.b16 %v2115, %v2114
        %v2156 = vpack.c.b16 %v2117, %v2116
        %v2157 = vpack.c.b16 %v2119, %v2118
        %v2158 = vpack.c.b16 %v2121, %v2120
        %v2159 = vpack.c.b16 %v2123, %v2122
        %v2160 = vpack.c.b16 %v2125, %v2124
        %v2161 = vpack.c.b16 %v2127, %v2126
        %v2162 = vpack.c.b16 %v2129, %v2128
        %v2163 = vpack.c.b16 %v2131, %v2130
        %v2164 = vpack.c.b16 %v2133, %v2132
        %v2165 = vpack.c.b16 %v2135, %v2134
        %v2166 = vpack.c.b16 %v2137, %v2136
        %v2167 = vpack.c.b16 %v2139, %v2138
        %v2168 = vpack.c.b16 %v2141, %v2140
        %v2169 = vpack.c.b16 %v2143, %v2142
        %v2170 = vpack.c.b16 %v2145, %v2144
        %v2171 = vpack.c.b16 %v2147, %v2146
        %2196 = vmatprep.subr.bf16.mxu0 0
        %2197 = vmatpush1.bf16.msra.mxu0 %v2148
        %2198 = vmatprep.subr.bf16.mxu0 0
        %2199 = vmatpush1.bf16.msra.mxu0 %v2149
        %2200 = vmatprep.subr.bf16.mxu0 0
        %2201 = vmatpush1.bf16.msra.mxu0 %v2150
        %2202 = vmatprep.subr.bf16.mxu0 0
        %2203 = vmatpush1.bf16.msra.mxu0 %v2151
        %2204 = vmatprep.subr.bf16.mxu0 0
        %2205 = vmatpush1.bf16.msra.mxu0 %v2152
        %2206 = vmatprep.subr.bf16.mxu0 0
        %2207 = vmatpush1.bf16.msra.mxu0 %v2153
        %2208 = vmatprep.subr.bf16.mxu0 0
        %2209 = vmatpush1.bf16.msra.mxu0 %v2154
        %2210 = vmatprep.subr.bf16.mxu0 0
        %2211 = vmatpush1.bf16.msra.mxu0 %v2155
        %2212 = vmatprep.subr.bf16.mxu0 0
        %2213 = vmatpush1.bf16.msra.mxu0 %v2156
        %2214 = vmatprep.subr.bf16.mxu0 0
        %2215 = vmatpush1.bf16.msra.mxu0 %v2157
        %2216 = vmatprep.subr.bf16.mxu0 0
        %2217 = vmatpush1.bf16.msra.mxu0 %v2158
        %2218 = vmatprep.subr.bf16.mxu0 0
        %2219 = vmatpush1.bf16.msra.mxu0 %v2159
        %2220 = vmatprep.subr.bf16.mxu0 0
        %2221 = vmatpush1.bf16.msra.mxu0 %v2160
        %2222 = vmatprep.subr.bf16.mxu0 0
        %2223 = vmatpush1.bf16.msra.mxu0 %v2161
        %2224 = vmatprep.subr.bf16.mxu0 0
        %2225 = vmatpush1.bf16.msra.mxu0 %v2162
        %2226 = vmatprep.subr.bf16.mxu0 0
        %2227 = vmatpush1.bf16.msra.mxu0 %v2163
        %2228 = vmatprep.mubr.bf16.mxu0 %v1426
        %2229 = vmatmul.mubr.bf16.gmra.mrb[0].mxu0 %v495
        %v2230 = vpop.f32.mrb[0].mxu0
        %v2231 = vadd.f32 0.0, %v2230
        %v2232 = vpop.f32.mrb[0].mxu0
        %v2233 = vpop.f32.mrb[0].mxu0
        %v2234 = vadd.f32 0.0, %v2233
        %v2235 = vpop.f32.mrb[0].mxu0
        %2236 = vmatprep.mubr.bf16.mxu0 %v1429
        %2237 = vmatmul.mubr.bf16.gmra.mrb[0].mxu0 %v1428
        %v2238 = vpop.f32.mrb[0].mxu0
        %v2239 = vadd.f32 0.0, %v2238
        %v2240 = vpop.f32.mrb[0].mxu0
        %v2241 = vpop.f32.mrb[0].mxu0
        %v2242 = vadd.f32 0.0, %v2241
        %v2243 = vpop.f32.mrb[0].mxu0
        %2244 = vmatprep.mubr.bf16.mxu0 %v1432
        %2245 = vmatmul.mubr.bf16.gmra.mrb[0].mxu0 %v1431
        %v2246 = vpop.f32.mrb[0].mxu0
        %v2247 = vadd.f32 0.0, %v2246
        %v2248 = vpop.f32.mrb[0].mxu0
        %v2249 = vpop.f32.mrb[0].mxu0
        %v2250 = vadd.f32 0.0, %v2249
        %v2251 = vpop.f32.mrb[0].mxu0
        %2252 = vmatprep.mubr.bf16.mxu0 %v1434
        %2253 = vmatmul.mubr.bf16.gmra.mrb[0].mxu0 %v499
        %v2254 = vpop.f32.mrb[0].mxu0
        %v2255 = vadd.f32 0.0, %v2254
        %v2256 = vpop.f32.mrb[0].mxu0
        %v2257 = vpop.f32.mrb[0].mxu0
        %v2258 = vadd.f32 0.0, %v2257
        %v2259 = vpop.f32.mrb[0].mxu0
        %2260 = vmatprep.mubr.bf16.mxu0 %v1437
        %2261 = vmatmul.mubr.bf16.gmra.mrb[0].mxu0 %v1436
        %v2262 = vpop.f32.mrb[0].mxu0
        %v2263 = vadd.f32 0.0, %v2262
        %v2264 = vpop.f32.mrb[0].mxu0
        %v2265 = vpop.f32.mrb[0].mxu0
        %v2266 = vadd.f32 0.0, %v2265
        %v2267 = vpop.f32.mrb[0].mxu0
        %2268 = vmatprep.mubr.bf16.mxu0 %v1440
        %2269 = vmatmul.mubr.bf16.gmra.mrb[0].mxu0 %v1439
        %v2270 = vpop.f32.mrb[0].mxu0
        %v2271 = vadd.f32 0.0, %v2270
        %v2272 = vpop.f32.mrb[0].mxu0
        %v2273 = vpop.f32.mrb[0].mxu0
        %v2274 = vadd.f32 0.0, %v2273
        %v2275 = vpop.f32.mrb[0].mxu0
        %2276 = vmatprep.mubr.bf16.mxu0 %v1442
        %2277 = vmatmul.mubr.bf16.gmra.mrb[0].mxu0 %v503
        %v2278 = vpop.f32.mrb[0].mxu0
        %v2279 = vadd.f32 0.0, %v2278
        %v2280 = vpop.f32.mrb[0].mxu0
        %v2281 = vpop.f32.mrb[0].mxu0
        %v2282 = vadd.f32 0.0, %v2281
        %v2283 = vpop.f32.mrb[0].mxu0
        %2284 = vmatprep.mubr.bf16.mxu0 %v1445
        %2285 = vmatmul.mubr.bf16.gmra.mrb[0].mxu0 %v1444
        %v2286 = vpop.f32.mrb[0].mxu0
        %v2287 = vadd.f32 0.0, %v2286
        %v2288 = vpop.f32.mrb[0].mxu0
        %v2289 = vpop.f32.mrb[0].mxu0
        %v2290 = vadd.f32 0.0, %v2289
        %v2291 = vpop.f32.mrb[0].mxu0
        %2292 = vmatprep.mubr.bf16.mxu0 %v1448
        %2293 = vmatmul.mubr.bf16.gmra.mrb[0].mxu0 %v1447
        %v2294 = vpop.f32.mrb[0].mxu0
        %v2295 = vadd.f32 0.0, %v2294
        %v2296 = vpop.f32.mrb[0].mxu0
        %v2297 = vpop.f32.mrb[0].mxu0
        %v2298 = vadd.f32 0.0, %v2297
        %v2299 = vpop.f32.mrb[0].mxu0
        %2300 = vmatprep.mubr.bf16.mxu0 %v1450
        %2301 = vmatmul.mubr.bf16.gmra.mrb[0].mxu0 %v507
        %v2302 = vpop.f32.mrb[0].mxu0
        %v2303 = vadd.f32 0.0, %v2302
        %v2304 = vpop.f32.mrb[0].mxu0
        %v2305 = vpop.f32.mrb[0].mxu0
        %v2306 = vadd.f32 0.0, %v2305
        %v2307 = vpop.f32.mrb[0].mxu0
        %2308 = vmatprep.mubr.bf16.mxu0 %v1453
        %2309 = vmatmul.mubr.bf16.gmra.mrb[0].mxu0 %v1452
        %v2310 = vpop.f32.mrb[0].mxu0
        %v2311 = vadd.f32 0.0, %v2310
        %v2312 = vpop.f32.mrb[0].mxu0
        %v2313 = vpop.f32.mrb[0].mxu0
        %v2314 = vadd.f32 0.0, %v2313
        %v2315 = vpop.f32.mrb[0].mxu0
        %2316 = vmatprep.mubr.bf16.mxu0 %v1456
        %2317 = vmatmul.mubr.bf16.gmra.mrb[0].mxu0 %v1455
        %v2318 = vpop.f32.mrb[0].mxu0
        %v2319 = vadd.f32 0.0, %v2318
        %v2320 = vpop.f32.mrb[0].mxu0
        %v2321 = vpop.f32.mrb[0].mxu0
        %v2322 = vadd.f32 0.0, %v2321
        %v2323 = vpop.f32.mrb[0].mxu0
        %2324 = vmatprep.mubr.bf16.mxu0 %v2035
        %2325 = vmatmul.mubr.bf16.gmra.mrb[0].mxu0 %v809
        %v2326 = vpop.f32.mrb[0].mxu0
        %v2327 = vadd.f32 0.0, %v2326
        %v2328 = vpop.f32.mrb[0].mxu0
        %v2329 = vpop.f32.mrb[0].mxu0
        %v2330 = vadd.f32 0.0, %v2329
        %v2331 = vpop.f32.mrb[0].mxu0
        %2332 = vmatprep.mubr.bf16.mxu0 %v2038
        %2333 = vmatmul.mubr.bf16.gmra.mrb[0].mxu0 %v2037
        %v2334 = vpop.f32.mrb[0].mxu0
        %v2335 = vadd.f32 0.0, %v2334
        %v2336 = vpop.f32.mrb[0].mxu0
        %v2337 = vpop.f32.mrb[0].mxu0
        %v2338 = vadd.f32 0.0, %v2337
        %v2339 = vpop.f32.mrb[0].mxu0
        %2340 = vmatprep.mubr.bf16.mxu0 %v2041
        %2341 = vmatmul.mubr.bf16.gmra.mrb[0].mxu0 %v2040
        %v2342 = vpop.f32.mrb[0].mxu0
        %v2343 = vadd.f32 0.0, %v2342
        %v2344 = vpop.f32.mrb[0].mxu0
        %v2345 = vpop.f32.mrb[0].mxu0
        %v2346 = vadd.f32 0.0, %v2345
        %v2347 = vpop.f32.mrb[0].mxu0
        %2348 = vdwg.mxu0
        %2349 = vmatprep.subr.bf16.mxu0 0
        %2350 = vmatpush1.bf16.msra.mxu0 %v2164
        %2351 = vmatprep.subr.bf16.mxu0 0
        %2352 = vmatpush1.bf16.msra.mxu0 %v2165
        %2353 = vmatprep.subr.bf16.mxu0 0
        %2354 = vmatpush1.bf16.msra.mxu0 %v2166
        %2355 = vmatprep.subr.bf16.mxu0 0
        %2356 = vmatpush1.bf16.msra.mxu0 %v2167
        %2357 = vmatprep.subr.bf16.mxu0 0
        %2358 = vmatpush1.bf16.msra.mxu0 %v2168
        %2359 = vmatprep.subr.bf16.mxu0 0
        %2360 = vmatpush1.bf16.msra.mxu0 %v2169
        %2361 = vmatprep.subr.bf16.mxu0 0
        %2362 = vmatpush1.bf16.msra.mxu0 %v2170
        %2363 = vmatprep.subr.bf16.mxu0 0
        %2364 = vmatpush1.bf16.msra.mxu0 %v2171
        %2365 = vmatprep.subr.bf16.mxu0 0
        %2366 = vmatpush1.bf16.msra.mxu0 0
        %2367 = vmatprep.subr.bf16.mxu0 0
        %2368 = vmatpush1.bf16.msra.mxu0 0
        %2369 = vmatprep.subr.bf16.mxu0 0
        %2370 = vmatpush1.bf16.msra.mxu0 0
        %2371 = vmatprep.subr.bf16.mxu0 0
        %2372 = vmatpush1.bf16.msra.mxu0 0
        %2373 = vmatprep.subr.bf16.mxu0 0
        %2374 = vmatpush1.bf16.msra.mxu0 0
        %2375 = vmatprep.subr.bf16.mxu0 0
        %2376 = vmatpush1.bf16.msra.mxu0 0
        %2377 = vmatprep.subr.bf16.mxu0 0
        %2378 = vmatpush1.bf16.msra.mxu0 0
        %2379 = vmatprep.subr.bf16.mxu0 0
        %2380 = vmatpush1.bf16.msra.mxu0 0
        %2381 = vmatprep.mubr.bf16.mxu0 0
        %2382 = vmatmul.mubr.bf16.gmra.mrb[0].mxu0 %v1427
        %v2383 = vpop.f32.mrb[0].mxu0
        %v2384 = vadd.f32 %v2231, %v2383
        %v2385 = vpop.f32.mrb[0].mxu0
        %v2386 = vpop.f32.mrb[0].mxu0
        %v2387 = vadd.f32 %v2234, %v2386
        %v2388 = vpop.f32.mrb[0].mxu0
        %2389 = vmatprep.mubr.bf16.mxu0 0
        %2390 = vmatmul.mubr.bf16.gmra.mrb[0].mxu0 %v1430
        %v2391 = vpop.f32.mrb[0].mxu0
        %v2392 = vadd.f32 %v2239, %v2391
        %v2393 = vpop.f32.mrb[0].mxu0
        %v2394 = vpop.f32.mrb[0].mxu0
        %v2395 = vadd.f32 %v2242, %v2394
        %v2396 = vpop.f32.mrb[0].mxu0
        %2397 = vmatprep.mubr.bf16.mxu0 0
        %2398 = vmatmul.mubr.bf16.gmra.mrb[0].mxu0 %v1433
        %v2399 = vpop.f32.mrb[0].mxu0
        %v2400 = vadd.f32 %v2247, %v2399
        %v2401 = vpop.f32.mrb[0].mxu0
        %v2402 = vpop.f32.mrb[0].mxu0
        %v2403 = vadd.f32 %v2250, %v2402
        %v2404 = vpop.f32.mrb[0].mxu0
        %2405 = vmatprep.mubr.bf16.mxu0 0
        %2406 = vmatmul.mubr.bf16.gmra.mrb[0].mxu0 %v1435
        %v2407 = vpop.f32.mrb[0].mxu0
        %v2408 = vadd.f32 %v2255, %v2407
        %v2409 = vpop.f32.mrb[0].mxu0
        %v2410 = vpop.f32.mrb[0].mxu0
        %v2411 = vadd.f32 %v2258, %v2410
        %v2412 = vpop.f32.mrb[0].mxu0
        %2413 = vmatprep.mubr.bf16.mxu0 0
        %2414 = vmatmul.mubr.bf16.gmra.mrb[0].mxu0 %v1438
        %v2415 = vpop.f32.mrb[0].mxu0
        %v2416 = vadd.f32 %v2263, %v2415
        %v2417 = vpop.f32.mrb[0].mxu0
        %v2418 = vpop.f32.mrb[0].mxu0
        %v2419 = vadd.f32 %v2266, %v2418
        %v2420 = vpop.f32.mrb[0].mxu0
        %2421 = vmatprep.mubr.bf16.mxu0 0
        %2422 = vmatmul.mubr.bf16.gmra.mrb[0].mxu0 %v1441
        %v2423 = vpop.f32.mrb[0].mxu0
        %v2424 = vadd.f32 %v2271, %v2423
        %v2425 = vpop.f32.mrb[0].mxu0
        %v2426 = vpop.f32.mrb[0].mxu0
        %v2427 = vadd.f32 %v2274, %v2426
        %v2428 = vpop.f32.mrb[0].mxu0
        %2429 = vmatprep.mubr.bf16.mxu0 0
        %2430 = vmatmul.mubr.bf16.gmra.mrb[0].mxu0 %v1443
        %v2431 = vpop.f32.mrb[0].mxu0
        %v2432 = vadd.f32 %v2279, %v2431
        %v2433 = vpop.f32.mrb[0].mxu0
        %v2434 = vpop.f32.mrb[0].mxu0
        %v2435 = vadd.f32 %v2282, %v2434
        %v2436 = vpop.f32.mrb[0].mxu0
        %2437 = vmatprep.mubr.bf16.mxu0 0
        %2438 = vmatmul.mubr.bf16.gmra.mrb[0].mxu0 %v1446
        %v2439 = vpop.f32.mrb[0].mxu0
        %v2440 = vadd.f32 %v2287, %v2439
        %v2441 = vpop.f32.mrb[0].mxu0
        %v2442 = vpop.f32.mrb[0].mxu0
        %v2443 = vadd.f32 %v2290, %v2442
        %v2444 = vpop.f32.mrb[0].mxu0
        %2445 = vmatprep.mubr.bf16.mxu0 0
        %2446 = vmatmul.mubr.bf16.gmra.mrb[0].mxu0 %v1449
        %v2447 = vpop.f32.mrb[0].mxu0
        %v2448 = vadd.f32 %v2295, %v2447
        %v2449 = vpop.f32.mrb[0].mxu0
        %v2450 = vpop.f32.mrb[0].mxu0
        %v2451 = vadd.f32 %v2298, %v2450
        %v2452 = vpop.f32.mrb[0].mxu0
        %2453 = vmatprep.mubr.bf16.mxu0 0
        %2454 = vmatmul.mubr.bf16.gmra.mrb[0].mxu0 %v1451
        %v2455 = vpop.f32.mrb[0].mxu0
        %v2456 = vadd.f32 %v2303, %v2455
        %v2457 = vpop.f32.mrb[0].mxu0
        %v2458 = vpop.f32.mrb[0].mxu0
        %v2459 = vadd.f32 %v2306, %v2458
        %v2460 = vpop.f32.mrb[0].mxu0
        %2461 = vmatprep.mubr.bf16.mxu0 0
        %2462 = vmatmul.mubr.bf16.gmra.mrb[0].mxu0 %v1454
        %v2463 = vpop.f32.mrb[0].mxu0
        %v2464 = vadd.f32 %v2311, %v2463
        %v2465 = vpop.f32.mrb[0].mxu0
        %v2466 = vpop.f32.mrb[0].mxu0
        %v2467 = vadd.f32 %v2314, %v2466
        %v2468 = vpop.f32.mrb[0].mxu0
        %2469 = vmatprep.mubr.bf16.mxu0 0
        %2470 = vmatmul.mubr.bf16.gmra.mrb[0].mxu0 %v1457
        %v2471 = vpop.f32.mrb[0].mxu0
        %v2472 = vadd.f32 %v2319, %v2471
        %v2473 = vpop.f32.mrb[0].mxu0
        %v2474 = vpop.f32.mrb[0].mxu0
        %v2475 = vadd.f32 %v2322, %v2474
        %v2476 = vpop.f32.mrb[0].mxu0
        %2477 = vmatprep.mubr.bf16.mxu0 0
        %2478 = vmatmul.mubr.bf16.gmra.mrb[0].mxu0 %v2036
        %v2479 = vpop.f32.mrb[0].mxu0
        %v2480 = vadd.f32 %v2327, %v2479
        %v2481 = vpop.f32.mrb[0].mxu0
        %v2482 = vpop.f32.mrb[0].mxu0
        %v2483 = vadd.f32 %v2330, %v2482
        %v2484 = vpop.f32.mrb[0].mxu0
        %2485 = vmatprep.mubr.bf16.mxu0 0
        %2486 = vmatmul.mubr.bf16.gmra.mrb[0].mxu0 %v2039
        %v2487 = vpop.f32.mrb[0].mxu0
        %v2488 = vadd.f32 %v2335, %v2487
        %v2489 = vpop.f32.mrb[0].mxu0
        %v2490 = vpop.f32.mrb[0].mxu0
        %v2491 = vadd.f32 %v2338, %v2490
        %v2492 = vpop.f32.mrb[0].mxu0
        %2493 = vmatprep.mubr.bf16.mxu0 0
        %2494 = vmatmul.mubr.bf16.gmra.mrb[0].mxu0 %v2042
        %v2495 = vpop.f32.mrb[0].mxu0
        %v2496 = vadd.f32 %v2343, %v2495
        %v2497 = vpop.f32.mrb[0].mxu0
        %v2498 = vpop.f32.mrb[0].mxu0
        %v2499 = vadd.f32 %v2346, %v2498
        %v2500 = vpop.f32.mrb[0].mxu0
        %2501 = vdwg.mxu0
        %v2502 = vadd.f32 %v1835, %v2384
        %v2503 = vadd.f32 %v1838, %v2387
        %v2504 = vadd.f32 %v1843, %v2392
        %v2505 = vadd.f32 %v1846, %v2395
        %v2506 = vadd.f32 %v1851, %v2400
        %v2507 = vadd.f32 %v1854, %v2403
        %v2508 = vadd.f32 %v1859, %v2408
        %v2509 = vadd.f32 %v1862, %v2411
        %v2510 = vadd.f32 %v1867, %v2416
        %v2511 = vadd.f32 %v1870, %v2419
        %v2512 = vadd.f32 %v1875, %v2424
        %v2513 = vadd.f32 %v1878, %v2427
        %v2514 = vadd.f32 %v1883, %v2432
        %v2515 = vadd.f32 %v1886, %v2435
        %v2516 = vadd.f32 %v1891, %v2440
        %v2517 = vadd.f32 %v1894, %v2443
        %v2518 = vadd.f32 %v1899, %v2448
        %v2519 = vadd.f32 %v1902, %v2451
        %v2520 = vadd.f32 %v1907, %v2456
        %v2521 = vadd.f32 %v1910, %v2459
        %v2522 = vadd.f32 %v1915, %v2464
        %v2523 = vadd.f32 %v1918, %v2467
        %v2524 = vadd.f32 %v1923, %v2472
        %v2525 = vadd.f32 %v1926, %v2475
        %v2526 = vadd.f32 %v1931, %v2480
        %v2527 = vadd.f32 %v1934, %v2483
        %v2528 = vadd.f32 %v1939, %v2488
        %v2529 = vadd.f32 %v1942, %v2491
        %v2530 = vadd.f32 %v1947, %v2496
        %v2531 = vadd.f32 %v1950, %v2499
        %v2532 = vld [vmem:[%s3] sm:$0x1]
        %v2534 = vlaneseq
        %v2535 = vshrl.u32 %v2534, 7
        %v2536 = vsub.s32 0, %v2535
        %v2537 = vrot.slane %v2532, %v2536
        %v2539 = vadd.f32 %v2502, %v2537
        %v2540 = vadd.f32 %v2503, %v2537
        %v2541 = vadd.f32 %v2504, %v2537
        %v2542 = vadd.f32 %v2505, %v2537
        %v2543 = vadd.f32 %v2506, %v2537
        %v2544 = vadd.f32 %v2507, %v2537
        %v2545 = vadd.f32 %v2508, %v2537
        %v2546 = vadd.f32 %v2509, %v2537
        %v2547 = vadd.f32 %v2510, %v2537
        %v2548 = vadd.f32 %v2511, %v2537
        %v2549 = vadd.f32 %v2512, %v2537
        %v2550 = vadd.f32 %v2513, %v2537
        %v2551 = vadd.f32 %v2514, %v2537
        %v2552 = vadd.f32 %v2515, %v2537
        %v2553 = vadd.f32 %v2516, %v2537
        %v2554 = vadd.f32 %v2517, %v2537
        %v2555 = vadd.f32 %v2518, %v2537
        %v2556 = vadd.f32 %v2519, %v2537
        %v2557 = vadd.f32 %v2520, %v2537
        %v2558 = vadd.f32 %v2521, %v2537
        %v2559 = vadd.f32 %v2522, %v2537
        %v2560 = vadd.f32 %v2523, %v2537
        %v2561 = vadd.f32 %v2524, %v2537
        %v2562 = vadd.f32 %v2525, %v2537
        %v2563 = vadd.f32 %v2526, %v2537
        %v2564 = vadd.f32 %v2527, %v2537
        %v2565 = vadd.f32 %v2528, %v2537
        %v2566 = vadd.f32 %v2529, %v2537
        %v2567 = vadd.f32 %v2530, %v2537
        %v2568 = vadd.f32 %v2531, %v2537
        %v2569 = vxor.u32 %v2539, 2147483648
        %v2570 = vxor.u32 %v2540, 2147483648
        %v2571 = vxor.u32 %v2541, 2147483648
        %v2572 = vxor.u32 %v2542, 2147483648
        %v2573 = vxor.u32 %v2543, 2147483648
        %v2574 = vxor.u32 %v2544, 2147483648
        %v2575 = vxor.u32 %v2545, 2147483648
        %v2576 = vxor.u32 %v2546, 2147483648
        %v2577 = vxor.u32 %v2547, 2147483648
        %v2578 = vxor.u32 %v2548, 2147483648
        %v2579 = vxor.u32 %v2549, 2147483648
        %v2580 = vxor.u32 %v2550, 2147483648
        %v2581 = vxor.u32 %v2551, 2147483648
        %v2582 = vxor.u32 %v2552, 2147483648
        %v2583 = vxor.u32 %v2553, 2147483648
        %v2584 = vxor.u32 %v2554, 2147483648
        %v2585 = vxor.u32 %v2555, 2147483648
        %v2586 = vxor.u32 %v2556, 2147483648
        %v2587 = vxor.u32 %v2557, 2147483648
        %v2588 = vxor.u32 %v2558, 2147483648
        %v2589 = vxor.u32 %v2559, 2147483648
        %v2590 = vxor.u32 %v2560, 2147483648
        %v2591 = vxor.u32 %v2561, 2147483648
        %v2592 = vxor.u32 %v2562, 2147483648
        %v2593 = vxor.u32 %v2563, 2147483648
        %v2594 = vxor.u32 %v2564, 2147483648
        %v2595 = vxor.u32 %v2565, 2147483648
        %v2596 = vxor.u32 %v2566, 2147483648
        %v2597 = vxor.u32 %v2567, 2147483648
        %v2598 = vxor.u32 %v2568, 2147483648
        %v2599 = vmul.f32 %v2569, 1.442695
        %v2600 = vpow.pop %v2599
        %v2601 = vmul.f32 %v2570, 1.442695
        %v2602 = vpow.pop %v2601
        %v2603 = vmul.f32 %v2571, 1.442695
        %v2604 = vpow.pop %v2603
        %v2605 = vmul.f32 %v2572, 1.442695
        %v2606 = vpow.pop %v2605
        %v2607 = vmul.f32 %v2573, 1.442695
        %v2608 = vpow.pop %v2607
        %v2609 = vmul.f32 %v2574, 1.442695
        %v2610 = vpow.pop %v2609
        %v2611 = vmul.f32 %v2575, 1.442695
        %v2612 = vpow.pop %v2611
        %v2613 = vmul.f32 %v2576, 1.442695
        %v2614 = vpow.pop %v2613
        %v2615 = vmul.f32 %v2577, 1.442695
        %v2616 = vpow.pop %v2615
        %v2617 = vmul.f32 %v2578, 1.442695
        %v2618 = vpow.pop %v2617
        %v2619 = vmul.f32 %v2579, 1.442695
        %v2620 = vpow.pop %v2619
        %v2621 = vmul.f32 %v2580, 1.442695
        %v2622 = vpow.pop %v2621
        %v2623 = vmul.f32 %v2581, 1.442695
        %v2624 = vpow.pop %v2623
        %v2625 = vmul.f32 %v2582, 1.442695
        %v2626 = vpow.pop %v2625
        %v2627 = vmul.f32 %v2583, 1.442695
        %v2628 = vpow.pop %v2627
        %v2629 = vmul.f32 %v2584, 1.442695
        %v2630 = vpow.pop %v2629
        %v2631 = vmul.f32 %v2585, 1.442695
        %v2632 = vpow.pop %v2631
        %v2633 = vmul.f32 %v2586, 1.442695
        %v2634 = vpow.pop %v2633
        %v2635 = vmul.f32 %v2587, 1.442695
        %v2636 = vpow.pop %v2635
        %v2637 = vmul.f32 %v2588, 1.442695
        %v2638 = vpow.pop %v2637
        %v2639 = vmul.f32 %v2589, 1.442695
        %v2640 = vpow.pop %v2639
        %v2641 = vmul.f32 %v2590, 1.442695
        %v2642 = vpow.pop %v2641
        %v2643 = vmul.f32 %v2591, 1.442695
        %v2644 = vpow.pop %v2643
        %v2645 = vmul.f32 %v2592, 1.442695
        %v2646 = vpow.pop %v2645
        %v2647 = vmul.f32 %v2593, 1.442695
        %v2648 = vpow.pop %v2647
        %v2649 = vmul.f32 %v2594, 1.442695
        %v2650 = vpow.pop %v2649
        %v2651 = vmul.f32 %v2595, 1.442695
        %v2652 = vpow.pop %v2651
        %v2653 = vmul.f32 %v2596, 1.442695
        %v2654 = vpow.pop %v2653
        %v2655 = vmul.f32 %v2597, 1.442695
        %v2656 = vpow.pop %v2655
        %v2657 = vmul.f32 %v2598, 1.442695
        %v2658 = vpow.pop %v2657
        %v2659 = vadd.f32 %v2600, 1.0
        %v2660 = vadd.f32 %v2602, 1.0
        %v2661 = vadd.f32 %v2604, 1.0
        %v2662 = vadd.f32 %v2606, 1.0
        %v2663 = vadd.f32 %v2608, 1.0
        %v2664 = vadd.f32 %v2610, 1.0
        %v2665 = vadd.f32 %v2612, 1.0
        %v2666 = vadd.f32 %v2614, 1.0
        %v2667 = vadd.f32 %v2616, 1.0
        %v2668 = vadd.f32 %v2618, 1.0
        %v2669 = vadd.f32 %v2620, 1.0
        %v2670 = vadd.f32 %v2622, 1.0
        %v2671 = vadd.f32 %v2624, 1.0
        %v2672 = vadd.f32 %v2626, 1.0
        %v2673 = vadd.f32 %v2628, 1.0
        %v2674 = vadd.f32 %v2630, 1.0
        %v2675 = vadd.f32 %v2632, 1.0
        %v2676 = vadd.f32 %v2634, 1.0
        %v2677 = vadd.f32 %v2636, 1.0
        %v2678 = vadd.f32 %v2638, 1.0
        %v2679 = vadd.f32 %v2640, 1.0
        %v2680 = vadd.f32 %v2642, 1.0
        %v2681 = vadd.f32 %v2644, 1.0
        %v2682 = vadd.f32 %v2646, 1.0
        %v2683 = vadd.f32 %v2648, 1.0
        %v2684 = vadd.f32 %v2650, 1.0
        %v2685 = vadd.f32 %v2652, 1.0
        %v2686 = vadd.f32 %v2654, 1.0
        %v2687 = vadd.f32 %v2656, 1.0
        %v2688 = vadd.f32 %v2658, 1.0
        %v2689 = vrcp.pop %v2659
        %v2690 = vmul.f32 1.0, %v2689
        %v2691 = vrcp.pop %v2660
        %v2692 = vmul.f32 1.0, %v2691
        %v2693 = vrcp.pop %v2661
        %v2694 = vmul.f32 1.0, %v2693
        %v2695 = vrcp.pop %v2662
        %v2696 = vmul.f32 1.0, %v2695
        %v2697 = vrcp.pop %v2663
        %v2698 = vmul.f32 1.0, %v2697
        %v2699 = vrcp.pop %v2664
        %v2700 = vmul.f32 1.0, %v2699
        %v2701 = vrcp.pop %v2665
        %v2702 = vmul.f32 1.0, %v2701
        %v2703 = vrcp.pop %v2666
        %v2704 = vmul.f32 1.0, %v2703
        %v2705 = vrcp.pop %v2667
        %v2706 = vmul.f32 1.0, %v2705
        %v2707 = vrcp.pop %v2668
        %v2708 = vmul.f32 1.0, %v2707
        %v2709 = vrcp.pop %v2669
        %v2710 = vmul.f32 1.0, %v2709
        %v2711 = vrcp.pop %v2670
        %v2712 = vmul.f32 1.0, %v2711
        %v2713 = vrcp.pop %v2671
        %v2714 = vmul.f32 1.0, %v2713
        %v2715 = vrcp.pop %v2672
        %v2716 = vmul.f32 1.0, %v2715
        %v2717 = vrcp.pop %v2673
        %v2718 = vmul.f32 1.0, %v2717
        %v2719 = vrcp.pop %v2674
        %v2720 = vmul.f32 1.0, %v2719
        %v2721 = vrcp.pop %v2675
        %v2722 = vmul.f32 1.0, %v2721
        %v2723 = vrcp.pop %v2676
        %v2724 = vmul.f32 1.0, %v2723
        %v2725 = vrcp.pop %v2677
        %v2726 = vmul.f32 1.0, %v2725
        %v2727 = vrcp.pop %v2678
        %v2728 = vmul.f32 1.0, %v2727
        %v2729 = vrcp.pop %v2679
        %v2730 = vmul.f32 1.0, %v2729
        %v2731 = vrcp.pop %v2680
        %v2732 = vmul.f32 1.0, %v2731
        %v2733 = vrcp.pop %v2681
        %v2734 = vmul.f32 1.0, %v2733
        %v2735 = vrcp.pop %v2682
        %v2736 = vmul.f32 1.0, %v2735
        %v2737 = vrcp.pop %v2683
        %v2738 = vmul.f32 1.0, %v2737
        %v2739 = vrcp.pop %v2684
        %v2740 = vmul.f32 1.0, %v2739
        %v2741 = vrcp.pop %v2685
        %v2742 = vmul.f32 1.0, %v2741
        %v2743 = vrcp.pop %v2686
        %v2744 = vmul.f32 1.0, %v2743
        %v2745 = vrcp.pop %v2687
        %v2746 = vmul.f32 1.0, %v2745
        %v2747 = vrcp.pop %v2688
        %v2748 = vmul.f32 1.0, %v2747
        %v2749 = vmul.f32 %v2539, %v2690
        %v2750 = vmul.f32 %v2540, %v2692
        %v2751 = vmul.f32 %v2541, %v2694
        %v2752 = vmul.f32 %v2542, %v2696
        %v2753 = vmul.f32 %v2543, %v2698
        %v2754 = vmul.f32 %v2544, %v2700
        %v2755 = vmul.f32 %v2545, %v2702
        %v2756 = vmul.f32 %v2546, %v2704
        %v2757 = vmul.f32 %v2547, %v2706
        %v2758 = vmul.f32 %v2548, %v2708
        %v2759 = vmul.f32 %v2549, %v2710
        %v2760 = vmul.f32 %v2550, %v2712
        %v2761 = vmul.f32 %v2551, %v2714
        %v2762 = vmul.f32 %v2552, %v2716
        %v2763 = vmul.f32 %v2553, %v2718
        %v2764 = vmul.f32 %v2554, %v2720
        %v2765 = vmul.f32 %v2555, %v2722
        %v2766 = vmul.f32 %v2556, %v2724
        %v2767 = vmul.f32 %v2557, %v2726
        %v2768 = vmul.f32 %v2558, %v2728
        %v2769 = vmul.f32 %v2559, %v2730
        %v2770 = vmul.f32 %v2560, %v2732
        %v2771 = vmul.f32 %v2561, %v2734
        %v2772 = vmul.f32 %v2562, %v2736
        %v2773 = vmul.f32 %v2563, %v2738
        %v2774 = vmul.f32 %v2564, %v2740
        %v2775 = vmul.f32 %v2565, %v2742
        %v2776 = vmul.f32 %v2566, %v2744
        %v2777 = vmul.f32 %v2567, %v2746
        %v2778 = vmul.f32 %v2568, %v2748
        %s2779 = smul.u32 %s25, 8
        %s2780 = ssub.s32 %s2779, 1
        %v2781 = vstv %s2780
        %v2782 = vadd.s32 %v2781, 1
        %v2783 = vadd.s32 %v2781, 2
        %v2784 = vadd.s32 %v2781, 3
        %v2785 = vadd.s32 %v2781, 4
        %v2786 = vadd.s32 %v2781, 5
        %v2787 = vadd.s32 %v2781, 6
        %v2788 = vadd.s32 %v2781, 7
        %v2789 = vadd.s32 %v2781, 8
        %v2790 = vadd.s32 %v2781, 9
        %v2791 = vlaneseq
        %v2792 = vshrl.u32 %v2791, 7
        %v2793 = vadd.s32 %v2792, 8
        %v2794 = vadd.s32 %v2792, 16
        %v2795 = vsub.s32 %v2792, 1
        %v2796 = vsub.s32 %v2793, 1
        %v2797 = vsub.s32 %v2794, 1
        %vm2798 = vcmp.ge.s32.totalorder %v2781, 0
        %vm2799 = vcmp.ge.s32.totalorder %v2782, 0
        %vm2800 = vcmp.ge.s32.totalorder %v2783, 0
        %vm2801 = vcmp.ge.s32.totalorder %v2784, 0
        %vm2802 = vcmp.ge.s32.totalorder %v2785, 0
        %vm2803 = vcmp.ge.s32.totalorder %v2786, 0
        %vm2804 = vcmp.ge.s32.totalorder %v2787, 0
        %vm2805 = vcmp.ge.s32.totalorder %v2788, 0
        %vm2806 = vcmp.ge.s32.totalorder %v2789, 0
        %vm2807 = vcmp.ge.s32.totalorder %v2790, 0
        %vm2808 = vcmp.lt.s32.totalorder %v2781, 16
        %vm2809 = vcmp.lt.s32.totalorder %v2782, 16
        %vm2810 = vcmp.lt.s32.totalorder %v2783, 16
        %vm2811 = vcmp.lt.s32.totalorder %v2784, 16
        %vm2812 = vcmp.lt.s32.totalorder %v2785, 16
        %vm2813 = vcmp.lt.s32.totalorder %v2786, 16
        %vm2814 = vcmp.lt.s32.totalorder %v2787, 16
        %vm2815 = vcmp.lt.s32.totalorder %v2788, 16
        %vm2816 = vcmp.lt.s32.totalorder %v2789, 16
        %vm2817 = vcmp.lt.s32.totalorder %v2790, 16
        %vm2818 = vmand %vm2798, %vm2808
        %vm2819 = vmand %vm2799, %vm2809
        %vm2820 = vmand %vm2800, %vm2810
        %vm2821 = vmand %vm2801, %vm2811
        %vm2822 = vmand %vm2802, %vm2812
        %vm2823 = vmand %vm2803, %vm2813
        %vm2824 = vmand %vm2804, %vm2814
        %vm2825 = vmand %vm2805, %vm2815
        %vm2826 = vmand %vm2806, %vm2816
        %vm2827 = vmand %vm2807, %vm2817
        %vm2828 = vcmp.ge.s32.totalorder %v2795, 0
        %vm2829 = vcmp.ge.s32.totalorder %v2796, 0
        %vm2830 = vcmp.ge.s32.totalorder %v2797, 0
        %vm2831 = vmand %vm2818, %vm2828
        %vm2832 = vmand %vm2818, %vm2829
        %vm2833 = vmand %vm2818, %vm2830
        %vm2834 = vmand %vm2819, %vm2828
        %vm2835 = vmand %vm2819, %vm2829
        %vm2836 = vmand %vm2819, %vm2830
        %vm2837 = vmand %vm2820, %vm2828
        %vm2838 = vmand %vm2820, %vm2829
        %vm2839 = vmand %vm2820, %vm2830
        %vm2840 = vmand %vm2821, %vm2828
        %vm2841 = vmand %vm2821, %vm2829
        %vm2842 = vmand %vm2821, %vm2830
        %vm2843 = vmand %vm2822, %vm2828
        %vm2844 = vmand %vm2822, %vm2829
        %vm2845 = vmand %vm2822, %vm2830
        %vm2846 = vmand %vm2823, %vm2828
        %vm2847 = vmand %vm2823, %vm2829
        %vm2848 = vmand %vm2823, %vm2830
        %vm2849 = vmand %vm2824, %vm2828
        %vm2850 = vmand %vm2824, %vm2829
        %vm2851 = vmand %vm2824, %vm2830
        %vm2852 = vmand %vm2825, %vm2828
        %vm2853 = vmand %vm2825, %vm2829
        %vm2854 = vmand %vm2825, %vm2830
        %vm2855 = vmand %vm2826, %vm2828
        %vm2856 = vmand %vm2826, %vm2829
        %vm2857 = vmand %vm2826, %vm2830
        %vm2858 = vmand %vm2827, %vm2828
        %vm2859 = vmand %vm2827, %vm2829
        %vm2860 = vmand %vm2827, %vm2830
        %vm2861 = vcmp.lt.s32.totalorder %v2795, 16
        %vm2862 = vcmp.lt.s32.totalorder %v2796, 16
        %vm2863 = vcmp.lt.s32.totalorder %v2797, 16
        %vm2864 = vmand %vm2831, %vm2861
        %vm2865 = vmand %vm2832, %vm2862
        %vm2866 = vmand %vm2833, %vm2863
        %vm2867 = vmand %vm2834, %vm2861
        %vm2868 = vmand %vm2835, %vm2862
        %vm2869 = vmand %vm2836, %vm2863
        %vm2870 = vmand %vm2837, %vm2861
        %vm2871 = vmand %vm2838, %vm2862
        %vm2872 = vmand %vm2839, %vm2863
        %vm2873 = vmand %vm2840, %vm2861
        %vm2874 = vmand %vm2841, %vm2862
        %vm2875 = vmand %vm2842, %vm2863
        %vm2876 = vmand %vm2843, %vm2861
        %vm2877 = vmand %vm2844, %vm2862
        %vm2878 = vmand %vm2845, %vm2863
        %vm2879 = vmand %vm2846, %vm2861
        %vm2880 = vmand %vm2847, %vm2862
        %vm2881 = vmand %vm2848, %vm2863
        %vm2882 = vmand %vm2849, %vm2861
        %vm2883 = vmand %vm2850, %vm2862
        %vm2884 = vmand %vm2851, %vm2863
        %vm2885 = vmand %vm2852, %vm2861
        %vm2886 = vmand %vm2853, %vm2862
        %vm2887 = vmand %vm2854, %vm2863
        %vm2888 = vmand %vm2855, %vm2861
        %vm2889 = vmand %vm2856, %vm2862
        %vm2890 = vmand %vm2857, %vm2863
        %vm2891 = vmand %vm2858, %vm2861
        %vm2892 = vmand %vm2859, %vm2862
        %vm2893 = vmand %vm2860, %vm2863
        %v2894 = vsel %vm2864, 1, 0
        %v2895 = vsel %vm2865, 1, 0
        %v2896 = vsel %vm2866, 1, 0
        %v2897 = vsel %vm2867, 1, 0
        %v2898 = vsel %vm2868, 1, 0
        %v2899 = vsel %vm2869, 1, 0
        %v2900 = vsel %vm2870, 1, 0
        %v2901 = vsel %vm2871, 1, 0
        %v2902 = vsel %vm2872, 1, 0
        %v2903 = vsel %vm2873, 1, 0
        %v2904 = vsel %vm2874, 1, 0
        %v2905 = vsel %vm2875, 1, 0
        %v2906 = vsel %vm2876, 1, 0
        %v2907 = vsel %vm2877, 1, 0
        %v2908 = vsel %vm2878, 1, 0
        %v2909 = vsel %vm2879, 1, 0
        %v2910 = vsel %vm2880, 1, 0
        %v2911 = vsel %vm2881, 1, 0
        %v2912 = vsel %vm2882, 1, 0
        %v2913 = vsel %vm2883, 1, 0
        %v2914 = vsel %vm2884, 1, 0
        %v2915 = vsel %vm2885, 1, 0
        %v2916 = vsel %vm2886, 1, 0
        %v2917 = vsel %vm2887, 1, 0
        %v2918 = vsel %vm2888, 1, 0
        %v2919 = vsel %vm2889, 1, 0
        %v2920 = vsel %vm2890, 1, 0
        %v2921 = vsel %vm2891, 1, 0
        %v2922 = vsel %vm2892, 1, 0
        %v2923 = vsel %vm2893, 1, 0
        %vm2924 = vcmp.eq.s32.totalorder %v2894, 1
        %vm2925 = vcmp.eq.s32.totalorder %v2895, 1
        %vm2926 = vcmp.eq.s32.totalorder %v2896, 1
        %vm2927 = vcmp.eq.s32.totalorder %v2897, 1
        %vm2928 = vcmp.eq.s32.totalorder %v2898, 1
        %vm2929 = vcmp.eq.s32.totalorder %v2899, 1
        %vm2930 = vcmp.eq.s32.totalorder %v2900, 1
        %vm2931 = vcmp.eq.s32.totalorder %v2901, 1
        %vm2932 = vcmp.eq.s32.totalorder %v2902, 1
        %vm2933 = vcmp.eq.s32.totalorder %v2903, 1
        %vm2934 = vcmp.eq.s32.totalorder %v2904, 1
        %vm2935 = vcmp.eq.s32.totalorder %v2905, 1
        %vm2936 = vcmp.eq.s32.totalorder %v2906, 1
        %vm2937 = vcmp.eq.s32.totalorder %v2907, 1
        %vm2938 = vcmp.eq.s32.totalorder %v2908, 1
        %vm2939 = vcmp.eq.s32.totalorder %v2909, 1
        %vm2940 = vcmp.eq.s32.totalorder %v2910, 1
        %vm2941 = vcmp.eq.s32.totalorder %v2911, 1
        %vm2942 = vcmp.eq.s32.totalorder %v2912, 1
        %vm2943 = vcmp.eq.s32.totalorder %v2913, 1
        %vm2944 = vcmp.eq.s32.totalorder %v2914, 1
        %vm2945 = vcmp.eq.s32.totalorder %v2915, 1
        %vm2946 = vcmp.eq.s32.totalorder %v2916, 1
        %vm2947 = vcmp.eq.s32.totalorder %v2917, 1
        %vm2948 = vcmp.eq.s32.totalorder %v2918, 1
        %vm2949 = vcmp.eq.s32.totalorder %v2919, 1
        %vm2950 = vcmp.eq.s32.totalorder %v2920, 1
        %vm2951 = vcmp.eq.s32.totalorder %v2921, 1
        %vm2952 = vcmp.eq.s32.totalorder %v2922, 1
        %vm2953 = vcmp.eq.s32.totalorder %v2923, 1
        %v2954 = vsel %vm2924, %v2749, 0.0
        %v2955 = vsel %vm2925, %v2750, 0.0
        %v2956 = vsel %vm2926, %v2751, 0.0
        %v2957 = vsel %vm2927, %v2752, 0.0
        %v2958 = vsel %vm2928, %v2753, 0.0
        %v2959 = vsel %vm2929, %v2754, 0.0
        %v2960 = vsel %vm2930, %v2755, 0.0
        %v2961 = vsel %vm2931, %v2756, 0.0
        %v2962 = vsel %vm2932, %v2757, 0.0
        %v2963 = vsel %vm2933, %v2758, 0.0
        %v2964 = vsel %vm2934, %v2759, 0.0
        %v2965 = vsel %vm2935, %v2760, 0.0
        %v2966 = vsel %vm2936, %v2761, 0.0
        %v2967 = vsel %vm2937, %v2762, 0.0
        %v2968 = vsel %vm2938, %v2763, 0.0
        %v2969 = vsel %vm2939, %v2764, 0.0
        %v2970 = vsel %vm2940, %v2765, 0.0
        %v2971 = vsel %vm2941, %v2766, 0.0
        %v2972 = vsel %vm2942, %v2767, 0.0
        %v2973 = vsel %vm2943, %v2768, 0.0
        %v2974 = vsel %vm2944, %v2769, 0.0
        %v2975 = vsel %vm2945, %v2770, 0.0
        %v2976 = vsel %vm2946, %v2771, 0.0
        %v2977 = vsel %vm2947, %v2772, 0.0
        %v2978 = vsel %vm2948, %v2773, 0.0
        %v2979 = vsel %vm2949, %v2774, 0.0
        %v2980 = vsel %vm2950, %v2775, 0.0
        %v2981 = vsel %vm2951, %v2776, 0.0
        %v2982 = vsel %vm2952, %v2777, 0.0
        %v2983 = vsel %vm2953, %v2778, 0.0
        %v2984 = vpack.c.bf16 %v2955, %v2954
        %v2985 = vpack.c.bf16 %v2956, %v2956
        %v2986 = vpack.c.bf16 %v2958, %v2957
        %v2987 = vpack.c.bf16 %v2959, %v2959
        %v2988 = vpack.c.bf16 %v2961, %v2960
        %v2989 = vpack.c.bf16 %v2962, %v2962
        %v2990 = vpack.c.bf16 %v2964, %v2963
        %v2991 = vpack.c.bf16 %v2965, %v2965
        %v2992 = vpack.c.bf16 %v2967, %v2966
        %v2993 = vpack.c.bf16 %v2968, %v2968
        %v2994 = vpack.c.bf16 %v2970, %v2969
        %v2995 = vpack.c.bf16 %v2971, %v2971
        %v2996 = vpack.c.bf16 %v2973, %v2972
        %v2997 = vpack.c.bf16 %v2974, %v2974
        %v2998 = vpack.c.bf16 %v2976, %v2975
        %v2999 = vpack.c.bf16 %v2977, %v2977
        %v3000 = vpack.c.bf16 %v2979, %v2978
        %v3001 = vpack.c.bf16 %v2980, %v2980
        %v3002 = vpack.c.bf16 %v2982, %v2981
        %v3003 = vpack.c.bf16 %v2983, %v2983
        %v3005 = vshrl.u32 %v2984, 16
        %v3007 = vshll.u32 %v2984, 16
        %v3009 = vrot.slane %v3007, 1
        %v3010 = vor.u32 %v3005, %v3009
        %v3012 = vshll.u32 %v2985, 16
        %v3014 = vrot.slane %v3012, 1
        %v3015 = vsel %vm511, %v3010, %v3014
        %v3017 = vshrl.u32 %v2986, 16
        %v3019 = vshll.u32 %v2986, 16
        %v3021 = vrot.slane %v3019, 1
        %v3022 = vor.u32 %v3017, %v3021
        %v3024 = vshll.u32 %v2987, 16
        %v3026 = vrot.slane %v3024, 1
        %v3027 = vsel %vm511, %v3022, %v3026
        %v3029 = vshrl.u32 %v2988, 16
        %v3031 = vshll.u32 %v2988, 16
        %v3033 = vrot.slane %v3031, 1
        %v3034 = vor.u32 %v3029, %v3033
        %v3036 = vshll.u32 %v2989, 16
        %v3038 = vrot.slane %v3036, 1
        %v3039 = vsel %vm511, %v3034, %v3038
        %v3041 = vshrl.u32 %v2990, 16
        %v3043 = vshll.u32 %v2990, 16
        %v3045 = vrot.slane %v3043, 1
        %v3046 = vor.u32 %v3041, %v3045
        %v3048 = vshll.u32 %v2991, 16
        %v3050 = vrot.slane %v3048, 1
        %v3051 = vsel %vm511, %v3046, %v3050
        %v3053 = vshrl.u32 %v2992, 16
        %v3055 = vshll.u32 %v2992, 16
        %v3057 = vrot.slane %v3055, 1
        %v3058 = vor.u32 %v3053, %v3057
        %v3060 = vshll.u32 %v2993, 16
        %v3062 = vrot.slane %v3060, 1
        %v3063 = vsel %vm511, %v3058, %v3062
        %v3065 = vshrl.u32 %v2994, 16
        %v3067 = vshll.u32 %v2994, 16
        %v3069 = vrot.slane %v3067, 1
        %v3070 = vor.u32 %v3065, %v3069
        %v3072 = vshll.u32 %v2995, 16
        %v3074 = vrot.slane %v3072, 1
        %v3075 = vsel %vm511, %v3070, %v3074
        %v3077 = vshrl.u32 %v2996, 16
        %v3079 = vshll.u32 %v2996, 16
        %v3081 = vrot.slane %v3079, 1
        %v3082 = vor.u32 %v3077, %v3081
        %v3084 = vshll.u32 %v2997, 16
        %v3086 = vrot.slane %v3084, 1
        %v3087 = vsel %vm511, %v3082, %v3086
        %v3089 = vshrl.u32 %v2998, 16
        %v3091 = vshll.u32 %v2998, 16
        %v3093 = vrot.slane %v3091, 1
        %v3094 = vor.u32 %v3089, %v3093
        %v3096 = vshll.u32 %v2999, 16
        %v3098 = vrot.slane %v3096, 1
        %v3099 = vsel %vm511, %v3094, %v3098
        %v3124 = vrot.slane %v2984, 1
        %v3125 = vrot.slane %v2985, 1
        %v3126 = vsel %vm662, %v3124, %v3125
        %v3127 = vrot.slane %v2986, 1
        %v3128 = vrot.slane %v2987, 1
        %v3129 = vsel %vm662, %v3127, %v3128
        %v3130 = vrot.slane %v2988, 1
        %v3131 = vrot.slane %v2989, 1
        %v3132 = vsel %vm662, %v3130, %v3131
        %v3133 = vrot.slane %v2990, 1
        %v3134 = vrot.slane %v2991, 1
        %v3135 = vsel %vm662, %v3133, %v3134
        %v3136 = vrot.slane %v2992, 1
        %v3137 = vrot.slane %v2993, 1
        %v3138 = vsel %vm662, %v3136, %v3137
        %v3139 = vrot.slane %v2994, 1
        %v3140 = vrot.slane %v2995, 1
        %v3141 = vsel %vm662, %v3139, %v3140
        %v3142 = vrot.slane %v2996, 1
        %v3143 = vrot.slane %v2997, 1
        %v3144 = vsel %vm662, %v3142, %v3143
        %v3145 = vrot.slane %v2998, 1
        %v3146 = vrot.slane %v2999, 1
        %v3147 = vsel %vm662, %v3145, %v3146
        %v3156 = vld [vmem:[%s4] sm:$0xf]
        %v3157 = vld [vmem:[%s4 + $0x4] sm:$0xf]
        %v3158 = vld [vmem:[%s4 + $0x8] sm:$0xf]
        %v3159 = vld [vmem:[%s4 + $0xc] sm:$0xf]
        %v3160 = vld [vmem:[%s4 + $0x10] sm:$0xf]
        %v3161 = vld [vmem:[%s4 + $0x14] sm:$0xf]
        %v3162 = vld [vmem:[%s4 + $0x18] sm:$0xf]
        %v3163 = vld [vmem:[%s4 + $0x1c] sm:$0xf]
        %v3164 = vld [vmem:[%s4 + $0x20] sm:$0xf]
        %v3165 = vld [vmem:[%s4 + $0x24] sm:$0xf]
        %v3166 = vld [vmem:[%s4 + $0x28] sm:$0xf]
        %v3167 = vld [vmem:[%s4 + $0x2c] sm:$0xf]
        %v3168 = vld [vmem:[%s4 + $0x30] sm:$0xf]
        %v3169 = vld [vmem:[%s4 + $0x34] sm:$0xf]
        %v3170 = vld [vmem:[%s4 + $0x38] sm:$0xf]
        %v3171 = vld [vmem:[%s4 + $0x3c] sm:$0xf]
        %v3172 = vld [vmem:[%s4 + $0x40] sm:$0xf]
        %v3173 = vld [vmem:[%s4 + $0x44] sm:$0xf]
        %v3174 = vld [vmem:[%s4 + $0x48] sm:$0xf]
        %v3175 = vld [vmem:[%s4 + $0x4c] sm:$0xf]
        %v3176 = vld [vmem:[%s4 + $0x50] sm:$0xf]
        %v3177 = vld [vmem:[%s4 + $0x54] sm:$0xf]
        %v3178 = vld [vmem:[%s4 + $0x58] sm:$0xf]
        %v3179 = vld [vmem:[%s4 + $0x5c] sm:$0xf]
        %v3180 = vld [vmem:[%s4 + $0x60] sm:$0xf]
        %v3181 = vld [vmem:[%s4 + $0x64] sm:$0xf]
        %v3182 = vld [vmem:[%s4 + $0x68] sm:$0xf]
        %v3183 = vld [vmem:[%s4 + $0x6c] sm:$0xf]
        %v3184 = vld [vmem:[%s4 + $0x70] sm:$0xf]
        %v3185 = vld [vmem:[%s4 + $0x74] sm:$0xf]
        %v3186 = vld [vmem:[%s4 + $0x78] sm:$0xf]
        %v3187 = vld [vmem:[%s4 + $0x7c] sm:$0xf]
        %v3188 = vld [vmem:[%s4 + $0x80] sm:$0xf]
        %v3189 = vld [vmem:[%s4 + $0x84] sm:$0xf]
        %v3190 = vld [vmem:[%s4 + $0x88] sm:$0xf]
        %v3191 = vld [vmem:[%s4 + $0x8c] sm:$0xf]
        %v3192 = vld [vmem:[%s4 + $0x90] sm:$0xf]
        %v3193 = vld [vmem:[%s4 + $0x94] sm:$0xf]
        %v3194 = vld [vmem:[%s4 + $0x98] sm:$0xf]
        %v3195 = vld [vmem:[%s4 + $0x9c] sm:$0xf]
        %v3196 = vld [vmem:[%s4 + $0xa0] sm:$0xf]
        %v3197 = vld [vmem:[%s4 + $0xa4] sm:$0xf]
        %v3198 = vld [vmem:[%s4 + $0xa8] sm:$0xf]
        %v3199 = vld [vmem:[%s4 + $0xac] sm:$0xf]
        %v3200 = vld [vmem:[%s4 + $0xb0] sm:$0xf]
        %v3201 = vld [vmem:[%s4 + $0xb4] sm:$0xf]
        %v3202 = vld [vmem:[%s4 + $0xb8] sm:$0xf]
        %v3203 = vld [vmem:[%s4 + $0xbc] sm:$0xf]
        %v3205 = vshrl.u32 %v3000, 16
        %v3207 = vshll.u32 %v3000, 16
        %v3209 = vrot.slane %v3207, 1
        %v3210 = vor.u32 %v3205, %v3209
        %v3212 = vshll.u32 %v3001, 16
        %v3214 = vrot.slane %v3212, 1
        %v3215 = vsel %vm511, %v3210, %v3214
        %v3219 = vrot.slane %v3000, 1
        %v3220 = vrot.slane %v3001, 1
        %v3221 = vsel %vm662, %v3219, %v3220
        %v3223 = vld [vmem:[%s4 + $0xc0] sm:$0xf]
        %v3224 = vld [vmem:[%s4 + $0xc4] sm:$0xf]
        %v3225 = vld [vmem:[%s4 + $0xc8] sm:$0xf]
        %v3226 = vld [vmem:[%s4 + $0xcc] sm:$0xf]
        %v3227 = vld [vmem:[%s4 + $0xd0] sm:$0xf]
        %v3228 = vld [vmem:[%s4 + $0xd4] sm:$0xf]
        %v3229 = vld [vmem:[%s4 + $0xd8] sm:$0xf]
        %v3230 = vld [vmem:[%s4 + $0xdc] sm:$0xf]
        %v3231 = vld [vmem:[%s4 + $0xe0] sm:$0xf]
        %v3232 = vld [vmem:[%s4 + $0xe4] sm:$0xf]
        %v3233 = vld [vmem:[%s4 + $0xe8] sm:$0xf]
        %v3234 = vld [vmem:[%s4 + $0xec] sm:$0xf]
        %v3235 = vld [vmem:[%s4 + $0xf0] sm:$0xf]
        %v3236 = vld [vmem:[%s4 + $0xf4] sm:$0xf]
        %v3237 = vld [vmem:[%s4 + $0xf8] sm:$0xf]
        %v3238 = vld [vmem:[%s4 + $0xfc] sm:$0xf]
        %v3239 = vld [vmem:[%s4 + $0x100] sm:$0xf]
        %v3240 = vld [vmem:[%s4 + $0x104] sm:$0xf]
        %v3241 = vld [vmem:[%s4 + $0x108] sm:$0xf]
        %v3242 = vld [vmem:[%s4 + $0x10c] sm:$0xf]
        %v3243 = vld [vmem:[%s4 + $0x110] sm:$0xf]
        %v3244 = vld [vmem:[%s4 + $0x114] sm:$0xf]
        %v3245 = vld [vmem:[%s4 + $0x118] sm:$0xf]
        %v3246 = vld [vmem:[%s4 + $0x11c] sm:$0xf]
        %v3247 = vld [vmem:[%s4 + $0x120] sm:$0xf]
        %v3248 = vld [vmem:[%s4 + $0x124] sm:$0xf]
        %v3249 = vld [vmem:[%s4 + $0x128] sm:$0xf]
        %v3250 = vld [vmem:[%s4 + $0x12c] sm:$0xf]
        %v3251 = vld [vmem:[%s4 + $0x130] sm:$0xf]
        %v3252 = vld [vmem:[%s4 + $0x134] sm:$0xf]
        %v3253 = vld [vmem:[%s4 + $0x138] sm:$0xf]
        %v3254 = vld [vmem:[%s4 + $0x13c] sm:$0xf]
        %v3255 = vld [vmem:[%s4 + $0x140] sm:$0xf]
        %v3256 = vld [vmem:[%s4 + $0x144] sm:$0xf]
        %v3257 = vld [vmem:[%s4 + $0x148] sm:$0xf]
        %v3258 = vld [vmem:[%s4 + $0x14c] sm:$0xf]
        %v3259 = vld [vmem:[%s4 + $0x150] sm:$0xf]
        %v3260 = vld [vmem:[%s4 + $0x154] sm:$0xf]
        %v3261 = vld [vmem:[%s4 + $0x158] sm:$0xf]
        %v3262 = vld [vmem:[%s4 + $0x15c] sm:$0xf]
        %v3263 = vld [vmem:[%s4 + $0x160] sm:$0xf]
        %v3264 = vld [vmem:[%s4 + $0x164] sm:$0xf]
        %v3265 = vld [vmem:[%s4 + $0x168] sm:$0xf]
        %v3266 = vld [vmem:[%s4 + $0x16c] sm:$0xf]
        %v3267 = vld [vmem:[%s4 + $0x170] sm:$0xf]
        %v3268 = vld [vmem:[%s4 + $0x174] sm:$0xf]
        %v3269 = vld [vmem:[%s4 + $0x178] sm:$0xf]
        %v3270 = vld [vmem:[%s4 + $0x17c] sm:$0xf]
        %v3319 = vunpack.c.l.b16 %v3223
        %v3320 = vunpack.c.l.b16 %v3224
        %v3321 = vunpack.c.l.b16 %v3225
        %v3322 = vunpack.c.l.b16 %v3226
        %v3323 = vunpack.c.l.b16 %v3227
        %v3324 = vunpack.c.l.b16 %v3228
        %v3325 = vunpack.c.l.b16 %v3229
        %v3326 = vunpack.c.l.b16 %v3230
        %v3327 = vunpack.c.l.b16 %v3231
        %v3328 = vunpack.c.l.b16 %v3232
        %v3329 = vunpack.c.l.b16 %v3233
        %v3330 = vunpack.c.l.b16 %v3234
        %v3331 = vunpack.c.l.b16 %v3235
        %v3332 = vunpack.c.l.b16 %v3236
        %v3333 = vunpack.c.l.b16 %v3237
        %v3334 = vunpack.c.l.b16 %v3238
        %v3335 = vunpack.c.l.b16 %v3239
        %v3336 = vunpack.c.l.b16 %v3240
        %v3337 = vunpack.c.l.b16 %v3241
        %v3338 = vunpack.c.l.b16 %v3242
        %v3339 = vunpack.c.l.b16 %v3243
        %v3340 = vunpack.c.l.b16 %v3244
        %v3341 = vunpack.c.l.b16 %v3245
        %v3342 = vunpack.c.l.b16 %v3246
        %v3343 = vunpack.c.l.b16 %v3247
        %v3344 = vunpack.c.l.b16 %v3248
        %v3345 = vunpack.c.l.b16 %v3249
        %v3346 = vunpack.c.l.b16 %v3250
        %v3347 = vunpack.c.l.b16 %v3251
        %v3348 = vunpack.c.l.b16 %v3252
        %v3349 = vunpack.c.l.b16 %v3253
        %v3350 = vunpack.c.l.b16 %v3254
        %v3351 = vunpack.c.l.b16 %v3255
        %v3352 = vunpack.c.l.b16 %v3256
        %v3353 = vunpack.c.l.b16 %v3257
        %v3354 = vunpack.c.l.b16 %v3258
        %v3355 = vunpack.c.l.b16 %v3259
        %v3356 = vunpack.c.l.b16 %v3260
        %v3357 = vunpack.c.l.b16 %v3261
        %v3358 = vunpack.c.l.b16 %v3262
        %v3359 = vunpack.c.l.b16 %v3263
        %v3360 = vunpack.c.l.b16 %v3264
        %v3361 = vunpack.c.l.b16 %v3265
        %v3362 = vunpack.c.l.b16 %v3266
        %v3363 = vunpack.c.l.b16 %v3267
        %v3364 = vunpack.c.l.b16 %v3268
        %v3365 = vunpack.c.l.b16 %v3269
        %v3366 = vunpack.c.l.b16 %v3270
        %v3367 = vpack.c.b16 %v3320, %v3319
        %v3368 = vpack.c.b16 %v3322, %v3321
        %v3369 = vpack.c.b16 %v3324, %v3323
        %v3370 = vpack.c.b16 %v3326, %v3325
        %v3371 = vpack.c.b16 %v3328, %v3327
        %v3372 = vpack.c.b16 %v3330, %v3329
        %v3373 = vpack.c.b16 %v3332, %v3331
        %v3374 = vpack.c.b16 %v3334, %v3333
        %v3375 = vpack.c.b16 %v3336, %v3335
        %v3376 = vpack.c.b16 %v3338, %v3337
        %v3377 = vpack.c.b16 %v3340, %v3339
        %v3378 = vpack.c.b16 %v3342, %v3341
        %v3379 = vpack.c.b16 %v3344, %v3343
        %v3380 = vpack.c.b16 %v3346, %v3345
        %v3381 = vpack.c.b16 %v3348, %v3347
        %v3382 = vpack.c.b16 %v3350, %v3349
        %v3383 = vpack.c.b16 %v3352, %v3351
        %v3384 = vpack.c.b16 %v3354, %v3353
        %v3385 = vpack.c.b16 %v3356, %v3355
        %v3386 = vpack.c.b16 %v3358, %v3357
        %v3387 = vpack.c.b16 %v3360, %v3359
        %v3388 = vpack.c.b16 %v3362, %v3361
        %v3389 = vpack.c.b16 %v3364, %v3363
        %v3390 = vpack.c.b16 %v3366, %v3365
        %3415 = vmatprep.subr.bf16.mxu0 0
        %3416 = vmatpush1.bf16.msra.mxu0 %v3367
        %3417 = vmatprep.subr.bf16.mxu0 0
        %3418 = vmatpush1.bf16.msra.mxu0 %v3368
        %3419 = vmatprep.subr.bf16.mxu0 0
        %3420 = vmatpush1.bf16.msra.mxu0 %v3369
        %3421 = vmatprep.subr.bf16.mxu0 0
        %3422 = vmatpush1.bf16.msra.mxu0 %v3370
        %3423 = vmatprep.subr.bf16.mxu0 0
        %3424 = vmatpush1.bf16.msra.mxu0 %v3371
        %3425 = vmatprep.subr.bf16.mxu0 0
        %3426 = vmatpush1.bf16.msra.mxu0 %v3372
        %3427 = vmatprep.subr.bf16.mxu0 0
        %3428 = vmatpush1.bf16.msra.mxu0 %v3373
        %3429 = vmatprep.subr.bf16.mxu0 0
        %3430 = vmatpush1.bf16.msra.mxu0 %v3374
        %3431 = vmatprep.subr.bf16.mxu0 0
        %3432 = vmatpush1.bf16.msra.mxu0 %v3375
        %3433 = vmatprep.subr.bf16.mxu0 0
        %3434 = vmatpush1.bf16.msra.mxu0 %v3376
        %3435 = vmatprep.subr.bf16.mxu0 0
        %3436 = vmatpush1.bf16.msra.mxu0 %v3377
        %3437 = vmatprep.subr.bf16.mxu0 0
        %3438 = vmatpush1.bf16.msra.mxu0 %v3378
        %3439 = vmatprep.subr.bf16.mxu0 0
        %3440 = vmatpush1.bf16.msra.mxu0 %v3379
        %3441 = vmatprep.subr.bf16.mxu0 0
        %3442 = vmatpush1.bf16.msra.mxu0 %v3380
        %3443 = vmatprep.subr.bf16.mxu0 0
        %3444 = vmatpush1.bf16.msra.mxu0 %v3381
        %3445 = vmatprep.subr.bf16.mxu0 0
        %3446 = vmatpush1.bf16.msra.mxu0 %v3382
        %3447 = vmatprep.mubr.bf16.mxu0 %v3027
        %3448 = vmatmul.mubr.bf16.gmra.mrb[0].mxu0 %v2986
        %v3449 = vpop.f32.mrb[0].mxu0
        %v3450 = vadd.f32 0.0, %v3449
        %v3451 = vpop.f32.mrb[0].mxu0
        %v3452 = vpop.f32.mrb[0].mxu0
        %v3453 = vadd.f32 0.0, %v3452
        %v3454 = vpop.f32.mrb[0].mxu0
        %3455 = vmatprep.mubr.bf16.mxu0 %v3039
        %3456 = vmatmul.mubr.bf16.gmra.mrb[0].mxu0 %v2988
        %v3457 = vpop.f32.mrb[0].mxu0
        %v3458 = vadd.f32 0.0, %v3457
        %v3459 = vpop.f32.mrb[0].mxu0
        %v3460 = vpop.f32.mrb[0].mxu0
        %v3461 = vadd.f32 0.0, %v3460
        %v3462 = vpop.f32.mrb[0].mxu0
        %3463 = vmatprep.mubr.bf16.mxu0 %v3051
        %3464 = vmatmul.mubr.bf16.gmra.mrb[0].mxu0 %v2990
        %v3465 = vpop.f32.mrb[0].mxu0
        %v3466 = vadd.f32 0.0, %v3465
        %v3467 = vpop.f32.mrb[0].mxu0
        %v3468 = vpop.f32.mrb[0].mxu0
        %v3469 = vadd.f32 0.0, %v3468
        %v3470 = vpop.f32.mrb[0].mxu0
        %3471 = vmatprep.mubr.bf16.mxu0 %v3063
        %3472 = vmatmul.mubr.bf16.gmra.mrb[0].mxu0 %v2992
        %v3473 = vpop.f32.mrb[0].mxu0
        %v3474 = vadd.f32 0.0, %v3473
        %v3475 = vpop.f32.mrb[0].mxu0
        %v3476 = vpop.f32.mrb[0].mxu0
        %v3477 = vadd.f32 0.0, %v3476
        %v3478 = vpop.f32.mrb[0].mxu0
        %3479 = vmatprep.mubr.bf16.mxu0 %v3075
        %3480 = vmatmul.mubr.bf16.gmra.mrb[0].mxu0 %v2994
        %v3481 = vpop.f32.mrb[0].mxu0
        %v3482 = vadd.f32 0.0, %v3481
        %v3483 = vpop.f32.mrb[0].mxu0
        %v3484 = vpop.f32.mrb[0].mxu0
        %v3485 = vadd.f32 0.0, %v3484
        %v3486 = vpop.f32.mrb[0].mxu0
        %3487 = vmatprep.mubr.bf16.mxu0 %v3087
        %3488 = vmatmul.mubr.bf16.gmra.mrb[0].mxu0 %v2996
        %v3489 = vpop.f32.mrb[0].mxu0
        %v3490 = vadd.f32 0.0, %v3489
        %v3491 = vpop.f32.mrb[0].mxu0
        %v3492 = vpop.f32.mrb[0].mxu0
        %v3493 = vadd.f32 0.0, %v3492
        %v3494 = vpop.f32.mrb[0].mxu0
        %3495 = vmatprep.mubr.bf16.mxu0 %v3099
        %3496 = vmatmul.mubr.bf16.gmra.mrb[0].mxu0 %v2998
        %v3497 = vpop.f32.mrb[0].mxu0
        %v3498 = vadd.f32 0.0, %v3497
        %v3499 = vpop.f32.mrb[0].mxu0
        %v3500 = vpop.f32.mrb[0].mxu0
        %v3501 = vadd.f32 0.0, %v3500
        %v3502 = vpop.f32.mrb[0].mxu0
        %3503 = vmatprep.mubr.bf16.mxu0 %v3215
        %3504 = vmatmul.mubr.bf16.gmra.mrb[0].mxu0 %v3000
        %v3505 = vpop.f32.mrb[0].mxu0
        %v3506 = vadd.f32 0.0, %v3505
        %v3507 = vpop.f32.mrb[0].mxu0
        %v3508 = vpop.f32.mrb[0].mxu0
        %v3509 = vadd.f32 0.0, %v3508
        %v3510 = vpop.f32.mrb[0].mxu0
        %3511 = vdwg.mxu0
        %3512 = vmatprep.subr.bf16.mxu0 0
        %3513 = vmatpush1.bf16.msra.mxu0 %v3383
        %3514 = vmatprep.subr.bf16.mxu0 0
        %3515 = vmatpush1.bf16.msra.mxu0 %v3384
        %3516 = vmatprep.subr.bf16.mxu0 0
        %3517 = vmatpush1.bf16.msra.mxu0 %v3385
        %3518 = vmatprep.subr.bf16.mxu0 0
        %3519 = vmatpush1.bf16.msra.mxu0 %v3386
        %3520 = vmatprep.subr.bf16.mxu0 0
        %3521 = vmatpush1.bf16.msra.mxu0 %v3387
        %3522 = vmatprep.subr.bf16.mxu0 0
        %3523 = vmatpush1.bf16.msra.mxu0 %v3388
        %3524 = vmatprep.subr.bf16.mxu0 0
        %3525 = vmatpush1.bf16.msra.mxu0 %v3389
        %3526 = vmatprep.subr.bf16.mxu0 0
        %3527 = vmatpush1.bf16.msra.mxu0 %v3390
        %3528 = vmatprep.subr.bf16.mxu0 0
        %3529 = vmatpush1.bf16.msra.mxu0 0
        %3530 = vmatprep.subr.bf16.mxu0 0
        %3531 = vmatpush1.bf16.msra.mxu0 0
        %3532 = vmatprep.subr.bf16.mxu0 0
        %3533 = vmatpush1.bf16.msra.mxu0 0
        %3534 = vmatprep.subr.bf16.mxu0 0
        %3535 = vmatpush1.bf16.msra.mxu0 0
        %3536 = vmatprep.subr.bf16.mxu0 0
        %3537 = vmatpush1.bf16.msra.mxu0 0
        %3538 = vmatprep.subr.bf16.mxu0 0
        %3539 = vmatpush1.bf16.msra.mxu0 0
        %3540 = vmatprep.subr.bf16.mxu0 0
        %3541 = vmatpush1.bf16.msra.mxu0 0
        %3542 = vmatprep.subr.bf16.mxu0 0
        %3543 = vmatpush1.bf16.msra.mxu0 0
        %3544 = vmatprep.mubr.bf16.mxu0 0
        %3545 = vmatmul.mubr.bf16.gmra.mrb[0].mxu0 %v3129
        %v3546 = vpop.f32.mrb[0].mxu0
        %v3547 = vadd.f32 %v3450, %v3546
        %v3548 = vpop.f32.mrb[0].mxu0
        %v3549 = vpop.f32.mrb[0].mxu0
        %v3550 = vadd.f32 %v3453, %v3549
        %v3551 = vpop.f32.mrb[0].mxu0
        %3552 = vmatprep.mubr.bf16.mxu0 0
        %3553 = vmatmul.mubr.bf16.gmra.mrb[0].mxu0 %v3132
        %v3554 = vpop.f32.mrb[0].mxu0
        %v3555 = vadd.f32 %v3458, %v3554
        %v3556 = vpop.f32.mrb[0].mxu0
        %v3557 = vpop.f32.mrb[0].mxu0
        %v3558 = vadd.f32 %v3461, %v3557
        %v3559 = vpop.f32.mrb[0].mxu0
        %3560 = vmatprep.mubr.bf16.mxu0 0
        %3561 = vmatmul.mubr.bf16.gmra.mrb[0].mxu0 %v3135
        %v3562 = vpop.f32.mrb[0].mxu0
        %v3563 = vadd.f32 %v3466, %v3562
        %v3564 = vpop.f32.mrb[0].mxu0
        %v3565 = vpop.f32.mrb[0].mxu0
        %v3566 = vadd.f32 %v3469, %v3565
        %v3567 = vpop.f32.mrb[0].mxu0
        %3568 = vmatprep.mubr.bf16.mxu0 0
        %3569 = vmatmul.mubr.bf16.gmra.mrb[0].mxu0 %v3138
        %v3570 = vpop.f32.mrb[0].mxu0
        %v3571 = vadd.f32 %v3474, %v3570
        %v3572 = vpop.f32.mrb[0].mxu0
        %v3573 = vpop.f32.mrb[0].mxu0
        %v3574 = vadd.f32 %v3477, %v3573
        %v3575 = vpop.f32.mrb[0].mxu0
        %3576 = vmatprep.mubr.bf16.mxu0 0
        %3577 = vmatmul.mubr.bf16.gmra.mrb[0].mxu0 %v3141
        %v3578 = vpop.f32.mrb[0].mxu0
        %v3579 = vadd.f32 %v3482, %v3578
        %v3580 = vpop.f32.mrb[0].mxu0
        %v3581 = vpop.f32.mrb[0].mxu0
        %v3582 = vadd.f32 %v3485, %v3581
        %v3583 = vpop.f32.mrb[0].mxu0
        %3584 = vmatprep.mubr.bf16.mxu0 0
        %3585 = vmatmul.mubr.bf16.gmra.mrb[0].mxu0 %v3144
        %v3586 = vpop.f32.mrb[0].mxu0
        %v3587 = vadd.f32 %v3490, %v3586
        %v3588 = vpop.f32.mrb[0].mxu0
        %v3589 = vpop.f32.mrb[0].mxu0
        %v3590 = vadd.f32 %v3493, %v3589
        %v3591 = vpop.f32.mrb[0].mxu0
        %3592 = vmatprep.mubr.bf16.mxu0 0
        %3593 = vmatmul.mubr.bf16.gmra.mrb[0].mxu0 %v3147
        %v3594 = vpop.f32.mrb[0].mxu0
        %v3595 = vadd.f32 %v3498, %v3594
        %v3596 = vpop.f32.mrb[0].mxu0
        %v3597 = vpop.f32.mrb[0].mxu0
        %v3598 = vadd.f32 %v3501, %v3597
        %v3599 = vpop.f32.mrb[0].mxu0
        %3600 = vmatprep.mubr.bf16.mxu0 0
        %3601 = vmatmul.mubr.bf16.gmra.mrb[0].mxu0 %v3221
        %v3602 = vpop.f32.mrb[0].mxu0
        %v3603 = vadd.f32 %v3506, %v3602
        %v3604 = vpop.f32.mrb[0].mxu0
        %v3605 = vpop.f32.mrb[0].mxu0
        %v3606 = vadd.f32 %v3509, %v3605
        %v3607 = vpop.f32.mrb[0].mxu0
        %3608 = vdwg.mxu0
        %v3657 = vunpack.c.l.b16 %v3156
        %v3658 = vunpack.c.l.b16 %v3157
        %v3659 = vunpack.c.l.b16 %v3158
        %v3660 = vunpack.c.l.b16 %v3159
        %v3661 = vunpack.c.l.b16 %v3160
        %v3662 = vunpack.c.l.b16 %v3161
        %v3663 = vunpack.c.l.b16 %v3162
        %v3664 = vunpack.c.l.b16 %v3163
        %v3665 = vunpack.c.l.b16 %v3164
        %v3666 = vunpack.c.l.b16 %v3165
        %v3667 = vunpack.c.l.b16 %v3166
        %v3668 = vunpack.c.l.b16 %v3167
        %v3669 = vunpack.c.l.b16 %v3168
        %v3670 = vunpack.c.l.b16 %v3169
        %v3671 = vunpack.c.l.b16 %v3170
        %v3672 = vunpack.c.l.b16 %v3171
        %v3673 = vunpack.c.l.b16 %v3172
        %v3674 = vunpack.c.l.b16 %v3173
        %v3675 = vunpack.c.l.b16 %v3174
        %v3676 = vunpack.c.l.b16 %v3175
        %v3677 = vunpack.c.l.b16 %v3176
        %v3678 = vunpack.c.l.b16 %v3177
        %v3679 = vunpack.c.l.b16 %v3178
        %v3680 = vunpack.c.l.b16 %v3179
        %v3681 = vunpack.c.l.b16 %v3180
        %v3682 = vunpack.c.l.b16 %v3181
        %v3683 = vunpack.c.l.b16 %v3182
        %v3684 = vunpack.c.l.b16 %v3183
        %v3685 = vunpack.c.l.b16 %v3184
        %v3686 = vunpack.c.l.b16 %v3185
        %v3687 = vunpack.c.l.b16 %v3186
        %v3688 = vunpack.c.l.b16 %v3187
        %v3689 = vunpack.c.l.b16 %v3188
        %v3690 = vunpack.c.l.b16 %v3189
        %v3691 = vunpack.c.l.b16 %v3190
        %v3692 = vunpack.c.l.b16 %v3191
        %v3693 = vunpack.c.l.b16 %v3192
        %v3694 = vunpack.c.l.b16 %v3193
        %v3695 = vunpack.c.l.b16 %v3194
        %v3696 = vunpack.c.l.b16 %v3195
        %v3697 = vunpack.c.l.b16 %v3196
        %v3698 = vunpack.c.l.b16 %v3197
        %v3699 = vunpack.c.l.b16 %v3198
        %v3700 = vunpack.c.l.b16 %v3199
        %v3701 = vunpack.c.l.b16 %v3200
        %v3702 = vunpack.c.l.b16 %v3201
        %v3703 = vunpack.c.l.b16 %v3202
        %v3704 = vunpack.c.l.b16 %v3203
        %v3705 = vpack.c.b16 %v3658, %v3657
        %v3706 = vpack.c.b16 %v3660, %v3659
        %v3707 = vpack.c.b16 %v3662, %v3661
        %v3708 = vpack.c.b16 %v3664, %v3663
        %v3709 = vpack.c.b16 %v3666, %v3665
        %v3710 = vpack.c.b16 %v3668, %v3667
        %v3711 = vpack.c.b16 %v3670, %v3669
        %v3712 = vpack.c.b16 %v3672, %v3671
        %v3713 = vpack.c.b16 %v3674, %v3673
        %v3714 = vpack.c.b16 %v3676, %v3675
        %v3715 = vpack.c.b16 %v3678, %v3677
        %v3716 = vpack.c.b16 %v3680, %v3679
        %v3717 = vpack.c.b16 %v3682, %v3681
        %v3718 = vpack.c.b16 %v3684, %v3683
        %v3719 = vpack.c.b16 %v3686, %v3685
        %v3720 = vpack.c.b16 %v3688, %v3687
        %v3721 = vpack.c.b16 %v3690, %v3689
        %v3722 = vpack.c.b16 %v3692, %v3691
        %v3723 = vpack.c.b16 %v3694, %v3693
        %v3724 = vpack.c.b16 %v3696, %v3695
        %v3725 = vpack.c.b16 %v3698, %v3697
        %v3726 = vpack.c.b16 %v3700, %v3699
        %v3727 = vpack.c.b16 %v3702, %v3701
        %v3728 = vpack.c.b16 %v3704, %v3703
        %3753 = vmatprep.subr.bf16.mxu0 0
        %3754 = vmatpush1.bf16.msra.mxu0 %v3705
        %3755 = vmatprep.subr.bf16.mxu0 0
        %3756 = vmatpush1.bf16.msra.mxu0 %v3706
        %3757 = vmatprep.subr.bf16.mxu0 0
        %3758 = vmatpush1.bf16.msra.mxu0 %v3707
        %3759 = vmatprep.subr.bf16.mxu0 0
        %3760 = vmatpush1.bf16.msra.mxu0 %v3708
        %3761 = vmatprep.subr.bf16.mxu0 0
        %3762 = vmatpush1.bf16.msra.mxu0 %v3709
        %3763 = vmatprep.subr.bf16.mxu0 0
        %3764 = vmatpush1.bf16.msra.mxu0 %v3710
        %3765 = vmatprep.subr.bf16.mxu0 0
        %3766 = vmatpush1.bf16.msra.mxu0 %v3711
        %3767 = vmatprep.subr.bf16.mxu0 0
        %3768 = vmatpush1.bf16.msra.mxu0 %v3712
        %3769 = vmatprep.subr.bf16.mxu0 0
        %3770 = vmatpush1.bf16.msra.mxu0 %v3713
        %3771 = vmatprep.subr.bf16.mxu0 0
        %3772 = vmatpush1.bf16.msra.mxu0 %v3714
        %3773 = vmatprep.subr.bf16.mxu0 0
        %3774 = vmatpush1.bf16.msra.mxu0 %v3715
        %3775 = vmatprep.subr.bf16.mxu0 0
        %3776 = vmatpush1.bf16.msra.mxu0 %v3716
        %3777 = vmatprep.subr.bf16.mxu0 0
        %3778 = vmatpush1.bf16.msra.mxu0 %v3717
        %3779 = vmatprep.subr.bf16.mxu0 0
        %3780 = vmatpush1.bf16.msra.mxu0 %v3718
        %3781 = vmatprep.subr.bf16.mxu0 0
        %3782 = vmatpush1.bf16.msra.mxu0 %v3719
        %3783 = vmatprep.subr.bf16.mxu0 0
        %3784 = vmatpush1.bf16.msra.mxu0 %v3720
        %3785 = vmatprep.mubr.bf16.mxu0 %v3015
        %3786 = vmatmul.mubr.bf16.gmra.mrb[0].mxu0 %v2984
        %v3787 = vpop.f32.mrb[0].mxu0
        %v3788 = vadd.f32 %v3547, %v3787
        %v3789 = vpop.f32.mrb[0].mxu0
        %v3790 = vpop.f32.mrb[0].mxu0
        %v3791 = vadd.f32 %v3550, %v3790
        %v3792 = vpop.f32.mrb[0].mxu0
        %3793 = vmatprep.mubr.bf16.mxu0 %v3027
        %3794 = vmatmul.mubr.bf16.gmra.mrb[0].mxu0 %v2986
        %v3795 = vpop.f32.mrb[0].mxu0
        %v3796 = vadd.f32 %v3555, %v3795
        %v3797 = vpop.f32.mrb[0].mxu0
        %v3798 = vpop.f32.mrb[0].mxu0
        %v3799 = vadd.f32 %v3558, %v3798
        %v3800 = vpop.f32.mrb[0].mxu0
        %3801 = vmatprep.mubr.bf16.mxu0 %v3039
        %3802 = vmatmul.mubr.bf16.gmra.mrb[0].mxu0 %v2988
        %v3803 = vpop.f32.mrb[0].mxu0
        %v3804 = vadd.f32 %v3563, %v3803
        %v3805 = vpop.f32.mrb[0].mxu0
        %v3806 = vpop.f32.mrb[0].mxu0
        %v3807 = vadd.f32 %v3566, %v3806
        %v3808 = vpop.f32.mrb[0].mxu0
        %3809 = vmatprep.mubr.bf16.mxu0 %v3051
        %3810 = vmatmul.mubr.bf16.gmra.mrb[0].mxu0 %v2990
        %v3811 = vpop.f32.mrb[0].mxu0
        %v3812 = vadd.f32 %v3571, %v3811
        %v3813 = vpop.f32.mrb[0].mxu0
        %v3814 = vpop.f32.mrb[0].mxu0
        %v3815 = vadd.f32 %v3574, %v3814
        %v3816 = vpop.f32.mrb[0].mxu0
        %3817 = vmatprep.mubr.bf16.mxu0 %v3063
        %3818 = vmatmul.mubr.bf16.gmra.mrb[0].mxu0 %v2992
        %v3819 = vpop.f32.mrb[0].mxu0
        %v3820 = vadd.f32 %v3579, %v3819
        %v3821 = vpop.f32.mrb[0].mxu0
        %v3822 = vpop.f32.mrb[0].mxu0
        %v3823 = vadd.f32 %v3582, %v3822
        %v3824 = vpop.f32.mrb[0].mxu0
        %3825 = vmatprep.mubr.bf16.mxu0 %v3075
        %3826 = vmatmul.mubr.bf16.gmra.mrb[0].mxu0 %v2994
        %v3827 = vpop.f32.mrb[0].mxu0
        %v3828 = vadd.f32 %v3587, %v3827
        %v3829 = vpop.f32.mrb[0].mxu0
        %v3830 = vpop.f32.mrb[0].mxu0
        %v3831 = vadd.f32 %v3590, %v3830
        %v3832 = vpop.f32.mrb[0].mxu0
        %3833 = vmatprep.mubr.bf16.mxu0 %v3087
        %3834 = vmatmul.mubr.bf16.gmra.mrb[0].mxu0 %v2996
        %v3835 = vpop.f32.mrb[0].mxu0
        %v3836 = vadd.f32 %v3595, %v3835
        %v3837 = vpop.f32.mrb[0].mxu0
        %v3838 = vpop.f32.mrb[0].mxu0
        %v3839 = vadd.f32 %v3598, %v3838
        %v3840 = vpop.f32.mrb[0].mxu0
        %3841 = vmatprep.mubr.bf16.mxu0 %v3099
        %3842 = vmatmul.mubr.bf16.gmra.mrb[0].mxu0 %v2998
        %v3843 = vpop.f32.mrb[0].mxu0
        %v3844 = vadd.f32 %v3603, %v3843
        %v3845 = vpop.f32.mrb[0].mxu0
        %v3846 = vpop.f32.mrb[0].mxu0
        %v3847 = vadd.f32 %v3606, %v3846
        %v3848 = vpop.f32.mrb[0].mxu0
        %3849 = vdwg.mxu0
        %3850 = vmatprep.subr.bf16.mxu0 0
        %3851 = vmatpush1.bf16.msra.mxu0 %v3721
        %3852 = vmatprep.subr.bf16.mxu0 0
        %3853 = vmatpush1.bf16.msra.mxu0 %v3722
        %3854 = vmatprep.subr.bf16.mxu0 0
        %3855 = vmatpush1.bf16.msra.mxu0 %v3723
        %3856 = vmatprep.subr.bf16.mxu0 0
        %3857 = vmatpush1.bf16.msra.mxu0 %v3724
        %3858 = vmatprep.subr.bf16.mxu0 0
        %3859 = vmatpush1.bf16.msra.mxu0 %v3725
        %3860 = vmatprep.subr.bf16.mxu0 0
        %3861 = vmatpush1.bf16.msra.mxu0 %v3726
        %3862 = vmatprep.subr.bf16.mxu0 0
        %3863 = vmatpush1.bf16.msra.mxu0 %v3727
        %3864 = vmatprep.subr.bf16.mxu0 0
        %3865 = vmatpush1.bf16.msra.mxu0 %v3728
        %3866 = vmatprep.subr.bf16.mxu0 0
        %3867 = vmatpush1.bf16.msra.mxu0 0
        %3868 = vmatprep.subr.bf16.mxu0 0
        %3869 = vmatpush1.bf16.msra.mxu0 0
        %3870 = vmatprep.subr.bf16.mxu0 0
        %3871 = vmatpush1.bf16.msra.mxu0 0
        %3872 = vmatprep.subr.bf16.mxu0 0
        %3873 = vmatpush1.bf16.msra.mxu0 0
        %3874 = vmatprep.subr.bf16.mxu0 0
        %3875 = vmatpush1.bf16.msra.mxu0 0
        %3876 = vmatprep.subr.bf16.mxu0 0
        %3877 = vmatpush1.bf16.msra.mxu0 0
        %3878 = vmatprep.subr.bf16.mxu0 0
        %3879 = vmatpush1.bf16.msra.mxu0 0
        %3880 = vmatprep.subr.bf16.mxu0 0
        %3881 = vmatpush1.bf16.msra.mxu0 0
        %3882 = vmatprep.mubr.bf16.mxu0 0
        %3883 = vmatmul.mubr.bf16.gmra.mrb[0].mxu0 %v3126
        %v3884 = vpop.f32.mrb[0].mxu0
        %v3885 = vadd.f32 %v3788, %v3884
        %v3886 = vpop.f32.mrb[0].mxu0
        %v3887 = vpop.f32.mrb[0].mxu0
        %v3888 = vadd.f32 %v3791, %v3887
        %v3889 = vpop.f32.mrb[0].mxu0
        %3890 = vmatprep.mubr.bf16.mxu0 0
        %3891 = vmatmul.mubr.bf16.gmra.mrb[0].mxu0 %v3129
        %v3892 = vpop.f32.mrb[0].mxu0
        %v3893 = vadd.f32 %v3796, %v3892
        %v3894 = vpop.f32.mrb[0].mxu0
        %v3895 = vpop.f32.mrb[0].mxu0
        %v3896 = vadd.f32 %v3799, %v3895
        %v3897 = vpop.f32.mrb[0].mxu0
        %3898 = vmatprep.mubr.bf16.mxu0 0
        %3899 = vmatmul.mubr.bf16.gmra.mrb[0].mxu0 %v3132
        %v3900 = vpop.f32.mrb[0].mxu0
        %v3901 = vadd.f32 %v3804, %v3900
        %v3902 = vpop.f32.mrb[0].mxu0
        %v3903 = vpop.f32.mrb[0].mxu0
        %v3904 = vadd.f32 %v3807, %v3903
        %v3905 = vpop.f32.mrb[0].mxu0
        %3906 = vmatprep.mubr.bf16.mxu0 0
        %3907 = vmatmul.mubr.bf16.gmra.mrb[0].mxu0 %v3135
        %v3908 = vpop.f32.mrb[0].mxu0
        %v3909 = vadd.f32 %v3812, %v3908
        %v3910 = vpop.f32.mrb[0].mxu0
        %v3911 = vpop.f32.mrb[0].mxu0
        %v3912 = vadd.f32 %v3815, %v3911
        %v3913 = vpop.f32.mrb[0].mxu0
        %3914 = vmatprep.mubr.bf16.mxu0 0
        %3915 = vmatmul.mubr.bf16.gmra.mrb[0].mxu0 %v3138
        %v3916 = vpop.f32.mrb[0].mxu0
        %v3917 = vadd.f32 %v3820, %v3916
        %v3918 = vpop.f32.mrb[0].mxu0
        %v3919 = vpop.f32.mrb[0].mxu0
        %v3920 = vadd.f32 %v3823, %v3919
        %v3921 = vpop.f32.mrb[0].mxu0
        %3922 = vmatprep.mubr.bf16.mxu0 0
        %3923 = vmatmul.mubr.bf16.gmra.mrb[0].mxu0 %v3141
        %v3924 = vpop.f32.mrb[0].mxu0
        %v3925 = vadd.f32 %v3828, %v3924
        %v3926 = vpop.f32.mrb[0].mxu0
        %v3927 = vpop.f32.mrb[0].mxu0
        %v3928 = vadd.f32 %v3831, %v3927
        %v3929 = vpop.f32.mrb[0].mxu0
        %3930 = vmatprep.mubr.bf16.mxu0 0
        %3931 = vmatmul.mubr.bf16.gmra.mrb[0].mxu0 %v3144
        %v3932 = vpop.f32.mrb[0].mxu0
        %v3933 = vadd.f32 %v3836, %v3932
        %v3934 = vpop.f32.mrb[0].mxu0
        %v3935 = vpop.f32.mrb[0].mxu0
        %v3936 = vadd.f32 %v3839, %v3935
        %v3937 = vpop.f32.mrb[0].mxu0
        %3938 = vmatprep.mubr.bf16.mxu0 0
        %3939 = vmatmul.mubr.bf16.gmra.mrb[0].mxu0 %v3147
        %v3940 = vpop.f32.mrb[0].mxu0
        %v3941 = vadd.f32 %v3844, %v3940
        %v3942 = vpop.f32.mrb[0].mxu0
        %v3943 = vpop.f32.mrb[0].mxu0
        %v3944 = vadd.f32 %v3847, %v3943
        %v3945 = vpop.f32.mrb[0].mxu0
        %3946 = vdwg.mxu0
        %v3948 = vshrl.u32 %v3002, 16
        %v3950 = vshll.u32 %v3002, 16
        %v3952 = vrot.slane %v3950, 1
        %v3953 = vor.u32 %v3948, %v3952
        %v3955 = vshll.u32 %v3003, 16
        %v3957 = vrot.slane %v3955, 1
        %v3958 = vsel %vm511, %v3953, %v3957
        %v3962 = vrot.slane %v3002, 1
        %v3963 = vrot.slane %v3003, 1
        %v3964 = vsel %vm662, %v3962, %v3963
        %v3966 = vld [vmem:[%s4 + $0x180] sm:$0xf]
        %v3967 = vld [vmem:[%s4 + $0x184] sm:$0xf]
        %v3968 = vld [vmem:[%s4 + $0x188] sm:$0xf]
        %v3969 = vld [vmem:[%s4 + $0x18c] sm:$0xf]
        %v3970 = vld [vmem:[%s4 + $0x190] sm:$0xf]
        %v3971 = vld [vmem:[%s4 + $0x194] sm:$0xf]
        %v3972 = vld [vmem:[%s4 + $0x198] sm:$0xf]
        %v3973 = vld [vmem:[%s4 + $0x19c] sm:$0xf]
        %v3974 = vld [vmem:[%s4 + $0x1a0] sm:$0xf]
        %v3975 = vld [vmem:[%s4 + $0x1a4] sm:$0xf]
        %v3976 = vld [vmem:[%s4 + $0x1a8] sm:$0xf]
        %v3977 = vld [vmem:[%s4 + $0x1ac] sm:$0xf]
        %v3978 = vld [vmem:[%s4 + $0x1b0] sm:$0xf]
        %v3979 = vld [vmem:[%s4 + $0x1b4] sm:$0xf]
        %v3980 = vld [vmem:[%s4 + $0x1b8] sm:$0xf]
        %v3981 = vld [vmem:[%s4 + $0x1bc] sm:$0xf]
        %v3982 = vld [vmem:[%s4 + $0x1c0] sm:$0xf]
        %v3983 = vld [vmem:[%s4 + $0x1c4] sm:$0xf]
        %v3984 = vld [vmem:[%s4 + $0x1c8] sm:$0xf]
        %v3985 = vld [vmem:[%s4 + $0x1cc] sm:$0xf]
        %v3986 = vld [vmem:[%s4 + $0x1d0] sm:$0xf]
        %v3987 = vld [vmem:[%s4 + $0x1d4] sm:$0xf]
        %v3988 = vld [vmem:[%s4 + $0x1d8] sm:$0xf]
        %v3989 = vld [vmem:[%s4 + $0x1dc] sm:$0xf]
        %v3990 = vld [vmem:[%s4 + $0x1e0] sm:$0xf]
        %v3991 = vld [vmem:[%s4 + $0x1e4] sm:$0xf]
        %v3992 = vld [vmem:[%s4 + $0x1e8] sm:$0xf]
        %v3993 = vld [vmem:[%s4 + $0x1ec] sm:$0xf]
        %v3994 = vld [vmem:[%s4 + $0x1f0] sm:$0xf]
        %v3995 = vld [vmem:[%s4 + $0x1f4] sm:$0xf]
        %v3996 = vld [vmem:[%s4 + $0x1f8] sm:$0xf]
        %v3997 = vld [vmem:[%s4 + $0x1fc] sm:$0xf]
        %v3998 = vld [vmem:[%s4 + $0x200] sm:$0xf]
        %v3999 = vld [vmem:[%s4 + $0x204] sm:$0xf]
        %v4000 = vld [vmem:[%s4 + $0x208] sm:$0xf]
        %v4001 = vld [vmem:[%s4 + $0x20c] sm:$0xf]
        %v4002 = vld [vmem:[%s4 + $0x210] sm:$0xf]
        %v4003 = vld [vmem:[%s4 + $0x214] sm:$0xf]
        %v4004 = vld [vmem:[%s4 + $0x218] sm:$0xf]
        %v4005 = vld [vmem:[%s4 + $0x21c] sm:$0xf]
        %v4006 = vld [vmem:[%s4 + $0x220] sm:$0xf]
        %v4007 = vld [vmem:[%s4 + $0x224] sm:$0xf]
        %v4008 = vld [vmem:[%s4 + $0x228] sm:$0xf]
        %v4009 = vld [vmem:[%s4 + $0x22c] sm:$0xf]
        %v4010 = vld [vmem:[%s4 + $0x230] sm:$0xf]
        %v4011 = vld [vmem:[%s4 + $0x234] sm:$0xf]
        %v4012 = vld [vmem:[%s4 + $0x238] sm:$0xf]
        %v4013 = vld [vmem:[%s4 + $0x23c] sm:$0xf]
        %v4062 = vunpack.c.l.b16 %v3966
        %v4063 = vunpack.c.l.b16 %v3967
        %v4064 = vunpack.c.l.b16 %v3968
        %v4065 = vunpack.c.l.b16 %v3969
        %v4066 = vunpack.c.l.b16 %v3970
        %v4067 = vunpack.c.l.b16 %v3971
        %v4068 = vunpack.c.l.b16 %v3972
        %v4069 = vunpack.c.l.b16 %v3973
        %v4070 = vunpack.c.l.b16 %v3974
        %v4071 = vunpack.c.l.b16 %v3975
        %v4072 = vunpack.c.l.b16 %v3976
        %v4073 = vunpack.c.l.b16 %v3977
        %v4074 = vunpack.c.l.b16 %v3978
        %v4075 = vunpack.c.l.b16 %v3979
        %v4076 = vunpack.c.l.b16 %v3980
        %v4077 = vunpack.c.l.b16 %v3981
        %v4078 = vunpack.c.l.b16 %v3982
        %v4079 = vunpack.c.l.b16 %v3983
        %v4080 = vunpack.c.l.b16 %v3984
        %v4081 = vunpack.c.l.b16 %v3985
        %v4082 = vunpack.c.l.b16 %v3986
        %v4083 = vunpack.c.l.b16 %v3987
        %v4084 = vunpack.c.l.b16 %v3988
        %v4085 = vunpack.c.l.b16 %v3989
        %v4086 = vunpack.c.l.b16 %v3990
        %v4087 = vunpack.c.l.b16 %v3991
        %v4088 = vunpack.c.l.b16 %v3992
        %v4089 = vunpack.c.l.b16 %v3993
        %v4090 = vunpack.c.l.b16 %v3994
        %v4091 = vunpack.c.l.b16 %v3995
        %v4092 = vunpack.c.l.b16 %v3996
        %v4093 = vunpack.c.l.b16 %v3997
        %v4094 = vunpack.c.l.b16 %v3998
        %v4095 = vunpack.c.l.b16 %v3999
        %v4096 = vunpack.c.l.b16 %v4000
        %v4097 = vunpack.c.l.b16 %v4001
        %v4098 = vunpack.c.l.b16 %v4002
        %v4099 = vunpack.c.l.b16 %v4003
        %v4100 = vunpack.c.l.b16 %v4004
        %v4101 = vunpack.c.l.b16 %v4005
        %v4102 = vunpack.c.l.b16 %v4006
        %v4103 = vunpack.c.l.b16 %v4007
        %v4104 = vunpack.c.l.b16 %v4008
        %v4105 = vunpack.c.l.b16 %v4009
        %v4106 = vunpack.c.l.b16 %v4010
        %v4107 = vunpack.c.l.b16 %v4011
        %v4108 = vunpack.c.l.b16 %v4012
        %v4109 = vunpack.c.l.b16 %v4013
        %v4110 = vpack.c.b16 %v4063, %v4062
        %v4111 = vpack.c.b16 %v4065, %v4064
        %v4112 = vpack.c.b16 %v4067, %v4066
        %v4113 = vpack.c.b16 %v4069, %v4068
        %v4114 = vpack.c.b16 %v4071, %v4070
        %v4115 = vpack.c.b16 %v4073, %v4072
        %v4116 = vpack.c.b16 %v4075, %v4074
        %v4117 = vpack.c.b16 %v4077, %v4076
        %v4118 = vpack.c.b16 %v4079, %v4078
        %v4119 = vpack.c.b16 %v4081, %v4080
        %v4120 = vpack.c.b16 %v4083, %v4082
        %v4121 = vpack.c.b16 %v4085, %v4084
        %v4122 = vpack.c.b16 %v4087, %v4086
        %v4123 = vpack.c.b16 %v4089, %v4088
        %v4124 = vpack.c.b16 %v4091, %v4090
        %v4125 = vpack.c.b16 %v4093, %v4092
        %v4126 = vpack.c.b16 %v4095, %v4094
        %v4127 = vpack.c.b16 %v4097, %v4096
        %v4128 = vpack.c.b16 %v4099, %v4098
        %v4129 = vpack.c.b16 %v4101, %v4100
        %v4130 = vpack.c.b16 %v4103, %v4102
        %v4131 = vpack.c.b16 %v4105, %v4104
        %v4132 = vpack.c.b16 %v4107, %v4106
        %v4133 = vpack.c.b16 %v4109, %v4108
        %4158 = vmatprep.subr.bf16.mxu0 0
        %4159 = vmatpush1.bf16.msra.mxu0 %v4110
        %4160 = vmatprep.subr.bf16.mxu0 0
        %4161 = vmatpush1.bf16.msra.mxu0 %v4111
        %4162 = vmatprep.subr.bf16.mxu0 0
        %4163 = vmatpush1.bf16.msra.mxu0 %v4112
        %4164 = vmatprep.subr.bf16.mxu0 0
        %4165 = vmatpush1.bf16.msra.mxu0 %v4113
        %4166 = vmatprep.subr.bf16.mxu0 0
        %4167 = vmatpush1.bf16.msra.mxu0 %v4114
        %4168 = vmatprep.subr.bf16.mxu0 0
        %4169 = vmatpush1.bf16.msra.mxu0 %v4115
        %4170 = vmatprep.subr.bf16.mxu0 0
        %4171 = vmatpush1.bf16.msra.mxu0 %v4116
        %4172 = vmatprep.subr.bf16.mxu0 0
        %4173 = vmatpush1.bf16.msra.mxu0 %v4117
        %4174 = vmatprep.subr.bf16.mxu0 0
        %4175 = vmatpush1.bf16.msra.mxu0 %v4118
        %4176 = vmatprep.subr.bf16.mxu0 0
        %4177 = vmatpush1.bf16.msra.mxu0 %v4119
        %4178 = vmatprep.subr.bf16.mxu0 0
        %4179 = vmatpush1.bf16.msra.mxu0 %v4120
        %4180 = vmatprep.subr.bf16.mxu0 0
        %4181 = vmatpush1.bf16.msra.mxu0 %v4121
        %4182 = vmatprep.subr.bf16.mxu0 0
        %4183 = vmatpush1.bf16.msra.mxu0 %v4122
        %4184 = vmatprep.subr.bf16.mxu0 0
        %4185 = vmatpush1.bf16.msra.mxu0 %v4123
        %4186 = vmatprep.subr.bf16.mxu0 0
        %4187 = vmatpush1.bf16.msra.mxu0 %v4124
        %4188 = vmatprep.subr.bf16.mxu0 0
        %4189 = vmatpush1.bf16.msra.mxu0 %v4125
        %4190 = vmatprep.mubr.bf16.mxu0 %v3039
        %4191 = vmatmul.mubr.bf16.gmra.mrb[0].mxu0 %v2988
        %v4192 = vpop.f32.mrb[0].mxu0
        %v4193 = vadd.f32 0.0, %v4192
        %v4194 = vpop.f32.mrb[0].mxu0
        %v4195 = vpop.f32.mrb[0].mxu0
        %v4196 = vadd.f32 0.0, %v4195
        %v4197 = vpop.f32.mrb[0].mxu0
        %4198 = vmatprep.mubr.bf16.mxu0 %v3051
        %4199 = vmatmul.mubr.bf16.gmra.mrb[0].mxu0 %v2990
        %v4200 = vpop.f32.mrb[0].mxu0
        %v4201 = vadd.f32 0.0, %v4200
        %v4202 = vpop.f32.mrb[0].mxu0
        %v4203 = vpop.f32.mrb[0].mxu0
        %v4204 = vadd.f32 0.0, %v4203
        %v4205 = vpop.f32.mrb[0].mxu0
        %4206 = vmatprep.mubr.bf16.mxu0 %v3063
        %4207 = vmatmul.mubr.bf16.gmra.mrb[0].mxu0 %v2992
        %v4208 = vpop.f32.mrb[0].mxu0
        %v4209 = vadd.f32 0.0, %v4208
        %v4210 = vpop.f32.mrb[0].mxu0
        %v4211 = vpop.f32.mrb[0].mxu0
        %v4212 = vadd.f32 0.0, %v4211
        %v4213 = vpop.f32.mrb[0].mxu0
        %4214 = vmatprep.mubr.bf16.mxu0 %v3075
        %4215 = vmatmul.mubr.bf16.gmra.mrb[0].mxu0 %v2994
        %v4216 = vpop.f32.mrb[0].mxu0
        %v4217 = vadd.f32 0.0, %v4216
        %v4218 = vpop.f32.mrb[0].mxu0
        %v4219 = vpop.f32.mrb[0].mxu0
        %v4220 = vadd.f32 0.0, %v4219
        %v4221 = vpop.f32.mrb[0].mxu0
        %4222 = vmatprep.mubr.bf16.mxu0 %v3087
        %4223 = vmatmul.mubr.bf16.gmra.mrb[0].mxu0 %v2996
        %v4224 = vpop.f32.mrb[0].mxu0
        %v4225 = vadd.f32 0.0, %v4224
        %v4226 = vpop.f32.mrb[0].mxu0
        %v4227 = vpop.f32.mrb[0].mxu0
        %v4228 = vadd.f32 0.0, %v4227
        %v4229 = vpop.f32.mrb[0].mxu0
        %4230 = vmatprep.mubr.bf16.mxu0 %v3099
        %4231 = vmatmul.mubr.bf16.gmra.mrb[0].mxu0 %v2998
        %v4232 = vpop.f32.mrb[0].mxu0
        %v4233 = vadd.f32 0.0, %v4232
        %v4234 = vpop.f32.mrb[0].mxu0
        %v4235 = vpop.f32.mrb[0].mxu0
        %v4236 = vadd.f32 0.0, %v4235
        %v4237 = vpop.f32.mrb[0].mxu0
        %4238 = vmatprep.mubr.bf16.mxu0 %v3215
        %4239 = vmatmul.mubr.bf16.gmra.mrb[0].mxu0 %v3000
        %v4240 = vpop.f32.mrb[0].mxu0
        %v4241 = vadd.f32 0.0, %v4240
        %v4242 = vpop.f32.mrb[0].mxu0
        %v4243 = vpop.f32.mrb[0].mxu0
        %v4244 = vadd.f32 0.0, %v4243
        %v4245 = vpop.f32.mrb[0].mxu0
        %4246 = vmatprep.mubr.bf16.mxu0 %v3958
        %4247 = vmatmul.mubr.bf16.gmra.mrb[0].mxu0 %v3002
        %v4248 = vpop.f32.mrb[0].mxu0
        %v4249 = vadd.f32 0.0, %v4248
        %v4250 = vpop.f32.mrb[0].mxu0
        %v4251 = vpop.f32.mrb[0].mxu0
        %v4252 = vadd.f32 0.0, %v4251
        %v4253 = vpop.f32.mrb[0].mxu0
        %4254 = vdwg.mxu0
        %4255 = vmatprep.subr.bf16.mxu0 0
        %4256 = vmatpush1.bf16.msra.mxu0 %v4126
        %4257 = vmatprep.subr.bf16.mxu0 0
        %4258 = vmatpush1.bf16.msra.mxu0 %v4127
        %4259 = vmatprep.subr.bf16.mxu0 0
        %4260 = vmatpush1.bf16.msra.mxu0 %v4128
        %4261 = vmatprep.subr.bf16.mxu0 0
        %4262 = vmatpush1.bf16.msra.mxu0 %v4129
        %4263 = vmatprep.subr.bf16.mxu0 0
        %4264 = vmatpush1.bf16.msra.mxu0 %v4130
        %4265 = vmatprep.subr.bf16.mxu0 0
        %4266 = vmatpush1.bf16.msra.mxu0 %v4131
        %4267 = vmatprep.subr.bf16.mxu0 0
        %4268 = vmatpush1.bf16.msra.mxu0 %v4132
        %4269 = vmatprep.subr.bf16.mxu0 0
        %4270 = vmatpush1.bf16.msra.mxu0 %v4133
        %4271 = vmatprep.subr.bf16.mxu0 0
        %4272 = vmatpush1.bf16.msra.mxu0 0
        %4273 = vmatprep.subr.bf16.mxu0 0
        %4274 = vmatpush1.bf16.msra.mxu0 0
        %4275 = vmatprep.subr.bf16.mxu0 0
        %4276 = vmatpush1.bf16.msra.mxu0 0
        %4277 = vmatprep.subr.bf16.mxu0 0
        %4278 = vmatpush1.bf16.msra.mxu0 0
        %4279 = vmatprep.subr.bf16.mxu0 0
        %4280 = vmatpush1.bf16.msra.mxu0 0
        %4281 = vmatprep.subr.bf16.mxu0 0
        %4282 = vmatpush1.bf16.msra.mxu0 0
        %4283 = vmatprep.subr.bf16.mxu0 0
        %4284 = vmatpush1.bf16.msra.mxu0 0
        %4285 = vmatprep.subr.bf16.mxu0 0
        %4286 = vmatpush1.bf16.msra.mxu0 0
        %4287 = vmatprep.mubr.bf16.mxu0 0
        %4288 = vmatmul.mubr.bf16.gmra.mrb[0].mxu0 %v3132
        %v4289 = vpop.f32.mrb[0].mxu0
        %v4290 = vadd.f32 %v4193, %v4289
        %v4291 = vpop.f32.mrb[0].mxu0
        %v4292 = vpop.f32.mrb[0].mxu0
        %v4293 = vadd.f32 %v4196, %v4292
        %v4294 = vpop.f32.mrb[0].mxu0
        %4295 = vmatprep.mubr.bf16.mxu0 0
        %4296 = vmatmul.mubr.bf16.gmra.mrb[0].mxu0 %v3135
        %v4297 = vpop.f32.mrb[0].mxu0
        %v4298 = vadd.f32 %v4201, %v4297
        %v4299 = vpop.f32.mrb[0].mxu0
        %v4300 = vpop.f32.mrb[0].mxu0
        %v4301 = vadd.f32 %v4204, %v4300
        %v4302 = vpop.f32.mrb[0].mxu0
        %4303 = vmatprep.mubr.bf16.mxu0 0
        %4304 = vmatmul.mubr.bf16.gmra.mrb[0].mxu0 %v3138
        %v4305 = vpop.f32.mrb[0].mxu0
        %v4306 = vadd.f32 %v4209, %v4305
        %v4307 = vpop.f32.mrb[0].mxu0
        %v4308 = vpop.f32.mrb[0].mxu0
        %v4309 = vadd.f32 %v4212, %v4308
        %v4310 = vpop.f32.mrb[0].mxu0
        %4311 = vmatprep.mubr.bf16.mxu0 0
        %4312 = vmatmul.mubr.bf16.gmra.mrb[0].mxu0 %v3141
        %v4313 = vpop.f32.mrb[0].mxu0
        %v4314 = vadd.f32 %v4217, %v4313
        %v4315 = vpop.f32.mrb[0].mxu0
        %v4316 = vpop.f32.mrb[0].mxu0
        %v4317 = vadd.f32 %v4220, %v4316
        %v4318 = vpop.f32.mrb[0].mxu0
        %4319 = vmatprep.mubr.bf16.mxu0 0
        %4320 = vmatmul.mubr.bf16.gmra.mrb[0].mxu0 %v3144
        %v4321 = vpop.f32.mrb[0].mxu0
        %v4322 = vadd.f32 %v4225, %v4321
        %v4323 = vpop.f32.mrb[0].mxu0
        %v4324 = vpop.f32.mrb[0].mxu0
        %v4325 = vadd.f32 %v4228, %v4324
        %v4326 = vpop.f32.mrb[0].mxu0
        %4327 = vmatprep.mubr.bf16.mxu0 0
        %4328 = vmatmul.mubr.bf16.gmra.mrb[0].mxu0 %v3147
        %v4329 = vpop.f32.mrb[0].mxu0
        %v4330 = vadd.f32 %v4233, %v4329
        %v4331 = vpop.f32.mrb[0].mxu0
        %v4332 = vpop.f32.mrb[0].mxu0
        %v4333 = vadd.f32 %v4236, %v4332
        %v4334 = vpop.f32.mrb[0].mxu0
        %4335 = vmatprep.mubr.bf16.mxu0 0
        %4336 = vmatmul.mubr.bf16.gmra.mrb[0].mxu0 %v3221
        %v4337 = vpop.f32.mrb[0].mxu0
        %v4338 = vadd.f32 %v4241, %v4337
        %v4339 = vpop.f32.mrb[0].mxu0
        %v4340 = vpop.f32.mrb[0].mxu0
        %v4341 = vadd.f32 %v4244, %v4340
        %v4342 = vpop.f32.mrb[0].mxu0
        %4343 = vmatprep.mubr.bf16.mxu0 0
        %4344 = vmatmul.mubr.bf16.gmra.mrb[0].mxu0 %v3964
        %v4345 = vpop.f32.mrb[0].mxu0
        %v4346 = vadd.f32 %v4249, %v4345
        %v4347 = vpop.f32.mrb[0].mxu0
        %v4348 = vpop.f32.mrb[0].mxu0
        %v4349 = vadd.f32 %v4252, %v4348
        %v4350 = vpop.f32.mrb[0].mxu0
        %4351 = vdwg.mxu0
        %v4352 = vadd.f32 %v3885, %v4290
        %v4353 = vadd.f32 %v3888, %v4293
        %v4354 = vadd.f32 %v3893, %v4298
        %v4355 = vadd.f32 %v3896, %v4301
        %v4356 = vadd.f32 %v3901, %v4306
        %v4357 = vadd.f32 %v3904, %v4309
        %v4358 = vadd.f32 %v3909, %v4314
        %v4359 = vadd.f32 %v3912, %v4317
        %v4360 = vadd.f32 %v3917, %v4322
        %v4361 = vadd.f32 %v3920, %v4325
        %v4362 = vadd.f32 %v3925, %v4330
        %v4363 = vadd.f32 %v3928, %v4333
        %v4364 = vadd.f32 %v3933, %v4338
        %v4365 = vadd.f32 %v3936, %v4341
        %v4366 = vadd.f32 %v3941, %v4346
        %v4367 = vadd.f32 %v3944, %v4349
        %v4368 = vld [vmem:[%s5] sm:$0x1]
        %v4370 = vlaneseq
        %v4371 = vshrl.u32 %v4370, 7
        %v4372 = vsub.s32 0, %v4371
        %v4373 = vrot.slane %v4368, %v4372
        %v4375 = vadd.f32 %v4352, %v4373
        %v4376 = vadd.f32 %v4353, %v4373
        %v4377 = vadd.f32 %v4354, %v4373
        %v4378 = vadd.f32 %v4355, %v4373
        %v4379 = vadd.f32 %v4356, %v4373
        %v4380 = vadd.f32 %v4357, %v4373
        %v4381 = vadd.f32 %v4358, %v4373
        %v4382 = vadd.f32 %v4359, %v4373
        %v4383 = vadd.f32 %v4360, %v4373
        %v4384 = vadd.f32 %v4361, %v4373
        %v4385 = vadd.f32 %v4362, %v4373
        %v4386 = vadd.f32 %v4363, %v4373
        %v4387 = vadd.f32 %v4364, %v4373
        %v4388 = vadd.f32 %v4365, %v4373
        %v4389 = vadd.f32 %v4366, %v4373
        %v4390 = vadd.f32 %v4367, %v4373
        %v4391 = vxor.u32 %v4375, 2147483648
        %v4392 = vxor.u32 %v4376, 2147483648
        %v4393 = vxor.u32 %v4377, 2147483648
        %v4394 = vxor.u32 %v4378, 2147483648
        %v4395 = vxor.u32 %v4379, 2147483648
        %v4396 = vxor.u32 %v4380, 2147483648
        %v4397 = vxor.u32 %v4381, 2147483648
        %v4398 = vxor.u32 %v4382, 2147483648
        %v4399 = vxor.u32 %v4383, 2147483648
        %v4400 = vxor.u32 %v4384, 2147483648
        %v4401 = vxor.u32 %v4385, 2147483648
        %v4402 = vxor.u32 %v4386, 2147483648
        %v4403 = vxor.u32 %v4387, 2147483648
        %v4404 = vxor.u32 %v4388, 2147483648
        %v4405 = vxor.u32 %v4389, 2147483648
        %v4406 = vxor.u32 %v4390, 2147483648
        %v4407 = vmul.f32 %v4391, 1.442695
        %v4408 = vpow.pop %v4407
        %v4409 = vmul.f32 %v4392, 1.442695
        %v4410 = vpow.pop %v4409
        %v4411 = vmul.f32 %v4393, 1.442695
        %v4412 = vpow.pop %v4411
        %v4413 = vmul.f32 %v4394, 1.442695
        %v4414 = vpow.pop %v4413
        %v4415 = vmul.f32 %v4395, 1.442695
        %v4416 = vpow.pop %v4415
        %v4417 = vmul.f32 %v4396, 1.442695
        %v4418 = vpow.pop %v4417
        %v4419 = vmul.f32 %v4397, 1.442695
        %v4420 = vpow.pop %v4419
        %v4421 = vmul.f32 %v4398, 1.442695
        %v4422 = vpow.pop %v4421
        %v4423 = vmul.f32 %v4399, 1.442695
        %v4424 = vpow.pop %v4423
        %v4425 = vmul.f32 %v4400, 1.442695
        %v4426 = vpow.pop %v4425
        %v4427 = vmul.f32 %v4401, 1.442695
        %v4428 = vpow.pop %v4427
        %v4429 = vmul.f32 %v4402, 1.442695
        %v4430 = vpow.pop %v4429
        %v4431 = vmul.f32 %v4403, 1.442695
        %v4432 = vpow.pop %v4431
        %v4433 = vmul.f32 %v4404, 1.442695
        %v4434 = vpow.pop %v4433
        %v4435 = vmul.f32 %v4405, 1.442695
        %v4436 = vpow.pop %v4435
        %v4437 = vmul.f32 %v4406, 1.442695
        %v4438 = vpow.pop %v4437
        %v4439 = vadd.f32 %v4408, 1.0
        %v4440 = vadd.f32 %v4410, 1.0
        %v4441 = vadd.f32 %v4412, 1.0
        %v4442 = vadd.f32 %v4414, 1.0
        %v4443 = vadd.f32 %v4416, 1.0
        %v4444 = vadd.f32 %v4418, 1.0
        %v4445 = vadd.f32 %v4420, 1.0
        %v4446 = vadd.f32 %v4422, 1.0
        %v4447 = vadd.f32 %v4424, 1.0
        %v4448 = vadd.f32 %v4426, 1.0
        %v4449 = vadd.f32 %v4428, 1.0
        %v4450 = vadd.f32 %v4430, 1.0
        %v4451 = vadd.f32 %v4432, 1.0
        %v4452 = vadd.f32 %v4434, 1.0
        %v4453 = vadd.f32 %v4436, 1.0
        %v4454 = vadd.f32 %v4438, 1.0
        %v4455 = vrcp.pop %v4439
        %v4456 = vmul.f32 1.0, %v4455
        %v4457 = vrcp.pop %v4440
        %v4458 = vmul.f32 1.0, %v4457
        %v4459 = vrcp.pop %v4441
        %v4460 = vmul.f32 1.0, %v4459
        %v4461 = vrcp.pop %v4442
        %v4462 = vmul.f32 1.0, %v4461
        %v4463 = vrcp.pop %v4443
        %v4464 = vmul.f32 1.0, %v4463
        %v4465 = vrcp.pop %v4444
        %v4466 = vmul.f32 1.0, %v4465
        %v4467 = vrcp.pop %v4445
        %v4468 = vmul.f32 1.0, %v4467
        %v4469 = vrcp.pop %v4446
        %v4470 = vmul.f32 1.0, %v4469
        %v4471 = vrcp.pop %v4447
        %v4472 = vmul.f32 1.0, %v4471
        %v4473 = vrcp.pop %v4448
        %v4474 = vmul.f32 1.0, %v4473
        %v4475 = vrcp.pop %v4449
        %v4476 = vmul.f32 1.0, %v4475
        %v4477 = vrcp.pop %v4450
        %v4478 = vmul.f32 1.0, %v4477
        %v4479 = vrcp.pop %v4451
        %v4480 = vmul.f32 1.0, %v4479
        %v4481 = vrcp.pop %v4452
        %v4482 = vmul.f32 1.0, %v4481
        %v4483 = vrcp.pop %v4453
        %v4484 = vmul.f32 1.0, %v4483
        %v4485 = vrcp.pop %v4454
        %v4486 = vmul.f32 1.0, %v4485
        %v4487 = vmul.f32 %v4375, %v4456
        %v4488 = vmul.f32 %v4376, %v4458
        %v4489 = vmul.f32 %v4377, %v4460
        %v4490 = vmul.f32 %v4378, %v4462
        %v4491 = vmul.f32 %v4379, %v4464
        %v4492 = vmul.f32 %v4380, %v4466
        %v4493 = vmul.f32 %v4381, %v4468
        %v4494 = vmul.f32 %v4382, %v4470
        %v4495 = vmul.f32 %v4383, %v4472
        %v4496 = vmul.f32 %v4384, %v4474
        %v4497 = vmul.f32 %v4385, %v4476
        %v4498 = vmul.f32 %v4386, %v4478
        %v4499 = vmul.f32 %v4387, %v4480
        %v4500 = vmul.f32 %v4388, %v4482
        %v4501 = vmul.f32 %v4389, %v4484
        %v4502 = vmul.f32 %v4390, %v4486
        %vm4503 = vcmask 1042432
        %vm4504 = vcmask 1046532
        %vm4505 = vmor %vm4503, %vm4504
        %v4506 = vrot.slane %v371, 5
        %v4507 = vrot.slane %v4506, 4
        %v4508 = vrot.slane %v372, 5
        %v4509 = vsel %vm4505, %v4507, %v4508
        %v4510 = vrot.slane %v4508, 4
        %v4511 = vrot.slane %v373, 5
        %v4512 = vsel %vm4505, %v4510, %v4511
        %v4513 = vrot.slane %v375, 5
        %v4514 = vrot.slane %v4513, 4
        %v4515 = vrot.slane %v376, 5
        %v4516 = vsel %vm4505, %v4514, %v4515
        %v4517 = vrot.slane %v4515, 4
        %v4518 = vrot.slane %v377, 5
        %v4519 = vsel %vm4505, %v4517, %v4518
        %v4520 = vrot.slane %v379, 5
        %v4521 = vrot.slane %v4520, 4
        %v4522 = vrot.slane %v380, 5
        %v4523 = vsel %vm4505, %v4521, %v4522
        %v4524 = vrot.slane %v4522, 4
        %v4525 = vrot.slane %v381, 5
        %v4526 = vsel %vm4505, %v4524, %v4525
        %v4527 = vrot.slane %v383, 5
        %v4528 = vrot.slane %v4527, 4
        %v4529 = vrot.slane %v384, 5
        %v4530 = vsel %vm4505, %v4528, %v4529
        %v4531 = vrot.slane %v4529, 4
        %v4532 = vrot.slane %v385, 5
        %v4533 = vsel %vm4505, %v4531, %v4532
        %v4534 = vrot.slane %v387, 5
        %v4535 = vrot.slane %v4534, 4
        %v4536 = vrot.slane %v388, 5
        %v4537 = vsel %vm4505, %v4535, %v4536
        %v4538 = vrot.slane %v4536, 4
        %v4539 = vrot.slane %v389, 5
        %v4540 = vsel %vm4505, %v4538, %v4539
        %v4541 = vrot.slane %v391, 5
        %v4542 = vrot.slane %v4541, 4
        %v4543 = vrot.slane %v392, 5
        %v4544 = vsel %vm4505, %v4542, %v4543
        %v4545 = vrot.slane %v4543, 4
        %v4546 = vrot.slane %v393, 5
        %v4547 = vsel %vm4505, %v4545, %v4546
        %v4548 = vrot.slane %v395, 5
        %v4549 = vrot.slane %v4548, 4
        %v4550 = vrot.slane %v396, 5
        %v4551 = vsel %vm4505, %v4549, %v4550
        %v4552 = vrot.slane %v4550, 4
        %v4553 = vrot.slane %v397, 5
        %v4554 = vsel %vm4505, %v4552, %v4553
        %v4555 = vrot.slane %v399, 5
        %v4556 = vrot.slane %v4555, 4
        %v4557 = vrot.slane %v400, 5
        %v4558 = vsel %vm4505, %v4556, %v4557
        %v4559 = vrot.slane %v4557, 4
        %v4560 = vrot.slane %v401, 5
        %v4561 = vsel %vm4505, %v4559, %v4560
        %v4578 = vunpack.c.l.bf16 %v4509
        %v4579 = vunpack.c.l.bf16 %v4512
        %v4580 = vunpack.c.l.bf16 %v4516
        %v4581 = vunpack.c.l.bf16 %v4519
        %v4582 = vunpack.c.l.bf16 %v4523
        %v4583 = vunpack.c.l.bf16 %v4526
        %v4584 = vunpack.c.l.bf16 %v4530
        %v4585 = vunpack.c.l.bf16 %v4533
        %v4586 = vunpack.c.l.bf16 %v4537
        %v4587 = vunpack.c.l.bf16 %v4540
        %v4588 = vunpack.c.l.bf16 %v4544
        %v4589 = vunpack.c.l.bf16 %v4547
        %v4590 = vunpack.c.l.bf16 %v4551
        %v4591 = vunpack.c.l.bf16 %v4554
        %v4592 = vunpack.c.l.bf16 %v4558
        %v4593 = vunpack.c.l.bf16 %v4561
        %v4594 = vadd.f32 %v4487, %v4578
        %v4595 = vadd.f32 %v4488, %v4579
        %v4596 = vadd.f32 %v4489, %v4580
        %v4597 = vadd.f32 %v4490, %v4581
        %v4598 = vadd.f32 %v4491, %v4582
        %v4599 = vadd.f32 %v4492, %v4583
        %v4600 = vadd.f32 %v4493, %v4584
        %v4601 = vadd.f32 %v4494, %v4585
        %v4602 = vadd.f32 %v4495, %v4586
        %v4603 = vadd.f32 %v4496, %v4587
        %v4604 = vadd.f32 %v4497, %v4588
        %v4605 = vadd.f32 %v4498, %v4589
        %v4606 = vadd.f32 %v4499, %v4590
        %v4607 = vadd.f32 %v4500, %v4591
        %v4608 = vadd.f32 %v4501, %v4592
        %v4609 = vadd.f32 %v4502, %v4593
        %v4610 = vpack.c.bf16 %v4595, %v4594
        %v4611 = vpack.c.bf16 %v4597, %v4596
        %v4612 = vpack.c.bf16 %v4599, %v4598
        %v4613 = vpack.c.bf16 %v4601, %v4600
        %v4614 = vpack.c.bf16 %v4603, %v4602
        %v4615 = vpack.c.bf16 %v4605, %v4604
        %v4616 = vpack.c.bf16 %v4607, %v4606
        %v4617 = vpack.c.bf16 %v4609, %v4608
        %v4626 = vunpack.c.l.b16 %v4610
        %v4627 = vunpack.c.h.b16 %v4610
        %v4628 = vunpack.c.l.b16 %v4611
        %v4629 = vunpack.c.h.b16 %v4611
        %v4630 = vunpack.c.l.b16 %v4612
        %v4631 = vunpack.c.h.b16 %v4612
        %v4632 = vunpack.c.l.b16 %v4613
        %v4633 = vunpack.c.h.b16 %v4613
        %v4634 = vunpack.c.l.b16 %v4614
        %v4635 = vunpack.c.h.b16 %v4614
        %v4636 = vunpack.c.l.b16 %v4615
        %v4637 = vunpack.c.h.b16 %v4615
        %v4638 = vunpack.c.l.b16 %v4616
        %v4639 = vunpack.c.h.b16 %v4616
        %v4640 = vunpack.c.l.b16 %v4617
        %v4641 = vunpack.c.h.b16 %v4617
        %v4642 = vpack.c.b16 %v4626, %v4626
        %v4643 = vpack.c.b16 %v4627, %v4627
        %v4644 = vpack.c.b16 %v4628, %v4628
        %v4645 = vpack.c.b16 %v4629, %v4629
        %v4646 = vpack.c.b16 %v4630, %v4630
        %v4647 = vpack.c.b16 %v4631, %v4631
        %v4648 = vpack.c.b16 %v4632, %v4632
        %v4649 = vpack.c.b16 %v4633, %v4633
        %v4650 = vpack.c.b16 %v4634, %v4634
        %v4651 = vpack.c.b16 %v4635, %v4635
        %v4652 = vpack.c.b16 %v4636, %v4636
        %v4653 = vpack.c.b16 %v4637, %v4637
        %v4654 = vpack.c.b16 %v4638, %v4638
        %v4655 = vpack.c.b16 %v4639, %v4639
        %v4656 = vpack.c.b16 %v4640, %v4640
        %v4657 = vpack.c.b16 %v4641, %v4641
        %4674 = vst [vmem:[%s324] sm:$0xf] %v4642
        %4675 = vst [vmem:[%s324 + $0x4] sm:$0xf] %v4643
        %4676 = vst [vmem:[%s324 + $0x8] sm:$0xf] %v4644
        %4677 = vst [vmem:[%s324 + $0xc] sm:$0xf] %v4645
        %4678 = vst [vmem:[%s324 + $0x10] sm:$0xf] %v4646
        %4679 = vst [vmem:[%s324 + $0x14] sm:$0xf] %v4647
        %4680 = vst [vmem:[%s324 + $0x18] sm:$0xf] %v4648
        %4681 = vst [vmem:[%s324 + $0x1c] sm:$0xf] %v4649
        %4682 = vst [vmem:[%s324 + $0x20] sm:$0xf] %v4650
        %4683 = vst [vmem:[%s324 + $0x24] sm:$0xf] %v4651
        %4684 = vst [vmem:[%s324 + $0x28] sm:$0xf] %v4652
        %4685 = vst [vmem:[%s324 + $0x2c] sm:$0xf] %v4653
        %4686 = vst [vmem:[%s324 + $0x30] sm:$0xf] %v4654
        %4687 = vst [vmem:[%s324 + $0x34] sm:$0xf] %v4655
        %4688 = vst [vmem:[%s324 + $0x38] sm:$0xf] %v4656
        %4689 = vst [vmem:[%s324 + $0x3c] sm:$0xf] %v4657
        %s4690 = sand.u32 %s186, 1
        %s4691 = scalar_lea.sflag [#allocation3], %s4690
        %s4692 = sand.u32 %s186, 1
        %s4693 = smul.addr %s4692, 64
        %s4694 = scalar_lea.vmem [#allocation2], %s4693
        // Predicated region
        $region45: #{tpu_custom_call.1} parent=43 // pred_check
          %p4695 = pneg %p196
        $region46: #{tpu_custom_call.1} parent=43 // pred_check_branch
          %4697 = sbr.rel (%p4695) target = $region48
        $region47: #{tpu_custom_call.1} parent=43 // pred_region
          %s4698 = smul.u32 8, %s25
          %s4700 = ssub.s32 1024, 1024
          %4701 = vsyncadd %s4691, %s4700
          %s4702 = smul.addr %s4698, 2
          %s4703 = smul.addr %s24, 32
          %s4704 = sadd.s32 %s4702, %s4703
          %s4705 = smul.addr %s4704, 64
          %s4706 = scalar_lea.hbm %s6, %s4705
          %s4707 = sshll.u32 %s4694, 4
          %s4708 = int_to_ptr.vmem [resolvable:$true] %s4707
          %4713 = dma.vmem_to_hbm [thread:$0]  %s4708, 1024, %s4706, %s4691, 64, 64, 4
        $region48: #{tpu_custom_call.1} parent=43 // pred_fallthru
          _
      $region44: #{tpu_custom_call.1} parent=5 // pred_fallthru
        _
      %p4714 = scmp.le.s32.totalorder 2, %s15
      // Predicated region
      $region49: #{tpu_custom_call.1} parent=5 // pred_check
        %p4715 = pneg %p4714
      $region50: #{tpu_custom_call.1} parent=5 // pred_check_branch
        %4717 = sbr.rel (%p4715) target = $region52
      $region51: #{tpu_custom_call.1} parent=5 // pred_region
        %s4718 = ssub.s32 %s15, 2
        // Predicated region
        $region53: #{tpu_custom_call.1} parent=51 // pred_check
          %p4719 = pneg %p202
        $region54: #{tpu_custom_call.1} parent=51 // pred_check_branch
          %4721 = sbr.rel (%p4719) target = $region56
        $region55: #{tpu_custom_call.1} parent=51 // pred_region
          %s4722 = sand.u32 %s187, 1
          %s4723 = scalar_lea.sflag [#allocation3], %s4722
          %s4724 = sand.u32 %s187, 1
          %s4725 = smul.addr %s4724, 64
          %s4726 = scalar_lea.vmem [#allocation2], %s4725
          %4727 = dma.done %s4723, 1024
        $region56: #{tpu_custom_call.1} parent=51 // pred_fallthru
          _
      $region52: #{tpu_custom_call.1} parent=5 // pred_fallthru
        _
    $region6: #{tpu_custom_call.1} parent=1 // loop_footer
      %s19 = sadd.s32 1, %s15
    $region7: #{tpu_custom_call.1} parent=1 // loop_footer_branch
      %14 = sbr.rel target = $region3
    $region8: #{tpu_custom_call.1} parent=1 // loop_exit
      _
    %4728 = vsyncpa [#allocation3], 1
    %s4729 = scalar_lea.sflag [#allocation3], 1
    %4730 = vsyncpa %s4729, 1

</llo_original>
